<compile_context>
chip_gen: v7x
topology: tpu7x:2x2x1
jax: 0.10.0
libtpu: 0.0.40
codegen_flags: <defaults>
</compile_context>

<pallas_src>
import jax
import jax.numpy as jnp
from jax import lax
from jax.experimental import pallas as pl
from jax.experimental.pallas import tpu as pltpu


def _round_up(n, m):
    return ((n + m - 1) // m) * m


def _pick_chunk(T, cap=8):
    """Largest multiple of 8 that divides T, up to `cap`; else the whole T."""
    best = None
    c = 8
    while c <= min(T, cap):
        if T % c == 0:
            best = c
        c += 8
    if best is not None:
        return best
    # TODO(synk): ragged T (no multiple-of-8 divisor) falls back to a single
    # chunk; a masked-tail path would be needed for very long prime-ish T.
    return T


def lstm_chunk_kernel(x_ref, w_ih_ref, w_hh_ref, b_ref, w_out_ref, b_out_ref,
                      out_ref, h_scratch, c_scratch):
    """One time-chunk of the LSTM recurrence.

    x_ref:     (B_blk, TC, I_pad)  f32/bf16   streamed chunk of the sequence
    w_ih_ref:  (I_pad, 4*H_pad)               PyTorch weight_ih_l0, per-gate padded, transposed
    w_hh_ref:  (H_pad, 4*H_pad)               PyTorch weight_hh_l0, per-gate padded, transposed
    b_ref:     (1, 4*H_pad)        f32        bias_ih + bias_hh (per-gate padded)
    w_out_ref: (H_pad, O_pad)                 out.weight padded, transposed
    b_out_ref: (1, O_pad)          f32
    out_ref:   (B_blk, O_pad)      f32        written only on the last chunk
    h_scratch, c_scratch: (B_blk, H_pad) f32  recurrent state across chunks
    """
    c_idx = pl.program_id(1)
    n_chunks = pl.num_programs(1)
    TC = x_ref.shape[1]
    H = h_scratch.shape[1]

    # h0 = c0 = 0 (module passes `None` initial state); re-init per batch block.
    @pl.when(c_idx == 0)
    def _():
        h_scratch[...] = jnp.zeros_like(h_scratch)
        c_scratch[...] = jnp.zeros_like(c_scratch)

    # Hoisted input projection for the whole chunk: one MXU matmul with
    # M = B_blk*TC (instead of TC tiny matmuls), bias folded in once.
    gx = lax.dot_general(
        x_ref[...], w_ih_ref[...],
        dimension_numbers=(((2,), (0,)), ((), ())),
        preferred_element_type=jnp.float32,
    ) + b_ref[...]                                     # (B_blk, TC, 4H), f32

    h = h_scratch[...]                                 # (B_blk, H) f32, vreg-resident
    c = c_scratch[...]

    # Sequential recurrence: only h @ W_hh remains on the critical path.
    # Statically unrolled so the LLO scheduler can overlap EUP/VPU gate math
    # with the next step's MXU issue.
    for t in range(TC):
        gates = gx[:, t, :] + jnp.dot(
            h.astype(w_hh_ref.dtype), w_hh_ref[...],
            preferred_element_type=jnp.float32)        # (B_blk, 4H)
        i_g = jax.nn.sigmoid(gates[:, 0 * H:1 * H])
        f_g = jax.nn.sigmoid(gates[:, 1 * H:2 * H])
        g_g = jnp.tanh(gates[:, 2 * H:3 * H])
        o_g = jax.nn.sigmoid(gates[:, 3 * H:4 * H])
        c = f_g * c + i_g * g_g
        h = o_g * jnp.tanh(c)

    # Spill state to VMEM once per chunk (not per timestep).
    h_scratch[...] = h
    c_scratch[...] = c

    # out = Linear(h_T), only after the last chunk.
    @pl.when(c_idx == n_chunks - 1)
    def _():
        out_ref[...] = jnp.dot(
            h.astype(w_out_ref.dtype), w_out_ref[...],
            preferred_element_type=jnp.float32) + b_out_ref[...]


def rnn_forward(x, w_ih, w_hh, b_ih, b_hh, w_out, b_out,
                *, chunk_cap=8, matmul_dtype=jnp.float32):
    """x: (B, T, I) float32. Returns (B, O) float32.

    matmul_dtype=jnp.bfloat16 halves weight VMEM and hits MXU native throughput
    on v6e/v7x (state / gate math stays f32); default f32 for exactness here.
    """
    B, T, I = x.shape
    four_h = w_ih.shape[0]
    H = four_h // 4
    O = w_out.shape[0]

    # Pad to the (8, 128) vreg tile: lane-aligned gate slices, unmasked stores.
    B_pad = _round_up(B, 8)
    I_pad = _round_up(I, 128)
    H_pad = _round_up(H, 128)
    O_pad = _round_up(O, 128)
    G = 4 * H_pad

    # Batch-block axis: lets v7x's 2 TensorCores each take half the batch.
    if B_pad >= 16 and B_pad % 16 == 0:
        B_blk = B_pad // 2
    else:
        B_blk = B_pad
    n_b_blocks = B_pad // B_blk

    TC = _pick_chunk(T, chunk_cap)
    n_chunks = T // TC

    f32 = jnp.float32

    # --- one-time weight/activation preparation (zero-padded, pre-transposed) ---
    xp = jnp.pad(x.astype(f32),
                 ((0, B_pad - B), (0, 0), (0, I_pad - I))).astype(matmul_dtype)

    def pad_gate_weight(w, in_dim, in_pad):
        # (4H, in_dim) -> per-gate pad H->H_pad, pad K, transpose -> (in_pad, 4*H_pad)
        w4 = w.astype(f32).reshape(4, H, in_dim)
        w4 = jnp.pad(w4, ((0, 0), (0, H_pad - H), (0, in_pad - in_dim)))
        return jnp.transpose(w4.reshape(4 * H_pad, in_pad), (1, 0)).astype(matmul_dtype)

    w_ih_p = pad_gate_weight(w_ih, I, I_pad)                       # (I_pad, G)
    w_hh_p = pad_gate_weight(w_hh, H, H_pad)                       # (H_pad, G)

    b4 = (b_ih + b_hh).astype(f32).reshape(4, H)
    b_p = jnp.pad(b4, ((0, 0), (0, H_pad - H))).reshape(1, G)      # (1, G) f32

    w_out_p = jnp.transpose(
        jnp.pad(w_out.astype(f32), ((0, O_pad - O), (0, H_pad - H))),
        (1, 0)).astype(matmul_dtype)                               # (H_pad, O_pad)
    b_out_p = jnp.pad(b_out.astype(f32), (0, O_pad - O)).reshape(1, O_pad)

    out_padded = pl.pallas_call(
        lstm_chunk_kernel,
        out_shape=jax.ShapeDtypeStruct((B_pad, O_pad), jnp.float32),
        grid=(n_b_blocks, n_chunks),
        in_specs=[
            pl.BlockSpec((B_blk, TC, I_pad), lambda b, c: (b, c, 0)),  # x (streamed)
            pl.BlockSpec((I_pad, G), lambda b, c: (0, 0)),             # W_ih
            pl.BlockSpec((H_pad, G), lambda b, c: (0, 0)),             # W_hh
            pl.BlockSpec((1, G), lambda b, c: (0, 0)),                 # bias
            pl.BlockSpec((H_pad, O_pad), lambda b, c: (0, 0)),         # W_out
            pl.BlockSpec((1, O_pad), lambda b, c: (0, 0)),             # b_out
        ],
        out_specs=pl.BlockSpec((B_blk, O_pad), lambda b, c: (b, 0)),
        scratch_shapes=[
            pltpu.VMEM((B_blk, H_pad), jnp.float32),   # h state
            pltpu.VMEM((B_blk, H_pad), jnp.float32),   # c state
        ],
        compiler_params=pltpu.CompilerParams(
            dimension_semantics=("parallel", "arbitrary")),
    )(xp, w_ih_p, w_hh_p, b_p, w_out_p, b_out_p)

    return out_padded[:B, :O]


def _reference(x, w_ih, w_hh, b_ih, b_hh, w_out, b_out):
    """Pure-JAX reference matching PyTorch nn.LSTM + nn.Linear semantics."""
    B, T, I = x.shape
    H = w_hh.shape[1]
    h = jnp.zeros((B, H), jnp.float32)
    c = jnp.zeros((B, H), jnp.float32)
    for t in range(T):
        gates = x[:, t, :] @ w_ih.T + h @ w_hh.T + b_ih + b_hh
        i_g = jax.nn.sigmoid(gates[:, 0 * H:1 * H])
        f_g = jax.nn.sigmoid(gates[:, 1 * H:2 * H])
        g_g = jnp.tanh(gates[:, 2 * H:3 * H])
        o_g = jax.nn.sigmoid(gates[:, 3 * H:4 * H])
        c = f_g * c + i_g * g_g
        h = o_g * jnp.tanh(c)
    return h @ w_out.T + b_out


if __name__ == "__main__":
    B, T, I, H, O = 2, 8, 16, 32, 10

    key = jax.random.PRNGKey(0)
    keys = jax.random.split(key, 7)
    scale = 1.0 / jnp.sqrt(H)

    x = jax.random.normal(keys[0], (B, T, I), jnp.float32)
    w_ih = jax.random.uniform(keys[1], (4 * H, I), jnp.float32, -scale, scale)
    w_hh = jax.random.uniform(keys[2], (4 * H, H), jnp.float32, -scale, scale)
    b_ih = jax.random.uniform(keys[3], (4 * H,), jnp.float32, -scale, scale)
    b_hh = jax.random.uniform(keys[4], (4 * H,), jnp.float32, -scale, scale)
    w_out = jax.random.uniform(keys[5], (O, H), jnp.float32, -scale, scale)
    b_out = jax.random.uniform(keys[6], (O,), jnp.float32, -scale, scale)

    out = rnn_forward(x, w_ih, w_hh, b_ih, b_hh, w_out, b_out)
    out = jax.block_until_ready(out)

    ref = _reference(x, w_ih, w_hh, b_ih, b_hh, w_out, b_out)
    assert out.shape == (B, O)
    assert jnp.allclose(out, ref, atol=1e-4, rtol=1e-4), "mismatch vs reference"

    print("KERNEL_OK")
</pallas_src>

<mosaic_0001>
module attributes {stable_mosaic.version = 11 : i64} {
  func.func @lstm_chunk_kernel(%arg0: i32, %arg1: i32, %arg2: memref<8x8x128xf32, #tpu.memory_space<vmem>>, %arg3: memref<128x512xf32, #tpu.memory_space<vmem>>, %arg4: memref<128x512xf32, #tpu.memory_space<vmem>>, %arg5: memref<1x512xf32, #tpu.memory_space<vmem>>, %arg6: memref<128x128xf32, #tpu.memory_space<vmem>>, %arg7: memref<1x128xf32, #tpu.memory_space<vmem>>, %arg8: memref<8x128xf32, #tpu.memory_space<vmem>>, %arg9: memref<8x128xf32, #tpu.memory_space<vmem>>, %arg10: memref<8x128xf32, #tpu.memory_space<vmem>>) attributes {dimension_semantics = [#tpu.dimension_semantics<parallel>, #tpu.dimension_semantics<arbitrary>], iteration_bounds = array<i64: 1, 1>, scalar_prefetch = 0 : i64, scratch_operands = 2 : i64, tpu.core_type = #tpu.core_type<tc>, window_params = [{transform_indices = @transform_0, window_bounds = array<i64: 8, 8, 128>}, {pipeline_mode = #tpu.pipeline_mode<synchronous>, transform_indices = @transform_1, window_bounds = array<i64: 128, 512>}, {pipeline_mode = #tpu.pipeline_mode<synchronous>, transform_indices = @transform_2, window_bounds = array<i64: 128, 512>}, {pipeline_mode = #tpu.pipeline_mode<synchronous>, transform_indices = @transform_3, window_bounds = array<i64: 1, 512>}, {pipeline_mode = #tpu.pipeline_mode<synchronous>, transform_indices = @transform_4, window_bounds = array<i64: 128, 128>}, {pipeline_mode = #tpu.pipeline_mode<synchronous>, transform_indices = @transform_5, window_bounds = array<i64: 1, 128>}, {transform_indices = @transform_6, window_bounds = array<i64: 8, 128>}]} {
    %c0_i32 = arith.constant 0 : i32
    %0 = arith.cmpi eq, %arg1, %c0_i32 : i32
    %1 = arith.extui %0 : i1 to i32
    %c0_i32_0 = arith.constant 0 : i32
    %2 = arith.cmpi ne, %1, %c0_i32_0 : i32
    scf.if %2 {
      %cst_65 = arith.constant 0.000000e+00 : f32
      %257 = vector.broadcast %cst_65 : f32 to vector<8x128xf32>
      %c0_66 = arith.constant 0 : index
      %c0_67 = arith.constant 0 : index
      %258 = vector.load %arg9[%c0_66, %c0_67] : memref<8x128xf32, #tpu.memory_space<vmem>>, vector<8x128xf32>
      tpu.vector_store %arg9[%c0_66, %c0_67], %257 {strides = array<i32>} : memref<8x128xf32, #tpu.memory_space<vmem>>, vector<8x128xf32>,
      %cst_68 = arith.constant 0.000000e+00 : f32
      %259 = vector.broadcast %cst_68 : f32 to vector<8x128xf32>
      %c0_69 = arith.constant 0 : index
      %c0_70 = arith.constant 0 : index
      %260 = vector.load %arg10[%c0_69, %c0_70] : memref<8x128xf32, #tpu.memory_space<vmem>>, vector<8x128xf32>
      tpu.vector_store %arg10[%c0_69, %c0_70], %259 {strides = array<i32>} : memref<8x128xf32, #tpu.memory_space<vmem>>, vector<8x128xf32>,
    } else {
    }
    %c0 = arith.constant 0 : index
    %c0_1 = arith.constant 0 : index
    %c0_2 = arith.constant 0 : index
    %3 = vector.load %arg2[%c0, %c0_1, %c0_2] : memref<8x8x128xf32, #tpu.memory_space<vmem>>, vector<8x8x128xf32>
    %c0_3 = arith.constant 0 : index
    %c0_4 = arith.constant 0 : index
    %4 = vector.load %arg3[%c0_3, %c0_4] : memref<128x512xf32, #tpu.memory_space<vmem>>, vector<128x512xf32>
    %cst = arith.constant dense<0.000000e+00> : vector<8x8x512xf32>
    %5 = tpu.matmul %3, %4, %cst {dimension_numbers = #tpu.dot_dimension_numbers<[2], [0], [0, 1], [1], [0, 0, 0, 1, 1, 1], [], []>} : vector<8x8x128xf32>, vector<128x512xf32>, vector<8x8x512xf32> -> vector<8x8x512xf32>
    %c0_5 = arith.constant 0 : index
    %c0_6 = arith.constant 0 : index
    %6 = vector.load %arg5[%c0_5, %c0_6] : memref<1x512xf32, #tpu.memory_space<vmem>>, vector<1x512xf32>
    %7 = vector.shape_cast %6 : vector<1x512xf32> to vector<1x1x512xf32>
    %8 = vector.broadcast %7 : vector<1x1x512xf32> to vector<8x8x512xf32>
    %9 = arith.addf %5, %8 : vector<8x8x512xf32>
    %c0_7 = arith.constant 0 : index
    %c0_8 = arith.constant 0 : index
    %10 = vector.load %arg9[%c0_7, %c0_8] : memref<8x128xf32, #tpu.memory_space<vmem>>, vector<8x128xf32>
    %c0_9 = arith.constant 0 : index
    %c0_10 = arith.constant 0 : index
    %11 = vector.load %arg10[%c0_9, %c0_10] : memref<8x128xf32, #tpu.memory_space<vmem>>, vector<8x128xf32>
    %12 = vector.extract_strided_slice %9 {offsets = [0, 0, 0], sizes = [8, 1, 512], strides = [1, 1, 1]} : vector<8x8x512xf32> to vector<8x1x512xf32>
    %13 = vector.shape_cast %12 : vector<8x1x512xf32> to vector<8x512xf32>
    %c0_11 = arith.constant 0 : index
    %c0_12 = arith.constant 0 : index
    %14 = vector.load %arg4[%c0_11, %c0_12] : memref<128x512xf32, #tpu.memory_space<vmem>>, vector<128x512xf32>
    %cst_13 = arith.constant dense<0.000000e+00> : vector<8x512xf32>
    %15 = tpu.matmul %10, %14, %cst_13 {dimension_numbers = #tpu.dot_dimension_numbers<[1], [0], [0], [1], [0, 0, 1, 1], [], []>} : vector<8x128xf32>, vector<128x512xf32>, vector<8x512xf32> -> vector<8x512xf32>
    %16 = arith.addf %13, %15 : vector<8x512xf32>
    %17 = vector.extract_strided_slice %16 {offsets = [0, 0], sizes = [8, 128], strides = [1, 1]} : vector<8x512xf32> to vector<8x128xf32>
    %18 = arith.negf %17 : vector<8x128xf32>
    %19 = math.exp %18 : vector<8x128xf32>
    %cst_14 = arith.constant 1.000000e+00 : f32
    %20 = vector.broadcast %cst_14 : f32 to vector<8x128xf32>
    %21 = arith.addf %20, %19 : vector<8x128xf32>
    %22 = arith.divf %20, %21 : vector<8x128xf32>
    %23 = vector.extract_strided_slice %16 {offsets = [0, 128], sizes = [8, 128], strides = [1, 1]} : vector<8x512xf32> to vector<8x128xf32>
    %24 = arith.negf %23 : vector<8x128xf32>
    %25 = math.exp %24 : vector<8x128xf32>
    %cst_15 = arith.constant 1.000000e+00 : f32
    %26 = vector.broadcast %cst_15 : f32 to vector<8x128xf32>
    %27 = arith.addf %26, %25 : vector<8x128xf32>
    %28 = arith.divf %26, %27 : vector<8x128xf32>
    %29 = vector.extract_strided_slice %16 {offsets = [0, 256], sizes = [8, 128], strides = [1, 1]} : vector<8x512xf32> to vector<8x128xf32>
    %30 = math.tanh %29 : vector<8x128xf32>
    %31 = vector.extract_strided_slice %16 {offsets = [0, 384], sizes = [8, 128], strides = [1, 1]} : vector<8x512xf32> to vector<8x128xf32>
    %32 = arith.negf %31 : vector<8x128xf32>
    %33 = math.exp %32 : vector<8x128xf32>
    %cst_16 = arith.constant 1.000000e+00 : f32
    %34 = vector.broadcast %cst_16 : f32 to vector<8x128xf32>
    %35 = arith.addf %34, %33 : vector<8x128xf32>
    %36 = arith.divf %34, %35 : vector<8x128xf32>
    %37 = arith.mulf %28, %11 : vector<8x128xf32>
    %38 = arith.mulf %22, %30 : vector<8x128xf32>
    %39 = arith.addf %37, %38 : vector<8x128xf32>
    %40 = math.tanh %39 : vector<8x128xf32>
    %41 = arith.mulf %36, %40 : vector<8x128xf32>
    %42 = vector.extract_strided_slice %9 {offsets = [0, 1, 0], sizes = [8, 1, 512], strides = [1, 1, 1]} : vector<8x8x512xf32> to vector<8x1x512xf32>
    %43 = vector.shape_cast %42 : vector<8x1x512xf32> to vector<8x512xf32>
    %c0_17 = arith.constant 0 : index
    %c0_18 = arith.constant 0 : index
    %44 = vector.load %arg4[%c0_17, %c0_18] : memref<128x512xf32, #tpu.memory_space<vmem>>, vector<128x512xf32>
    %cst_19 = arith.constant dense<0.000000e+00> : vector<8x512xf32>
    %45 = tpu.matmul %41, %44, %cst_19 {dimension_numbers = #tpu.dot_dimension_numbers<[1], [0], [0], [1], [0, 0, 1, 1], [], []>} : vector<8x128xf32>, vector<128x512xf32>, vector<8x512xf32> -> vector<8x512xf32>
    %46 = arith.addf %43, %45 : vector<8x512xf32>
    %47 = vector.extract_strided_slice %46 {offsets = [0, 0], sizes = [8, 128], strides = [1, 1]} : vector<8x512xf32> to vector<8x128xf32>
    %48 = arith.negf %47 : vector<8x128xf32>
    %49 = math.exp %48 : vector<8x128xf32>
    %cst_20 = arith.constant 1.000000e+00 : f32
    %50 = vector.broadcast %cst_20 : f32 to vector<8x128xf32>
    %51 = arith.addf %50, %49 : vector<8x128xf32>
    %52 = arith.divf %50, %51 : vector<8x128xf32>
    %53 = vector.extract_strided_slice %46 {offsets = [0, 128], sizes = [8, 128], strides = [1, 1]} : vector<8x512xf32> to vector<8x128xf32>
    %54 = arith.negf %53 : vector<8x128xf32>
    %55 = math.exp %54 : vector<8x128xf32>
    %cst_21 = arith.constant 1.000000e+00 : f32
    %56 = vector.broadcast %cst_21 : f32 to vector<8x128xf32>
    %57 = arith.addf %56, %55 : vector<8x128xf32>
    %58 = arith.divf %56, %57 : vector<8x128xf32>
    %59 = vector.extract_strided_slice %46 {offsets = [0, 256], sizes = [8, 128], strides = [1, 1]} : vector<8x512xf32> to vector<8x128xf32>
    %60 = math.tanh %59 : vector<8x128xf32>
    %61 = vector.extract_strided_slice %46 {offsets = [0, 384], sizes = [8, 128], strides = [1, 1]} : vector<8x512xf32> to vector<8x128xf32>
    %62 = arith.negf %61 : vector<8x128xf32>
    %63 = math.exp %62 : vector<8x128xf32>
    %cst_22 = arith.constant 1.000000e+00 : f32
    %64 = vector.broadcast %cst_22 : f32 to vector<8x128xf32>
    %65 = arith.addf %64, %63 : vector<8x128xf32>
    %66 = arith.divf %64, %65 : vector<8x128xf32>
    %67 = arith.mulf %58, %39 : vector<8x128xf32>
    %68 = arith.mulf %52, %60 : vector<8x128xf32>
    %69 = arith.addf %67, %68 : vector<8x128xf32>
    %70 = math.tanh %69 : vector<8x128xf32>
    %71 = arith.mulf %66, %70 : vector<8x128xf32>
    %72 = vector.extract_strided_slice %9 {offsets = [0, 2, 0], sizes = [8, 1, 512], strides = [1, 1, 1]} : vector<8x8x512xf32> to vector<8x1x512xf32>
    %73 = vector.shape_cast %72 : vector<8x1x512xf32> to vector<8x512xf32>
    %c0_23 = arith.constant 0 : index
    %c0_24 = arith.constant 0 : index
    %74 = vector.load %arg4[%c0_23, %c0_24] : memref<128x512xf32, #tpu.memory_space<vmem>>, vector<128x512xf32>
    %cst_25 = arith.constant dense<0.000000e+00> : vector<8x512xf32>
    %75 = tpu.matmul %71, %74, %cst_25 {dimension_numbers = #tpu.dot_dimension_numbers<[1], [0], [0], [1], [0, 0, 1, 1], [], []>} : vector<8x128xf32>, vector<128x512xf32>, vector<8x512xf32> -> vector<8x512xf32>
    %76 = arith.addf %73, %75 : vector<8x512xf32>
    %77 = vector.extract_strided_slice %76 {offsets = [0, 0], sizes = [8, 128], strides = [1, 1]} : vector<8x512xf32> to vector<8x128xf32>
    %78 = arith.negf %77 : vector<8x128xf32>
    %79 = math.exp %78 : vector<8x128xf32>
    %cst_26 = arith.constant 1.000000e+00 : f32
    %80 = vector.broadcast %cst_26 : f32 to vector<8x128xf32>
    %81 = arith.addf %80, %79 : vector<8x128xf32>
    %82 = arith.divf %80, %81 : vector<8x128xf32>
    %83 = vector.extract_strided_slice %76 {offsets = [0, 128], sizes = [8, 128], strides = [1, 1]} : vector<8x512xf32> to vector<8x128xf32>
    %84 = arith.negf %83 : vector<8x128xf32>
    %85 = math.exp %84 : vector<8x128xf32>
    %cst_27 = arith.constant 1.000000e+00 : f32
    %86 = vector.broadcast %cst_27 : f32 to vector<8x128xf32>
    %87 = arith.addf %86, %85 : vector<8x128xf32>
    %88 = arith.divf %86, %87 : vector<8x128xf32>
    %89 = vector.extract_strided_slice %76 {offsets = [0, 256], sizes = [8, 128], strides = [1, 1]} : vector<8x512xf32> to vector<8x128xf32>
    %90 = math.tanh %89 : vector<8x128xf32>
    %91 = vector.extract_strided_slice %76 {offsets = [0, 384], sizes = [8, 128], strides = [1, 1]} : vector<8x512xf32> to vector<8x128xf32>
    %92 = arith.negf %91 : vector<8x128xf32>
    %93 = math.exp %92 : vector<8x128xf32>
    %cst_28 = arith.constant 1.000000e+00 : f32
    %94 = vector.broadcast %cst_28 : f32 to vector<8x128xf32>
    %95 = arith.addf %94, %93 : vector<8x128xf32>
    %96 = arith.divf %94, %95 : vector<8x128xf32>
    %97 = arith.mulf %88, %69 : vector<8x128xf32>
    %98 = arith.mulf %82, %90 : vector<8x128xf32>
    %99 = arith.addf %97, %98 : vector<8x128xf32>
    %100 = math.tanh %99 : vector<8x128xf32>
    %101 = arith.mulf %96, %100 : vector<8x128xf32>
    %102 = vector.extract_strided_slice %9 {offsets = [0, 3, 0], sizes = [8, 1, 512], strides = [1, 1, 1]} : vector<8x8x512xf32> to vector<8x1x512xf32>
    %103 = vector.shape_cast %102 : vector<8x1x512xf32> to vector<8x512xf32>
    %c0_29 = arith.constant 0 : index
    %c0_30 = arith.constant 0 : index
    %104 = vector.load %arg4[%c0_29, %c0_30] : memref<128x512xf32, #tpu.memory_space<vmem>>, vector<128x512xf32>
    %cst_31 = arith.constant dense<0.000000e+00> : vector<8x512xf32>
    %105 = tpu.matmul %101, %104, %cst_31 {dimension_numbers = #tpu.dot_dimension_numbers<[1], [0], [0], [1], [0, 0, 1, 1], [], []>} : vector<8x128xf32>, vector<128x512xf32>, vector<8x512xf32> -> vector<8x512xf32>
    %106 = arith.addf %103, %105 : vector<8x512xf32>
    %107 = vector.extract_strided_slice %106 {offsets = [0, 0], sizes = [8, 128], strides = [1, 1]} : vector<8x512xf32> to vector<8x128xf32>
    %108 = arith.negf %107 : vector<8x128xf32>
    %109 = math.exp %108 : vector<8x128xf32>
    %cst_32 = arith.constant 1.000000e+00 : f32
    %110 = vector.broadcast %cst_32 : f32 to vector<8x128xf32>
    %111 = arith.addf %110, %109 : vector<8x128xf32>
    %112 = arith.divf %110, %111 : vector<8x128xf32>
    %113 = vector.extract_strided_slice %106 {offsets = [0, 128], sizes = [8, 128], strides = [1, 1]} : vector<8x512xf32> to vector<8x128xf32>
    %114 = arith.negf %113 : vector<8x128xf32>
    %115 = math.exp %114 : vector<8x128xf32>
    %cst_33 = arith.constant 1.000000e+00 : f32
    %116 = vector.broadcast %cst_33 : f32 to vector<8x128xf32>
    %117 = arith.addf %116, %115 : vector<8x128xf32>
    %118 = arith.divf %116, %117 : vector<8x128xf32>
    %119 = vector.extract_strided_slice %106 {offsets = [0, 256], sizes = [8, 128], strides = [1, 1]} : vector<8x512xf32> to vector<8x128xf32>
    %120 = math.tanh %119 : vector<8x128xf32>
    %121 = vector.extract_strided_slice %106 {offsets = [0, 384], sizes = [8, 128], strides = [1, 1]} : vector<8x512xf32> to vector<8x128xf32>
    %122 = arith.negf %121 : vector<8x128xf32>
    %123 = math.exp %122 : vector<8x128xf32>
    %cst_34 = arith.constant 1.000000e+00 : f32
    %124 = vector.broadcast %cst_34 : f32 to vector<8x128xf32>
    %125 = arith.addf %124, %123 : vector<8x128xf32>
    %126 = arith.divf %124, %125 : vector<8x128xf32>
    %127 = arith.mulf %118, %99 : vector<8x128xf32>
    %128 = arith.mulf %112, %120 : vector<8x128xf32>
    %129 = arith.addf %127, %128 : vector<8x128xf32>
    %130 = math.tanh %129 : vector<8x128xf32>
    %131 = arith.mulf %126, %130 : vector<8x128xf32>
    %132 = vector.extract_strided_slice %9 {offsets = [0, 4, 0], sizes = [8, 1, 512], strides = [1, 1, 1]} : vector<8x8x512xf32> to vector<8x1x512xf32>
    %133 = vector.shape_cast %132 : vector<8x1x512xf32> to vector<8x512xf32>
    %c0_35 = arith.constant 0 : index
    %c0_36 = arith.constant 0 : index
    %134 = vector.load %arg4[%c0_35, %c0_36] : memref<128x512xf32, #tpu.memory_space<vmem>>, vector<128x512xf32>
    %cst_37 = arith.constant dense<0.000000e+00> : vector<8x512xf32>
    %135 = tpu.matmul %131, %134, %cst_37 {dimension_numbers = #tpu.dot_dimension_numbers<[1], [0], [0], [1], [0, 0, 1, 1], [], []>} : vector<8x128xf32>, vector<128x512xf32>, vector<8x512xf32> -> vector<8x512xf32>
    %136 = arith.addf %133, %135 : vector<8x512xf32>
    %137 = vector.extract_strided_slice %136 {offsets = [0, 0], sizes = [8, 128], strides = [1, 1]} : vector<8x512xf32> to vector<8x128xf32>
    %138 = arith.negf %137 : vector<8x128xf32>
    %139 = math.exp %138 : vector<8x128xf32>
    %cst_38 = arith.constant 1.000000e+00 : f32
    %140 = vector.broadcast %cst_38 : f32 to vector<8x128xf32>
    %141 = arith.addf %140, %139 : vector<8x128xf32>
    %142 = arith.divf %140, %141 : vector<8x128xf32>
    %143 = vector.extract_strided_slice %136 {offsets = [0, 128], sizes = [8, 128], strides = [1, 1]} : vector<8x512xf32> to vector<8x128xf32>
    %144 = arith.negf %143 : vector<8x128xf32>
    %145 = math.exp %144 : vector<8x128xf32>
    %cst_39 = arith.constant 1.000000e+00 : f32
    %146 = vector.broadcast %cst_39 : f32 to vector<8x128xf32>
    %147 = arith.addf %146, %145 : vector<8x128xf32>
    %148 = arith.divf %146, %147 : vector<8x128xf32>
    %149 = vector.extract_strided_slice %136 {offsets = [0, 256], sizes = [8, 128], strides = [1, 1]} : vector<8x512xf32> to vector<8x128xf32>
    %150 = math.tanh %149 : vector<8x128xf32>
    %151 = vector.extract_strided_slice %136 {offsets = [0, 384], sizes = [8, 128], strides = [1, 1]} : vector<8x512xf32> to vector<8x128xf32>
    %152 = arith.negf %151 : vector<8x128xf32>
    %153 = math.exp %152 : vector<8x128xf32>
    %cst_40 = arith.constant 1.000000e+00 : f32
    %154 = vector.broadcast %cst_40 : f32 to vector<8x128xf32>
    %155 = arith.addf %154, %153 : vector<8x128xf32>
    %156 = arith.divf %154, %155 : vector<8x128xf32>
    %157 = arith.mulf %148, %129 : vector<8x128xf32>
    %158 = arith.mulf %142, %150 : vector<8x128xf32>
    %159 = arith.addf %157, %158 : vector<8x128xf32>
    %160 = math.tanh %159 : vector<8x128xf32>
    %161 = arith.mulf %156, %160 : vector<8x128xf32>
    %162 = vector.extract_strided_slice %9 {offsets = [0, 5, 0], sizes = [8, 1, 512], strides = [1, 1, 1]} : vector<8x8x512xf32> to vector<8x1x512xf32>
    %163 = vector.shape_cast %162 : vector<8x1x512xf32> to vector<8x512xf32>
    %c0_41 = arith.constant 0 : index
    %c0_42 = arith.constant 0 : index
    %164 = vector.load %arg4[%c0_41, %c0_42] : memref<128x512xf32, #tpu.memory_space<vmem>>, vector<128x512xf32>
    %cst_43 = arith.constant dense<0.000000e+00> : vector<8x512xf32>
    %165 = tpu.matmul %161, %164, %cst_43 {dimension_numbers = #tpu.dot_dimension_numbers<[1], [0], [0], [1], [0, 0, 1, 1], [], []>} : vector<8x128xf32>, vector<128x512xf32>, vector<8x512xf32> -> vector<8x512xf32>
    %166 = arith.addf %163, %165 : vector<8x512xf32>
    %167 = vector.extract_strided_slice %166 {offsets = [0, 0], sizes = [8, 128], strides = [1, 1]} : vector<8x512xf32> to vector<8x128xf32>
    %168 = arith.negf %167 : vector<8x128xf32>
    %169 = math.exp %168 : vector<8x128xf32>
    %cst_44 = arith.constant 1.000000e+00 : f32
    %170 = vector.broadcast %cst_44 : f32 to vector<8x128xf32>
    %171 = arith.addf %170, %169 : vector<8x128xf32>
    %172 = arith.divf %170, %171 : vector<8x128xf32>
    %173 = vector.extract_strided_slice %166 {offsets = [0, 128], sizes = [8, 128], strides = [1, 1]} : vector<8x512xf32> to vector<8x128xf32>
    %174 = arith.negf %173 : vector<8x128xf32>
    %175 = math.exp %174 : vector<8x128xf32>
    %cst_45 = arith.constant 1.000000e+00 : f32
    %176 = vector.broadcast %cst_45 : f32 to vector<8x128xf32>
    %177 = arith.addf %176, %175 : vector<8x128xf32>
    %178 = arith.divf %176, %177 : vector<8x128xf32>
    %179 = vector.extract_strided_slice %166 {offsets = [0, 256], sizes = [8, 128], strides = [1, 1]} : vector<8x512xf32> to vector<8x128xf32>
    %180 = math.tanh %179 : vector<8x128xf32>
    %181 = vector.extract_strided_slice %166 {offsets = [0, 384], sizes = [8, 128], strides = [1, 1]} : vector<8x512xf32> to vector<8x128xf32>
    %182 = arith.negf %181 : vector<8x128xf32>
    %183 = math.exp %182 : vector<8x128xf32>
    %cst_46 = arith.constant 1.000000e+00 : f32
    %184 = vector.broadcast %cst_46 : f32 to vector<8x128xf32>
    %185 = arith.addf %184, %183 : vector<8x128xf32>
    %186 = arith.divf %184, %185 : vector<8x128xf32>
    %187 = arith.mulf %178, %159 : vector<8x128xf32>
    %188 = arith.mulf %172, %180 : vector<8x128xf32>
    %189 = arith.addf %187, %188 : vector<8x128xf32>
    %190 = math.tanh %189 : vector<8x128xf32>
    %191 = arith.mulf %186, %190 : vector<8x128xf32>
    %192 = vector.extract_strided_slice %9 {offsets = [0, 6, 0], sizes = [8, 1, 512], strides = [1, 1, 1]} : vector<8x8x512xf32> to vector<8x1x512xf32>
    %193 = vector.shape_cast %192 : vector<8x1x512xf32> to vector<8x512xf32>
    %c0_47 = arith.constant 0 : index
    %c0_48 = arith.constant 0 : index
    %194 = vector.load %arg4[%c0_47, %c0_48] : memref<128x512xf32, #tpu.memory_space<vmem>>, vector<128x512xf32>
    %cst_49 = arith.constant dense<0.000000e+00> : vector<8x512xf32>
    %195 = tpu.matmul %191, %194, %cst_49 {dimension_numbers = #tpu.dot_dimension_numbers<[1], [0], [0], [1], [0, 0, 1, 1], [], []>} : vector<8x128xf32>, vector<128x512xf32>, vector<8x512xf32> -> vector<8x512xf32>
    %196 = arith.addf %193, %195 : vector<8x512xf32>
    %197 = vector.extract_strided_slice %196 {offsets = [0, 0], sizes = [8, 128], strides = [1, 1]} : vector<8x512xf32> to vector<8x128xf32>
    %198 = arith.negf %197 : vector<8x128xf32>
    %199 = math.exp %198 : vector<8x128xf32>
    %cst_50 = arith.constant 1.000000e+00 : f32
    %200 = vector.broadcast %cst_50 : f32 to vector<8x128xf32>
    %201 = arith.addf %200, %199 : vector<8x128xf32>
    %202 = arith.divf %200, %201 : vector<8x128xf32>
    %203 = vector.extract_strided_slice %196 {offsets = [0, 128], sizes = [8, 128], strides = [1, 1]} : vector<8x512xf32> to vector<8x128xf32>
    %204 = arith.negf %203 : vector<8x128xf32>
    %205 = math.exp %204 : vector<8x128xf32>
    %cst_51 = arith.constant 1.000000e+00 : f32
    %206 = vector.broadcast %cst_51 : f32 to vector<8x128xf32>
    %207 = arith.addf %206, %205 : vector<8x128xf32>
    %208 = arith.divf %206, %207 : vector<8x128xf32>
    %209 = vector.extract_strided_slice %196 {offsets = [0, 256], sizes = [8, 128], strides = [1, 1]} : vector<8x512xf32> to vector<8x128xf32>
    %210 = math.tanh %209 : vector<8x128xf32>
    %211 = vector.extract_strided_slice %196 {offsets = [0, 384], sizes = [8, 128], strides = [1, 1]} : vector<8x512xf32> to vector<8x128xf32>
    %212 = arith.negf %211 : vector<8x128xf32>
    %213 = math.exp %212 : vector<8x128xf32>
    %cst_52 = arith.constant 1.000000e+00 : f32
    %214 = vector.broadcast %cst_52 : f32 to vector<8x128xf32>
    %215 = arith.addf %214, %213 : vector<8x128xf32>
    %216 = arith.divf %214, %215 : vector<8x128xf32>
    %217 = arith.mulf %208, %189 : vector<8x128xf32>
    %218 = arith.mulf %202, %210 : vector<8x128xf32>
    %219 = arith.addf %217, %218 : vector<8x128xf32>
    %220 = math.tanh %219 : vector<8x128xf32>
    %221 = arith.mulf %216, %220 : vector<8x128xf32>
    %222 = vector.extract_strided_slice %9 {offsets = [0, 7, 0], sizes = [8, 1, 512], strides = [1, 1, 1]} : vector<8x8x512xf32> to vector<8x1x512xf32>
    %223 = vector.shape_cast %222 : vector<8x1x512xf32> to vector<8x512xf32>
    %c0_53 = arith.constant 0 : index
    %c0_54 = arith.constant 0 : index
    %224 = vector.load %arg4[%c0_53, %c0_54] : memref<128x512xf32, #tpu.memory_space<vmem>>, vector<128x512xf32>
    %cst_55 = arith.constant dense<0.000000e+00> : vector<8x512xf32>
    %225 = tpu.matmul %221, %224, %cst_55 {dimension_numbers = #tpu.dot_dimension_numbers<[1], [0], [0], [1], [0, 0, 1, 1], [], []>} : vector<8x128xf32>, vector<128x512xf32>, vector<8x512xf32> -> vector<8x512xf32>
    %226 = arith.addf %223, %225 : vector<8x512xf32>
    %227 = vector.extract_strided_slice %226 {offsets = [0, 0], sizes = [8, 128], strides = [1, 1]} : vector<8x512xf32> to vector<8x128xf32>
    %228 = arith.negf %227 : vector<8x128xf32>
    %229 = math.exp %228 : vector<8x128xf32>
    %cst_56 = arith.constant 1.000000e+00 : f32
    %230 = vector.broadcast %cst_56 : f32 to vector<8x128xf32>
    %231 = arith.addf %230, %229 : vector<8x128xf32>
    %232 = arith.divf %230, %231 : vector<8x128xf32>
    %233 = vector.extract_strided_slice %226 {offsets = [0, 128], sizes = [8, 128], strides = [1, 1]} : vector<8x512xf32> to vector<8x128xf32>
    %234 = arith.negf %233 : vector<8x128xf32>
    %235 = math.exp %234 : vector<8x128xf32>
    %cst_57 = arith.constant 1.000000e+00 : f32
    %236 = vector.broadcast %cst_57 : f32 to vector<8x128xf32>
    %237 = arith.addf %236, %235 : vector<8x128xf32>
    %238 = arith.divf %236, %237 : vector<8x128xf32>
    %239 = vector.extract_strided_slice %226 {offsets = [0, 256], sizes = [8, 128], strides = [1, 1]} : vector<8x512xf32> to vector<8x128xf32>
    %240 = math.tanh %239 : vector<8x128xf32>
    %241 = vector.extract_strided_slice %226 {offsets = [0, 384], sizes = [8, 128], strides = [1, 1]} : vector<8x512xf32> to vector<8x128xf32>
    %242 = arith.negf %241 : vector<8x128xf32>
    %243 = math.exp %242 : vector<8x128xf32>
    %cst_58 = arith.constant 1.000000e+00 : f32
    %244 = vector.broadcast %cst_58 : f32 to vector<8x128xf32>
    %245 = arith.addf %244, %243 : vector<8x128xf32>
    %246 = arith.divf %244, %245 : vector<8x128xf32>
    %247 = arith.mulf %238, %219 : vector<8x128xf32>
    %248 = arith.mulf %232, %240 : vector<8x128xf32>
    %249 = arith.addf %247, %248 : vector<8x128xf32>
    %250 = math.tanh %249 : vector<8x128xf32>
    %251 = arith.mulf %246, %250 : vector<8x128xf32>
    %c0_59 = arith.constant 0 : index
    %c0_60 = arith.constant 0 : index
    %252 = vector.load %arg9[%c0_59, %c0_60] : memref<8x128xf32, #tpu.memory_space<vmem>>, vector<8x128xf32>
    tpu.vector_store %arg9[%c0_59, %c0_60], %251 {strides = array<i32>} : memref<8x128xf32, #tpu.memory_space<vmem>>, vector<8x128xf32>,
    %c0_61 = arith.constant 0 : index
    %c0_62 = arith.constant 0 : index
    %253 = vector.load %arg10[%c0_61, %c0_62] : memref<8x128xf32, #tpu.memory_space<vmem>>, vector<8x128xf32>
    tpu.vector_store %arg10[%c0_61, %c0_62], %249 {strides = array<i32>} : memref<8x128xf32, #tpu.memory_space<vmem>>, vector<8x128xf32>,
    %c0_i32_63 = arith.constant 0 : i32
    %254 = arith.cmpi eq, %arg1, %c0_i32_63 : i32
    %255 = arith.extui %254 : i1 to i32
    %c0_i32_64 = arith.constant 0 : i32
    %256 = arith.cmpi ne, %255, %c0_i32_64 : i32
    scf.if %256 {
      %c0_65 = arith.constant 0 : index
      %c0_66 = arith.constant 0 : index
      %257 = vector.load %arg6[%c0_65, %c0_66] : memref<128x128xf32, #tpu.memory_space<vmem>>, vector<128x128xf32>
      %cst_67 = arith.constant dense<0.000000e+00> : vector<8x128xf32>
      %258 = tpu.matmul %251, %257, %cst_67 {dimension_numbers = #tpu.dot_dimension_numbers<[1], [0], [0], [1], [0, 0, 1, 1], [], []>} : vector<8x128xf32>, vector<128x128xf32>, vector<8x128xf32> -> vector<8x128xf32>
      %c0_68 = arith.constant 0 : index
      %c0_69 = arith.constant 0 : index
      %259 = vector.load %arg7[%c0_68, %c0_69] : memref<1x128xf32, #tpu.memory_space<vmem>>, vector<1x128xf32>
      %260 = vector.broadcast %259 : vector<1x128xf32> to vector<8x128xf32>
      %261 = arith.addf %258, %260 : vector<8x128xf32>
      %c0_70 = arith.constant 0 : index
      %c0_71 = arith.constant 0 : index
      %262 = vector.load %arg8[%c0_70, %c0_71] : memref<8x128xf32, #tpu.memory_space<vmem>>, vector<8x128xf32>
      tpu.vector_store %arg8[%c0_70, %c0_71], %261 {strides = array<i32>} : memref<8x128xf32, #tpu.memory_space<vmem>>, vector<8x128xf32>,
    } else {
    }
    return
  }
  func.func @transform_0(%arg0: i32, %arg1: i32) -> (i32, i32, i32) {
    %c0_i32 = arith.constant 0 : i32
    %c0_i32_0 = arith.constant 0 : i32
    return %arg0, %arg1, %c0_i32 : i32, i32, i32
  }
  func.func @transform_1(%arg0: i32, %arg1: i32) -> (i32, i32) {
    %c0_i32 = arith.constant 0 : i32
    %c0_i32_0 = arith.constant 0 : i32
    %c0_i32_1 = arith.constant 0 : i32
    return %c0_i32, %c0_i32_0 : i32, i32
  }
  func.func @transform_2(%arg0: i32, %arg1: i32) -> (i32, i32) {
    %c0_i32 = arith.constant 0 : i32
    %c0_i32_0 = arith.constant 0 : i32
    %c0_i32_1 = arith.constant 0 : i32
    return %c0_i32, %c0_i32_0 : i32, i32
  }
  func.func @transform_3(%arg0: i32, %arg1: i32) -> (i32, i32) {
    %c0_i32 = arith.constant 0 : i32
    %c0_i32_0 = arith.constant 0 : i32
    %c0_i32_1 = arith.constant 0 : i32
    return %c0_i32, %c0_i32_0 : i32, i32
  }
  func.func @transform_4(%arg0: i32, %arg1: i32) -> (i32, i32) {
    %c0_i32 = arith.constant 0 : i32
    %c0_i32_0 = arith.constant 0 : i32
    %c0_i32_1 = arith.constant 0 : i32
    return %c0_i32, %c0_i32_0 : i32, i32
  }
  func.func @transform_5(%arg0: i32, %arg1: i32) -> (i32, i32) {
    %c0_i32 = arith.constant 0 : i32
    %c0_i32_0 = arith.constant 0 : i32
    %c0_i32_1 = arith.constant 0 : i32
    return %c0_i32, %c0_i32_0 : i32, i32
  }
  func.func @transform_6(%arg0: i32, %arg1: i32) -> (i32, i32) {
    %c0_i32 = arith.constant 0 : i32
    %c0_i32_0 = arith.constant 0 : i32
    return %arg0, %c0_i32 : i32, i32
  }
}

</mosaic_0001>

<llo_original>
// kernel: tpu_custom_call.1
$region0: #{tpu_custom_call.1}
  #allocation0 [shape = 'u32[]', space=smem, size = 0x4, offset = 0x4, fixed_abs, tag = 'smem constant byte address 0x4 - core index']
  #allocation1 [shape = 'u32[144,128]{1,0:T(1,128)}', space=vmem, size = 0x12000, scoped, tag = 'internal scratch']
  #allocation2 [shape = 'f32[8,128]{1,0:T(8,128)}', space=vmem, size = 0x1000, scoped, tag = 'scratch operand']
  #allocation3 [shape = 'f32[8,128]{1,0:T(8,128)}', space=vmem, size = 0x1000, scoped, tag = 'scratch operand']
  %s0 = inlined_call_operand.hbm [shape: f32[8,8,128], index: 0, kind: input, shape index: {}]
  %s1 = inlined_call_operand.hbm [shape: f32[128,512], index: 1, kind: input, shape index: {}]
  %s2 = inlined_call_operand.hbm [shape: f32[128,512], index: 2, kind: input, shape index: {}]
  %s3 = inlined_call_operand.vmem [shape: f32[1,512], index: 3, kind: input, shape index: {}]
  %s4 = inlined_call_operand.hbm [shape: f32[128,128], index: 4, kind: input, shape index: {}]
  %s5 = inlined_call_operand.vmem [shape: f32[1,128], index: 5, kind: input, shape index: {}]
  %s6 = inlined_call_operand.hbm [shape: f32[8,128], index: 6, kind: output, shape index: {}]
  %s7 = sld [smem:[#allocation0]]
  $region58: #{tpu_custom_call.1} parent=0
    _
  %s9 = ssub.s32 1, %s7
  %s10 = scalar_select 0, %s9, %s7
  $region1: #{tpu_custom_call.1} parent=0
    #allocation4 [shape = 'u8[32768]{0}', space=vmem, size = 0x8000, scoped, tag = 'input window, operand 0, single buffered']
    #allocation5 [shape = 's32[1]{0}', space=sflag, size = 0x4, scoped, tag = 'scoped memory for tpu_custom_call.1']
    #allocation6 [shape = 's32[1]{0}', space=sflag, size = 0x4, scoped, tag = 'scoped memory for tpu_custom_call.1']
    #allocation7 [shape = 'u8[262144]{0}', space=vmem, size = 0x40000, scoped, tag = 'input window, operand 1, single buffered']
    #allocation8 [shape = 's32[1]{0}', space=sflag, size = 0x4, scoped, tag = 'scoped memory for tpu_custom_call.1']
    #allocation9 [shape = 'u8[262144]{0}', space=vmem, size = 0x40000, scoped, tag = 'input window, operand 2, single buffered']
    #allocation10 [shape = 'u8[65536]{0}', space=vmem, size = 0x10000, scoped, tag = 'input window, operand 4, single buffered']
    #allocation11 [shape = 's32[1]{0}', space=sflag, size = 0x4, scoped, tag = 'scoped memory for tpu_custom_call.1']
    #allocation12 [shape = 'u8[4096]{0}', space=vmem, size = 0x1000, scoped, tag = 'output window, operand 0, single buffered']
    %11 = vsyncpa [#allocation5], 0
    %12 = vsyncpa [#allocation8], 0
    %13 = vsyncpa [#allocation11], 0
    %14 = vsyncpa [#allocation6], 0
    // Predicated region
    $region2: #{tpu_custom_call.1} parent=1 // pred_check
      _
    $region3: #{tpu_custom_call.1} parent=1 // pred_check_branch
      %16 = sbr.rel (0) target = $region5
    $region4: #{tpu_custom_call.1} parent=1 // pred_region
      %s18 = ssub.s32 1024, 1024
      %19 = vsyncadd [#allocation5], %s18
      %s20 = sshll.u32 [#allocation4], 4
      %s21 = int_to_ptr.vmem [resolvable:$true] %s20
      %26 = dma.hbm_to_vmem [thread:$0]  %s0, 1024, %s21, [#allocation5], 128, 128, 8
    $region5: #{tpu_custom_call.1} parent=1 // pred_fallthru
      _
    // Predicated region
    $region6: #{tpu_custom_call.1} parent=1 // pred_check
      _
    $region7: #{tpu_custom_call.1} parent=1 // pred_check_branch
      %28 = sbr.rel (0) target = $region9
    $region8: #{tpu_custom_call.1} parent=1 // pred_region
      %s30 = ssub.s32 8192, 8192
      %31 = vsyncadd [#allocation8], %s30
      %s32 = sshll.u32 [#allocation7], 4
      %s33 = int_to_ptr.vmem [resolvable:$true] %s32
      %38 = dma.hbm_to_vmem [thread:$0]  %s1, 8192, %s33, [#allocation8], 512, 512, 32
    $region9: #{tpu_custom_call.1} parent=1 // pred_fallthru
      _
    // Predicated region
    $region10: #{tpu_custom_call.1} parent=1 // pred_check
      _
    $region11: #{tpu_custom_call.1} parent=1 // pred_check_branch
      %40 = sbr.rel (0) target = $region13
    $region12: #{tpu_custom_call.1} parent=1 // pred_region
      %s42 = ssub.s32 8192, 8192
      %43 = vsyncadd [#allocation8], %s42
      %s44 = sshll.u32 [#allocation9], 4
      %s45 = int_to_ptr.vmem [resolvable:$true] %s44
      %50 = dma.hbm_to_vmem [thread:$0]  %s2, 8192, %s45, [#allocation8], 512, 512, 32
    $region13: #{tpu_custom_call.1} parent=1 // pred_fallthru
      _
    // Predicated region
    $region14: #{tpu_custom_call.1} parent=1 // pred_check
      _
    $region15: #{tpu_custom_call.1} parent=1 // pred_check_branch
      %52 = sbr.rel (0) target = $region17
    $region16: #{tpu_custom_call.1} parent=1 // pred_region
      _
    $region17: #{tpu_custom_call.1} parent=1 // pred_fallthru
      _
    // Predicated region
    $region18: #{tpu_custom_call.1} parent=1 // pred_check
      _
    $region19: #{tpu_custom_call.1} parent=1 // pred_check_branch
      %54 = sbr.rel (0) target = $region21
    $region20: #{tpu_custom_call.1} parent=1 // pred_region
      %s56 = ssub.s32 2048, 2048
      %57 = vsyncadd [#allocation11], %s56
      %s58 = sshll.u32 [#allocation10], 4
      %s59 = int_to_ptr.vmem [resolvable:$true] %s58
      %64 = dma.hbm_to_vmem [thread:$0]  %s4, 2048, %s59, [#allocation11], 128, 128, 8
    $region21: #{tpu_custom_call.1} parent=1 // pred_fallthru
      _
    // Predicated region
    $region22: #{tpu_custom_call.1} parent=1 // pred_check
      _
    $region23: #{tpu_custom_call.1} parent=1 // pred_check_branch
      %66 = sbr.rel (0) target = $region25
    $region24: #{tpu_custom_call.1} parent=1 // pred_region
      _
    $region25: #{tpu_custom_call.1} parent=1 // pred_fallthru
      _
    // Predicated region
    $region26: #{tpu_custom_call.1} parent=1 // pred_check
      _
    $region27: #{tpu_custom_call.1} parent=1 // pred_check_branch
      %68 = sbr.rel (0) target = $region29
    $region28: #{tpu_custom_call.1} parent=1 // pred_region
      %69 = dma.done [#allocation5], 1024
    $region29: #{tpu_custom_call.1} parent=1 // pred_fallthru
      _
    // Predicated region
    $region30: #{tpu_custom_call.1} parent=1 // pred_check
      _
    $region31: #{tpu_custom_call.1} parent=1 // pred_check_branch
      %71 = sbr.rel (0) target = $region33
    $region32: #{tpu_custom_call.1} parent=1 // pred_region
      %72 = dma.done [#allocation8], 8192
    $region33: #{tpu_custom_call.1} parent=1 // pred_fallthru
      _
    // Predicated region
    $region34: #{tpu_custom_call.1} parent=1 // pred_check
      _
    $region35: #{tpu_custom_call.1} parent=1 // pred_check_branch
      %74 = sbr.rel (0) target = $region37
    $region36: #{tpu_custom_call.1} parent=1 // pred_region
      %75 = dma.done [#allocation8], 8192
    $region37: #{tpu_custom_call.1} parent=1 // pred_fallthru
      _
    // Predicated region
    $region38: #{tpu_custom_call.1} parent=1 // pred_check
      _
    $region39: #{tpu_custom_call.1} parent=1 // pred_check_branch
      %77 = sbr.rel (0) target = $region41
    $region40: #{tpu_custom_call.1} parent=1 // pred_region
      %78 = dma.done [#allocation11], 2048
    $region41: #{tpu_custom_call.1} parent=1 // pred_fallthru
      _
    %p79 = scmp.eq.s32.totalorder 0, 0
    // Predicated region
    $region42: #{tpu_custom_call.1} parent=1 // pred_check
      %p80 = pneg %p79
    $region43: #{tpu_custom_call.1} parent=1 // pred_check_branch
      %82 = sbr.rel (%p80) target = $region45
    $region44: #{tpu_custom_call.1} parent=1 // pred_region
      %83 = vst [vmem:[#allocation2] sm:$0xff] 0.0
      %84 = vst [vmem:[#allocation3] sm:$0xff] 0.0
    $region45: #{tpu_custom_call.1} parent=1 // pred_fallthru
      _
    %v85 = vld [vmem:[#allocation4] sm:$0xff]
    %v86 = vld [vmem:[#allocation4 + $0x8] sm:$0xff]
    %v87 = vld [vmem:[#allocation4 + $0x10] sm:$0xff]
    %v88 = vld [vmem:[#allocation4 + $0x18] sm:$0xff]
    %v89 = vld [vmem:[#allocation4 + $0x20] sm:$0xff]
    %v90 = vld [vmem:[#allocation4 + $0x28] sm:$0xff]
    %v91 = vld [vmem:[#allocation4 + $0x30] sm:$0xff]
    %v92 = vld [vmem:[#allocation4 + $0x38] sm:$0xff]
    %v93 = vld [vmem:[#allocation7] sm:$0xff]
    %v94 = vld [vmem:[#allocation7 + $0x8] sm:$0xff]
    %v95 = vld [vmem:[#allocation7 + $0x10] sm:$0xff]
    %v96 = vld [vmem:[#allocation7 + $0x18] sm:$0xff]
    %v97 = vld [vmem:[#allocation7 + $0x20] sm:$0xff]
    %v98 = vld [vmem:[#allocation7 + $0x28] sm:$0xff]
    %v99 = vld [vmem:[#allocation7 + $0x30] sm:$0xff]
    %v100 = vld [vmem:[#allocation7 + $0x38] sm:$0xff]
    %v101 = vld [vmem:[#allocation7 + $0x40] sm:$0xff]
    %v102 = vld [vmem:[#allocation7 + $0x48] sm:$0xff]
    %v103 = vld [vmem:[#allocation7 + $0x50] sm:$0xff]
    %v104 = vld [vmem:[#allocation7 + $0x58] sm:$0xff]
    %v105 = vld [vmem:[#allocation7 + $0x60] sm:$0xff]
    %v106 = vld [vmem:[#allocation7 + $0x68] sm:$0xff]
    %v107 = vld [vmem:[#allocation7 + $0x70] sm:$0xff]
    %v108 = vld [vmem:[#allocation7 + $0x78] sm:$0xff]
    %v109 = vld [vmem:[#allocation7 + $0x80] sm:$0xff]
    %v110 = vld [vmem:[#allocation7 + $0x88] sm:$0xff]
    %v111 = vld [vmem:[#allocation7 + $0x90] sm:$0xff]
    %v112 = vld [vmem:[#allocation7 + $0x98] sm:$0xff]
    %v113 = vld [vmem:[#allocation7 + $0xa0] sm:$0xff]
    %v114 = vld [vmem:[#allocation7 + $0xa8] sm:$0xff]
    %v115 = vld [vmem:[#allocation7 + $0xb0] sm:$0xff]
    %v116 = vld [vmem:[#allocation7 + $0xb8] sm:$0xff]
    %v117 = vld [vmem:[#allocation7 + $0xc0] sm:$0xff]
    %v118 = vld [vmem:[#allocation7 + $0xc8] sm:$0xff]
    %v119 = vld [vmem:[#allocation7 + $0xd0] sm:$0xff]
    %v120 = vld [vmem:[#allocation7 + $0xd8] sm:$0xff]
    %v121 = vld [vmem:[#allocation7 + $0xe0] sm:$0xff]
    %v122 = vld [vmem:[#allocation7 + $0xe8] sm:$0xff]
    %v123 = vld [vmem:[#allocation7 + $0xf0] sm:$0xff]
    %v124 = vld [vmem:[#allocation7 + $0xf8] sm:$0xff]
    %v125 = vld [vmem:[#allocation7 + $0x100] sm:$0xff]
    %v126 = vld [vmem:[#allocation7 + $0x108] sm:$0xff]
    %v127 = vld [vmem:[#allocation7 + $0x110] sm:$0xff]
    %v128 = vld [vmem:[#allocation7 + $0x118] sm:$0xff]
    %v129 = vld [vmem:[#allocation7 + $0x120] sm:$0xff]
    %v130 = vld [vmem:[#allocation7 + $0x128] sm:$0xff]
    %v131 = vld [vmem:[#allocation7 + $0x130] sm:$0xff]
    %v132 = vld [vmem:[#allocation7 + $0x138] sm:$0xff]
    %v133 = vld [vmem:[#allocation7 + $0x140] sm:$0xff]
    %v134 = vld [vmem:[#allocation7 + $0x148] sm:$0xff]
    %v135 = vld [vmem:[#allocation7 + $0x150] sm:$0xff]
    %v136 = vld [vmem:[#allocation7 + $0x158] sm:$0xff]
    %v137 = vld [vmem:[#allocation7 + $0x160] sm:$0xff]
    %v138 = vld [vmem:[#allocation7 + $0x168] sm:$0xff]
    %v139 = vld [vmem:[#allocation7 + $0x170] sm:$0xff]
    %v140 = vld [vmem:[#allocation7 + $0x178] sm:$0xff]
    %v141 = vld [vmem:[#allocation7 + $0x180] sm:$0xff]
    %v142 = vld [vmem:[#allocation7 + $0x188] sm:$0xff]
    %v143 = vld [vmem:[#allocation7 + $0x190] sm:$0xff]
    %v144 = vld [vmem:[#allocation7 + $0x198] sm:$0xff]
    %v145 = vld [vmem:[#allocation7 + $0x1a0] sm:$0xff]
    %v146 = vld [vmem:[#allocation7 + $0x1a8] sm:$0xff]
    %v147 = vld [vmem:[#allocation7 + $0x1b0] sm:$0xff]
    %v148 = vld [vmem:[#allocation7 + $0x1b8] sm:$0xff]
    %v149 = vld [vmem:[#allocation7 + $0x1c0] sm:$0xff]
    %v150 = vld [vmem:[#allocation7 + $0x1c8] sm:$0xff]
    %v151 = vld [vmem:[#allocation7 + $0x1d0] sm:$0xff]
    %v152 = vld [vmem:[#allocation7 + $0x1d8] sm:$0xff]
    %v153 = vld [vmem:[#allocation7 + $0x1e0] sm:$0xff]
    %v154 = vld [vmem:[#allocation7 + $0x1e8] sm:$0xff]
    %v155 = vld [vmem:[#allocation7 + $0x1f0] sm:$0xff]
    %v156 = vld [vmem:[#allocation7 + $0x1f8] sm:$0xff]
    %v157 = vld [vmem:[%s3] sm:$0xf]
    %v159 = vlaneseq
    %v160 = vshrl.u32 %v159, 7
    %v161 = vsub.s32 0, %v160
    %v162 = vrot.slane %v157, %v161
    %v163 = vlaneseq
    %v164 = vshrl.u32 %v163, 7
    %v165 = vsub.s32 1, %v164
    %v166 = vrot.slane %v157, %v165
    %v167 = vlaneseq
    %v168 = vshrl.u32 %v167, 7
    %v169 = vsub.s32 2, %v168
    %v170 = vrot.slane %v157, %v169
    %v171 = vlaneseq
    %v172 = vshrl.u32 %v171, 7
    %v173 = vsub.s32 3, %v172
    %v174 = vrot.slane %v157, %v173
    %179 = vmatprep.subr.mxu0 %v94
    %180 = vmatpush1.msra.mxu0 %v93
    %181 = vmatprep.subr.mxu0 %v98
    %182 = vmatpush1.msra.mxu0 %v97
    %183 = vmatprep.subr.mxu0 %v102
    %184 = vmatpush1.msra.mxu0 %v101
    %185 = vmatprep.subr.mxu0 %v106
    %186 = vmatpush1.msra.mxu0 %v105
    %187 = vmatprep.subr.mxu0 %v110
    %188 = vmatpush1.msra.mxu0 %v109
    %189 = vmatprep.subr.mxu0 %v114
    %190 = vmatpush1.msra.mxu0 %v113
    %191 = vmatprep.subr.mxu0 %v118
    %192 = vmatpush1.msra.mxu0 %v117
    %193 = vmatprep.subr.mxu0 %v122
    %194 = vmatpush1.msra.mxu0 %v121
    %195 = vmatprep.subr.mxu0 %v126
    %196 = vmatpush1.msra.mxu0 %v125
    %197 = vmatprep.subr.mxu0 %v130
    %198 = vmatpush1.msra.mxu0 %v129
    %199 = vmatprep.subr.mxu0 %v134
    %200 = vmatpush1.msra.mxu0 %v133
    %201 = vmatprep.subr.mxu0 %v138
    %202 = vmatpush1.msra.mxu0 %v137
    %203 = vmatprep.subr.mxu0 %v142
    %204 = vmatpush1.msra.mxu0 %v141
    %205 = vmatprep.subr.mxu0 %v146
    %206 = vmatpush1.msra.mxu0 %v145
    %207 = vmatprep.subr.mxu0 %v150
    %208 = vmatpush1.msra.mxu0 %v149
    %209 = vmatprep.subr.mxu0 %v154
    %210 = vmatpush1.msra.mxu0 %v153
    %211 = vmatprep.subr.mxu0 0.0
    %212 = vmatpush1.msra.mxu0 0.0
    %213 = vmatprep.subr.mxu0 0.0
    %214 = vmatpush1.msra.mxu0 0.0
    %215 = vmatprep.subr.mxu0 0.0
    %216 = vmatpush1.msra.mxu0 0.0
    %217 = vmatprep.subr.mxu0 0.0
    %218 = vmatpush1.msra.mxu0 0.0
    %219 = vmatprep.subr.mxu0 0.0
    %220 = vmatpush1.msra.mxu0 0.0
    %221 = vmatprep.subr.mxu0 0.0
    %222 = vmatpush1.msra.mxu0 0.0
    %223 = vmatprep.subr.mxu0 0.0
    %224 = vmatpush1.msra.mxu0 0.0
    %225 = vmatprep.subr.mxu0 0.0
    %226 = vmatpush1.msra.mxu0 0.0
    %227 = vmatprep.subr.mxu0 0.0
    %228 = vmatpush1.msra.mxu0 0.0
    %229 = vmatprep.subr.mxu0 0.0
    %230 = vmatpush1.msra.mxu0 0.0
    %231 = vmatprep.subr.mxu0 0.0
    %232 = vmatpush1.msra.mxu0 0.0
    %233 = vmatprep.subr.mxu0 0.0
    %234 = vmatpush1.msra.mxu0 0.0
    %235 = vmatprep.subr.mxu0 0.0
    %236 = vmatpush1.msra.mxu0 0.0
    %237 = vmatprep.subr.mxu0 0.0
    %238 = vmatpush1.msra.mxu0 0.0
    %239 = vmatprep.subr.mxu0 0.0
    %240 = vmatpush1.msra.mxu0 0.0
    %241 = vmatprep.subr.mxu0 0.0
    %242 = vmatpush1.msra.mxu0 0.0
    %243 = vmatprep.mubr.f32.mxu0 0.0
    %244 = vmatmul.mubr.f32.gmra.mrb[0].mxu0 %v85
    %v245 = vpop.f32.mrb[0].mxu0
    %v246 = vadd.f32 %v162, %v245
    %v247 = vpop.f32.mrb[0].mxu0
    %v248 = vadd.f32 %v166, %v247
    %249 = vmatprep.mubr.f32.mxu0 0.0
    %250 = vmatmul.mubr.f32.gmra.mrb[0].mxu0 %v86
    %v251 = vpop.f32.mrb[0].mxu0
    %v252 = vadd.f32 %v162, %v251
    %v253 = vpop.f32.mrb[0].mxu0
    %v254 = vadd.f32 %v166, %v253
    %255 = vmatprep.mubr.f32.mxu0 0.0
    %256 = vmatmul.mubr.f32.gmra.mrb[0].mxu0 %v87
    %v257 = vpop.f32.mrb[0].mxu0
    %v258 = vadd.f32 %v162, %v257
    %v259 = vpop.f32.mrb[0].mxu0
    %v260 = vadd.f32 %v166, %v259
    %261 = vmatprep.mubr.f32.mxu0 0.0
    %262 = vmatmul.mubr.f32.gmra.mrb[0].mxu0 %v88
    %v263 = vpop.f32.mrb[0].mxu0
    %v264 = vadd.f32 %v162, %v263
    %v265 = vpop.f32.mrb[0].mxu0
    %v266 = vadd.f32 %v166, %v265
    %267 = vmatprep.mubr.f32.mxu0 0.0
    %268 = vmatmul.mubr.f32.gmra.mrb[0].mxu0 %v89
    %v269 = vpop.f32.mrb[0].mxu0
    %v270 = vadd.f32 %v162, %v269
    %v271 = vpop.f32.mrb[0].mxu0
    %v272 = vadd.f32 %v166, %v271
    %273 = vmatprep.mubr.f32.mxu0 0.0
    %274 = vmatmul.mubr.f32.gmra.mrb[0].mxu0 %v90
    %v275 = vpop.f32.mrb[0].mxu0
    %v276 = vadd.f32 %v162, %v275
    %v277 = vpop.f32.mrb[0].mxu0
    %v278 = vadd.f32 %v166, %v277
    %279 = vmatprep.mubr.f32.mxu0 0.0
    %280 = vmatmul.mubr.f32.gmra.mrb[0].mxu0 %v91
    %v281 = vpop.f32.mrb[0].mxu0
    %v282 = vadd.f32 %v162, %v281
    %v283 = vpop.f32.mrb[0].mxu0
    %v284 = vadd.f32 %v166, %v283
    %285 = vmatprep.mubr.f32.mxu0 0.0
    %286 = vmatmul.mubr.f32.gmra.mrb[0].mxu0 %v92
    %v287 = vpop.f32.mrb[0].mxu0
    %v288 = vadd.f32 %v162, %v287
    %v289 = vpop.f32.mrb[0].mxu0
    %v290 = vadd.f32 %v166, %v289
    %291 = vdwg.mxu0
    %292 = vmatprep.subr.mxu0 %v96
    %293 = vmatpush1.msra.mxu0 %v95
    %294 = vmatprep.subr.mxu0 %v100
    %295 = vmatpush1.msra.mxu0 %v99
    %296 = vmatprep.subr.mxu0 %v104
    %297 = vmatpush1.msra.mxu0 %v103
    %298 = vmatprep.subr.mxu0 %v108
    %299 = vmatpush1.msra.mxu0 %v107
    %300 = vmatprep.subr.mxu0 %v112
    %301 = vmatpush1.msra.mxu0 %v111
    %302 = vmatprep.subr.mxu0 %v116
    %303 = vmatpush1.msra.mxu0 %v115
    %304 = vmatprep.subr.mxu0 %v120
    %305 = vmatpush1.msra.mxu0 %v119
    %306 = vmatprep.subr.mxu0 %v124
    %307 = vmatpush1.msra.mxu0 %v123
    %308 = vmatprep.subr.mxu0 %v128
    %309 = vmatpush1.msra.mxu0 %v127
    %310 = vmatprep.subr.mxu0 %v132
    %311 = vmatpush1.msra.mxu0 %v131
    %312 = vmatprep.subr.mxu0 %v136
    %313 = vmatpush1.msra.mxu0 %v135
    %314 = vmatprep.subr.mxu0 %v140
    %315 = vmatpush1.msra.mxu0 %v139
    %316 = vmatprep.subr.mxu0 %v144
    %317 = vmatpush1.msra.mxu0 %v143
    %318 = vmatprep.subr.mxu0 %v148
    %319 = vmatpush1.msra.mxu0 %v147
    %320 = vmatprep.subr.mxu0 %v152
    %321 = vmatpush1.msra.mxu0 %v151
    %322 = vmatprep.subr.mxu0 %v156
    %323 = vmatpush1.msra.mxu0 %v155
    %324 = vmatprep.subr.mxu0 0.0
    %325 = vmatpush1.msra.mxu0 0.0
    %326 = vmatprep.subr.mxu0 0.0
    %327 = vmatpush1.msra.mxu0 0.0
    %328 = vmatprep.subr.mxu0 0.0
    %329 = vmatpush1.msra.mxu0 0.0
    %330 = vmatprep.subr.mxu0 0.0
    %331 = vmatpush1.msra.mxu0 0.0
    %332 = vmatprep.subr.mxu0 0.0
    %333 = vmatpush1.msra.mxu0 0.0
    %334 = vmatprep.subr.mxu0 0.0
    %335 = vmatpush1.msra.mxu0 0.0
    %336 = vmatprep.subr.mxu0 0.0
    %337 = vmatpush1.msra.mxu0 0.0
    %338 = vmatprep.subr.mxu0 0.0
    %339 = vmatpush1.msra.mxu0 0.0
    %340 = vmatprep.subr.mxu0 0.0
    %341 = vmatpush1.msra.mxu0 0.0
    %342 = vmatprep.subr.mxu0 0.0
    %343 = vmatpush1.msra.mxu0 0.0
    %344 = vmatprep.subr.mxu0 0.0
    %345 = vmatpush1.msra.mxu0 0.0
    %346 = vmatprep.subr.mxu0 0.0
    %347 = vmatpush1.msra.mxu0 0.0
    %348 = vmatprep.subr.mxu0 0.0
    %349 = vmatpush1.msra.mxu0 0.0
    %350 = vmatprep.subr.mxu0 0.0
    %351 = vmatpush1.msra.mxu0 0.0
    %352 = vmatprep.subr.mxu0 0.0
    %353 = vmatpush1.msra.mxu0 0.0
    %354 = vmatprep.subr.mxu0 0.0
    %355 = vmatpush1.msra.mxu0 0.0
    %356 = vmatprep.mubr.f32.mxu0 0.0
    %357 = vmatmul.mubr.f32.gmra.mrb[0].mxu0 %v85
    %v358 = vpop.f32.mrb[0].mxu0
    %v359 = vadd.f32 %v170, %v358
    %v360 = vpop.f32.mrb[0].mxu0
    %v361 = vadd.f32 %v174, %v360
    %362 = vmatprep.mubr.f32.mxu0 0.0
    %363 = vmatmul.mubr.f32.gmra.mrb[0].mxu0 %v86
    %v364 = vpop.f32.mrb[0].mxu0
    %v365 = vadd.f32 %v170, %v364
    %v366 = vpop.f32.mrb[0].mxu0
    %v367 = vadd.f32 %v174, %v366
    %368 = vmatprep.mubr.f32.mxu0 0.0
    %369 = vmatmul.mubr.f32.gmra.mrb[0].mxu0 %v87
    %v370 = vpop.f32.mrb[0].mxu0
    %v371 = vadd.f32 %v170, %v370
    %v372 = vpop.f32.mrb[0].mxu0
    %v373 = vadd.f32 %v174, %v372
    %374 = vmatprep.mubr.f32.mxu0 0.0
    %375 = vmatmul.mubr.f32.gmra.mrb[0].mxu0 %v88
    %v376 = vpop.f32.mrb[0].mxu0
    %v377 = vadd.f32 %v170, %v376
    %v378 = vpop.f32.mrb[0].mxu0
    %v379 = vadd.f32 %v174, %v378
    %380 = vmatprep.mubr.f32.mxu0 0.0
    %381 = vmatmul.mubr.f32.gmra.mrb[0].mxu0 %v89
    %v382 = vpop.f32.mrb[0].mxu0
    %v383 = vadd.f32 %v170, %v382
    %v384 = vpop.f32.mrb[0].mxu0
    %v385 = vadd.f32 %v174, %v384
    %386 = vmatprep.mubr.f32.mxu0 0.0
    %387 = vmatmul.mubr.f32.gmra.mrb[0].mxu0 %v90
    %v388 = vpop.f32.mrb[0].mxu0
    %v389 = vadd.f32 %v170, %v388
    %v390 = vpop.f32.mrb[0].mxu0
    %v391 = vadd.f32 %v174, %v390
    %392 = vmatprep.mubr.f32.mxu0 0.0
    %393 = vmatmul.mubr.f32.gmra.mrb[0].mxu0 %v91
    %v394 = vpop.f32.mrb[0].mxu0
    %v395 = vadd.f32 %v170, %v394
    %v396 = vpop.f32.mrb[0].mxu0
    %v397 = vadd.f32 %v174, %v396
    %398 = vmatprep.mubr.f32.mxu0 0.0
    %399 = vmatmul.mubr.f32.gmra.mrb[0].mxu0 %v92
    %v400 = vpop.f32.mrb[0].mxu0
    %v401 = vadd.f32 %v170, %v400
    %v402 = vpop.f32.mrb[0].mxu0
    %v403 = vadd.f32 %v174, %v402
    %404 = vdwg.mxu0
    %v405 = vld [vmem:[#allocation2] sm:$0xff]
    %v406 = vld [vmem:[#allocation3] sm:$0xff]
    %v407 = vld [vmem:[#allocation9] sm:$0xff]
    %v408 = vld [vmem:[#allocation9 + $0x8] sm:$0xff]
    %v409 = vld [vmem:[#allocation9 + $0x10] sm:$0xff]
    %v410 = vld [vmem:[#allocation9 + $0x18] sm:$0xff]
    %v411 = vld [vmem:[#allocation9 + $0x20] sm:$0xff]
    %v412 = vld [vmem:[#allocation9 + $0x28] sm:$0xff]
    %v413 = vld [vmem:[#allocation9 + $0x30] sm:$0xff]
    %v414 = vld [vmem:[#allocation9 + $0x38] sm:$0xff]
    %v415 = vld [vmem:[#allocation9 + $0x40] sm:$0xff]
    %v416 = vld [vmem:[#allocation9 + $0x48] sm:$0xff]
    %v417 = vld [vmem:[#allocation9 + $0x50] sm:$0xff]
    %v418 = vld [vmem:[#allocation9 + $0x58] sm:$0xff]
    %v419 = vld [vmem:[#allocation9 + $0x60] sm:$0xff]
    %v420 = vld [vmem:[#allocation9 + $0x68] sm:$0xff]
    %v421 = vld [vmem:[#allocation9 + $0x70] sm:$0xff]
    %v422 = vld [vmem:[#allocation9 + $0x78] sm:$0xff]
    %v423 = vld [vmem:[#allocation9 + $0x80] sm:$0xff]
    %v424 = vld [vmem:[#allocation9 + $0x88] sm:$0xff]
    %v425 = vld [vmem:[#allocation9 + $0x90] sm:$0xff]
    %v426 = vld [vmem:[#allocation9 + $0x98] sm:$0xff]
    %v427 = vld [vmem:[#allocation9 + $0xa0] sm:$0xff]
    %v428 = vld [vmem:[#allocation9 + $0xa8] sm:$0xff]
    %v429 = vld [vmem:[#allocation9 + $0xb0] sm:$0xff]
    %v430 = vld [vmem:[#allocation9 + $0xb8] sm:$0xff]
    %v431 = vld [vmem:[#allocation9 + $0xc0] sm:$0xff]
    %v432 = vld [vmem:[#allocation9 + $0xc8] sm:$0xff]
    %v433 = vld [vmem:[#allocation9 + $0xd0] sm:$0xff]
    %v434 = vld [vmem:[#allocation9 + $0xd8] sm:$0xff]
    %v435 = vld [vmem:[#allocation9 + $0xe0] sm:$0xff]
    %v436 = vld [vmem:[#allocation9 + $0xe8] sm:$0xff]
    %v437 = vld [vmem:[#allocation9 + $0xf0] sm:$0xff]
    %v438 = vld [vmem:[#allocation9 + $0xf8] sm:$0xff]
    %v439 = vld [vmem:[#allocation9 + $0x100] sm:$0xff]
    %v440 = vld [vmem:[#allocation9 + $0x108] sm:$0xff]
    %v441 = vld [vmem:[#allocation9 + $0x110] sm:$0xff]
    %v442 = vld [vmem:[#allocation9 + $0x118] sm:$0xff]
    %v443 = vld [vmem:[#allocation9 + $0x120] sm:$0xff]
    %v444 = vld [vmem:[#allocation9 + $0x128] sm:$0xff]
    %v445 = vld [vmem:[#allocation9 + $0x130] sm:$0xff]
    %v446 = vld [vmem:[#allocation9 + $0x138] sm:$0xff]
    %v447 = vld [vmem:[#allocation9 + $0x140] sm:$0xff]
    %v448 = vld [vmem:[#allocation9 + $0x148] sm:$0xff]
    %v449 = vld [vmem:[#allocation9 + $0x150] sm:$0xff]
    %v450 = vld [vmem:[#allocation9 + $0x158] sm:$0xff]
    %v451 = vld [vmem:[#allocation9 + $0x160] sm:$0xff]
    %v452 = vld [vmem:[#allocation9 + $0x168] sm:$0xff]
    %v453 = vld [vmem:[#allocation9 + $0x170] sm:$0xff]
    %v454 = vld [vmem:[#allocation9 + $0x178] sm:$0xff]
    %v455 = vld [vmem:[#allocation9 + $0x180] sm:$0xff]
    %v456 = vld [vmem:[#allocation9 + $0x188] sm:$0xff]
    %v457 = vld [vmem:[#allocation9 + $0x190] sm:$0xff]
    %v458 = vld [vmem:[#allocation9 + $0x198] sm:$0xff]
    %v459 = vld [vmem:[#allocation9 + $0x1a0] sm:$0xff]
    %v460 = vld [vmem:[#allocation9 + $0x1a8] sm:$0xff]
    %v461 = vld [vmem:[#allocation9 + $0x1b0] sm:$0xff]
    %v462 = vld [vmem:[#allocation9 + $0x1b8] sm:$0xff]
    %v463 = vld [vmem:[#allocation9 + $0x1c0] sm:$0xff]
    %v464 = vld [vmem:[#allocation9 + $0x1c8] sm:$0xff]
    %v465 = vld [vmem:[#allocation9 + $0x1d0] sm:$0xff]
    %v466 = vld [vmem:[#allocation9 + $0x1d8] sm:$0xff]
    %v467 = vld [vmem:[#allocation9 + $0x1e0] sm:$0xff]
    %v468 = vld [vmem:[#allocation9 + $0x1e8] sm:$0xff]
    %v469 = vld [vmem:[#allocation9 + $0x1f0] sm:$0xff]
    %v470 = vld [vmem:[#allocation9 + $0x1f8] sm:$0xff]
    %471 = vmatprep.subr.mxu0 %v408
    %472 = vmatpush1.msra.mxu0 %v407
    %473 = vmatprep.subr.mxu0 %v412
    %474 = vmatpush1.msra.mxu0 %v411
    %475 = vmatprep.subr.mxu0 %v416
    %476 = vmatpush1.msra.mxu0 %v415
    %477 = vmatprep.subr.mxu0 %v420
    %478 = vmatpush1.msra.mxu0 %v419
    %479 = vmatprep.subr.mxu0 %v424
    %480 = vmatpush1.msra.mxu0 %v423
    %481 = vmatprep.subr.mxu0 %v428
    %482 = vmatpush1.msra.mxu0 %v427
    %483 = vmatprep.subr.mxu0 %v432
    %484 = vmatpush1.msra.mxu0 %v431
    %485 = vmatprep.subr.mxu0 %v436
    %486 = vmatpush1.msra.mxu0 %v435
    %487 = vmatprep.subr.mxu0 %v440
    %488 = vmatpush1.msra.mxu0 %v439
    %489 = vmatprep.subr.mxu0 %v444
    %490 = vmatpush1.msra.mxu0 %v443
    %491 = vmatprep.subr.mxu0 %v448
    %492 = vmatpush1.msra.mxu0 %v447
    %493 = vmatprep.subr.mxu0 %v452
    %494 = vmatpush1.msra.mxu0 %v451
    %495 = vmatprep.subr.mxu0 %v456
    %496 = vmatpush1.msra.mxu0 %v455
    %497 = vmatprep.subr.mxu0 %v460
    %498 = vmatpush1.msra.mxu0 %v459
    %499 = vmatprep.subr.mxu0 %v464
    %500 = vmatpush1.msra.mxu0 %v463
    %501 = vmatprep.subr.mxu0 %v468
    %502 = vmatpush1.msra.mxu0 %v467
    %503 = vmatprep.subr.mxu0 0.0
    %504 = vmatpush1.msra.mxu0 0.0
    %505 = vmatprep.subr.mxu0 0.0
    %506 = vmatpush1.msra.mxu0 0.0
    %507 = vmatprep.subr.mxu0 0.0
    %508 = vmatpush1.msra.mxu0 0.0
    %509 = vmatprep.subr.mxu0 0.0
    %510 = vmatpush1.msra.mxu0 0.0
    %511 = vmatprep.subr.mxu0 0.0
    %512 = vmatpush1.msra.mxu0 0.0
    %513 = vmatprep.subr.mxu0 0.0
    %514 = vmatpush1.msra.mxu0 0.0
    %515 = vmatprep.subr.mxu0 0.0
    %516 = vmatpush1.msra.mxu0 0.0
    %517 = vmatprep.subr.mxu0 0.0
    %518 = vmatpush1.msra.mxu0 0.0
    %519 = vmatprep.subr.mxu0 0.0
    %520 = vmatpush1.msra.mxu0 0.0
    %521 = vmatprep.subr.mxu0 0.0
    %522 = vmatpush1.msra.mxu0 0.0
    %523 = vmatprep.subr.mxu0 0.0
    %524 = vmatpush1.msra.mxu0 0.0
    %525 = vmatprep.subr.mxu0 0.0
    %526 = vmatpush1.msra.mxu0 0.0
    %527 = vmatprep.subr.mxu0 0.0
    %528 = vmatpush1.msra.mxu0 0.0
    %529 = vmatprep.subr.mxu0 0.0
    %530 = vmatpush1.msra.mxu0 0.0
    %531 = vmatprep.subr.mxu0 0.0
    %532 = vmatpush1.msra.mxu0 0.0
    %533 = vmatprep.subr.mxu0 0.0
    %534 = vmatpush1.msra.mxu0 0.0
    %535 = vmatprep.mubr.f32.mxu0 0.0
    %536 = vmatmul.mubr.f32.gmra.mrb[0].mxu0 %v405
    %v537 = vpop.f32.mrb[0].mxu0
    %v538 = vadd.f32 0.0, %v537
    %v539 = vpop.f32.mrb[0].mxu0
    %v540 = vadd.f32 0.0, %v539
    %541 = vdwg.mxu0
    %542 = vmatprep.subr.mxu0 %v410
    %543 = vmatpush1.msra.mxu0 %v409
    %544 = vmatprep.subr.mxu0 %v414
    %545 = vmatpush1.msra.mxu0 %v413
    %546 = vmatprep.subr.mxu0 %v418
    %547 = vmatpush1.msra.mxu0 %v417
    %548 = vmatprep.subr.mxu0 %v422
    %549 = vmatpush1.msra.mxu0 %v421
    %550 = vmatprep.subr.mxu0 %v426
    %551 = vmatpush1.msra.mxu0 %v425
    %552 = vmatprep.subr.mxu0 %v430
    %553 = vmatpush1.msra.mxu0 %v429
    %554 = vmatprep.subr.mxu0 %v434
    %555 = vmatpush1.msra.mxu0 %v433
    %556 = vmatprep.subr.mxu0 %v438
    %557 = vmatpush1.msra.mxu0 %v437
    %558 = vmatprep.subr.mxu0 %v442
    %559 = vmatpush1.msra.mxu0 %v441
    %560 = vmatprep.subr.mxu0 %v446
    %561 = vmatpush1.msra.mxu0 %v445
    %562 = vmatprep.subr.mxu0 %v450
    %563 = vmatpush1.msra.mxu0 %v449
    %564 = vmatprep.subr.mxu0 %v454
    %565 = vmatpush1.msra.mxu0 %v453
    %566 = vmatprep.subr.mxu0 %v458
    %567 = vmatpush1.msra.mxu0 %v457
    %568 = vmatprep.subr.mxu0 %v462
    %569 = vmatpush1.msra.mxu0 %v461
    %570 = vmatprep.subr.mxu0 %v466
    %571 = vmatpush1.msra.mxu0 %v465
    %572 = vmatprep.subr.mxu0 %v470
    %573 = vmatpush1.msra.mxu0 %v469
    %574 = vmatprep.subr.mxu0 0.0
    %575 = vmatpush1.msra.mxu0 0.0
    %576 = vmatprep.subr.mxu0 0.0
    %577 = vmatpush1.msra.mxu0 0.0
    %578 = vmatprep.subr.mxu0 0.0
    %579 = vmatpush1.msra.mxu0 0.0
    %580 = vmatprep.subr.mxu0 0.0
    %581 = vmatpush1.msra.mxu0 0.0
    %582 = vmatprep.subr.mxu0 0.0
    %583 = vmatpush1.msra.mxu0 0.0
    %584 = vmatprep.subr.mxu0 0.0
    %585 = vmatpush1.msra.mxu0 0.0
    %586 = vmatprep.subr.mxu0 0.0
    %587 = vmatpush1.msra.mxu0 0.0
    %588 = vmatprep.subr.mxu0 0.0
    %589 = vmatpush1.msra.mxu0 0.0
    %590 = vmatprep.subr.mxu0 0.0
    %591 = vmatpush1.msra.mxu0 0.0
    %592 = vmatprep.subr.mxu0 0.0
    %593 = vmatpush1.msra.mxu0 0.0
    %594 = vmatprep.subr.mxu0 0.0
    %595 = vmatpush1.msra.mxu0 0.0
    %596 = vmatprep.subr.mxu0 0.0
    %597 = vmatpush1.msra.mxu0 0.0
    %598 = vmatprep.subr.mxu0 0.0
    %599 = vmatpush1.msra.mxu0 0.0
    %600 = vmatprep.subr.mxu0 0.0
    %601 = vmatpush1.msra.mxu0 0.0
    %602 = vmatprep.subr.mxu0 0.0
    %603 = vmatpush1.msra.mxu0 0.0
    %604 = vmatprep.subr.mxu0 0.0
    %605 = vmatpush1.msra.mxu0 0.0
    %606 = vmatprep.mubr.f32.mxu0 0.0
    %607 = vmatmul.mubr.f32.gmra.mrb[0].mxu0 %v405
    %v608 = vpop.f32.mrb[0].mxu0
    %v609 = vadd.f32 0.0, %v608
    %v610 = vpop.f32.mrb[0].mxu0
    %v611 = vadd.f32 0.0, %v610
    %612 = vdwg.mxu0
    %v617 = vrot.slane %v538, 1
    %v618 = vrot.slane %v540, 1
    %v619 = vrot.slane %v609, 1
    %v620 = vrot.slane %v611, 1
    %v621 = vrot.slane %v538, 2
    %v622 = vrot.slane %v540, 2
    %v623 = vrot.slane %v609, 2
    %v624 = vrot.slane %v611, 2
    %v625 = vrot.slane %v538, 3
    %v626 = vrot.slane %v540, 3
    %v627 = vrot.slane %v609, 3
    %v628 = vrot.slane %v611, 3
    %v629 = vrot.slane %v538, 4
    %v630 = vrot.slane %v540, 4
    %v631 = vrot.slane %v609, 4
    %v632 = vrot.slane %v611, 4
    %v633 = vrot.slane %v538, 5
    %v634 = vrot.slane %v540, 5
    %v635 = vrot.slane %v609, 5
    %v636 = vrot.slane %v611, 5
    %v637 = vrot.slane %v538, 6
    %v638 = vrot.slane %v540, 6
    %v639 = vrot.slane %v609, 6
    %v640 = vrot.slane %v611, 6
    %v641 = vrot.slane %v538, 7
    %v642 = vrot.slane %v540, 7
    %v643 = vrot.slane %v609, 7
    %v644 = vrot.slane %v611, 7
    %v677 = vadd.f32 %v246, %v538
    %v678 = vadd.f32 %v248, %v540
    %v679 = vadd.f32 %v359, %v609
    %v680 = vadd.f32 %v361, %v611
    %v681 = vadd.f32 %v252, %v617
    %v682 = vadd.f32 %v254, %v618
    %v683 = vadd.f32 %v365, %v619
    %v684 = vadd.f32 %v367, %v620
    %v685 = vadd.f32 %v258, %v621
    %v686 = vadd.f32 %v260, %v622
    %v687 = vadd.f32 %v371, %v623
    %v688 = vadd.f32 %v373, %v624
    %v689 = vadd.f32 %v264, %v625
    %v690 = vadd.f32 %v266, %v626
    %v691 = vadd.f32 %v377, %v627
    %v692 = vadd.f32 %v379, %v628
    %v693 = vadd.f32 %v270, %v629
    %v694 = vadd.f32 %v272, %v630
    %v695 = vadd.f32 %v383, %v631
    %v696 = vadd.f32 %v385, %v632
    %v697 = vadd.f32 %v276, %v633
    %v698 = vadd.f32 %v278, %v634
    %v699 = vadd.f32 %v389, %v635
    %v700 = vadd.f32 %v391, %v636
    %v701 = vadd.f32 %v282, %v637
    %v702 = vadd.f32 %v284, %v638
    %v703 = vadd.f32 %v395, %v639
    %v704 = vadd.f32 %v397, %v640
    %v705 = vadd.f32 %v288, %v641
    %v706 = vadd.f32 %v290, %v642
    %v707 = vadd.f32 %v401, %v643
    %v708 = vadd.f32 %v403, %v644
    %v709 = vxor.u32 %v677, 2147483648
    %v710 = vxor.u32 %v681, 2147483648
    %v711 = vxor.u32 %v685, 2147483648
    %v712 = vxor.u32 %v689, 2147483648
    %v713 = vxor.u32 %v693, 2147483648
    %v714 = vxor.u32 %v697, 2147483648
    %v715 = vxor.u32 %v701, 2147483648
    %v716 = vxor.u32 %v705, 2147483648
    %v717 = vmul.f32 %v709, 1.442695
    %v718 = vpow.pop %v717
    %v719 = vmul.f32 %v710, 1.442695
    %v720 = vpow.pop %v719
    %v721 = vmul.f32 %v711, 1.442695
    %v722 = vpow.pop %v721
    %v723 = vmul.f32 %v712, 1.442695
    %v724 = vpow.pop %v723
    %v725 = vmul.f32 %v713, 1.442695
    %v726 = vpow.pop %v725
    %v727 = vmul.f32 %v714, 1.442695
    %v728 = vpow.pop %v727
    %v729 = vmul.f32 %v715, 1.442695
    %v730 = vpow.pop %v729
    %v731 = vmul.f32 %v716, 1.442695
    %v732 = vpow.pop %v731
    %v733 = vadd.f32 %v718, 1.0
    %v734 = vadd.f32 %v720, 1.0
    %v735 = vadd.f32 %v722, 1.0
    %v736 = vadd.f32 %v724, 1.0
    %v737 = vadd.f32 %v726, 1.0
    %v738 = vadd.f32 %v728, 1.0
    %v739 = vadd.f32 %v730, 1.0
    %v740 = vadd.f32 %v732, 1.0
    %v741 = vrcp.pop %v733
    %v742 = vmul.f32 1.0, %v741
    %v743 = vrcp.pop %v734
    %v744 = vmul.f32 1.0, %v743
    %v745 = vrcp.pop %v735
    %v746 = vmul.f32 1.0, %v745
    %v747 = vrcp.pop %v736
    %v748 = vmul.f32 1.0, %v747
    %v749 = vrcp.pop %v737
    %v750 = vmul.f32 1.0, %v749
    %v751 = vrcp.pop %v738
    %v752 = vmul.f32 1.0, %v751
    %v753 = vrcp.pop %v739
    %v754 = vmul.f32 1.0, %v753
    %v755 = vrcp.pop %v740
    %v756 = vmul.f32 1.0, %v755
    %v757 = vxor.u32 %v678, 2147483648
    %v758 = vxor.u32 %v682, 2147483648
    %v759 = vxor.u32 %v686, 2147483648
    %v760 = vxor.u32 %v690, 2147483648
    %v761 = vxor.u32 %v694, 2147483648
    %v762 = vxor.u32 %v698, 2147483648
    %v763 = vxor.u32 %v702, 2147483648
    %v764 = vxor.u32 %v706, 2147483648
    %v765 = vmul.f32 %v757, 1.442695
    %v766 = vpow.pop %v765
    %v767 = vmul.f32 %v758, 1.442695
    %v768 = vpow.pop %v767
    %v769 = vmul.f32 %v759, 1.442695
    %v770 = vpow.pop %v769
    %v771 = vmul.f32 %v760, 1.442695
    %v772 = vpow.pop %v771
    %v773 = vmul.f32 %v761, 1.442695
    %v774 = vpow.pop %v773
    %v775 = vmul.f32 %v762, 1.442695
    %v776 = vpow.pop %v775
    %v777 = vmul.f32 %v763, 1.442695
    %v778 = vpow.pop %v777
    %v779 = vmul.f32 %v764, 1.442695
    %v780 = vpow.pop %v779
    %v781 = vadd.f32 %v766, 1.0
    %v782 = vadd.f32 %v768, 1.0
    %v783 = vadd.f32 %v770, 1.0
    %v784 = vadd.f32 %v772, 1.0
    %v785 = vadd.f32 %v774, 1.0
    %v786 = vadd.f32 %v776, 1.0
    %v787 = vadd.f32 %v778, 1.0
    %v788 = vadd.f32 %v780, 1.0
    %v789 = vrcp.pop %v781
    %v790 = vmul.f32 1.0, %v789
    %v791 = vrcp.pop %v782
    %v792 = vmul.f32 1.0, %v791
    %v793 = vrcp.pop %v783
    %v794 = vmul.f32 1.0, %v793
    %v795 = vrcp.pop %v784
    %v796 = vmul.f32 1.0, %v795
    %v797 = vrcp.pop %v785
    %v798 = vmul.f32 1.0, %v797
    %v799 = vrcp.pop %v786
    %v800 = vmul.f32 1.0, %v799
    %v801 = vrcp.pop %v787
    %v802 = vmul.f32 1.0, %v801
    %v803 = vrcp.pop %v788
    %v804 = vmul.f32 1.0, %v803
    %v805 = vtanh.pop %v679
    %v806 = vtanh.pop %v683
    %v807 = vtanh.pop %v687
    %v808 = vtanh.pop %v691
    %v809 = vtanh.pop %v695
    %v810 = vtanh.pop %v699
    %v811 = vtanh.pop %v703
    %v812 = vtanh.pop %v707
    %v813 = vxor.u32 %v680, 2147483648
    %v814 = vxor.u32 %v684, 2147483648
    %v815 = vxor.u32 %v688, 2147483648
    %v816 = vxor.u32 %v692, 2147483648
    %v817 = vxor.u32 %v696, 2147483648
    %v818 = vxor.u32 %v700, 2147483648
    %v819 = vxor.u32 %v704, 2147483648
    %v820 = vxor.u32 %v708, 2147483648
    %v821 = vmul.f32 %v813, 1.442695
    %v822 = vpow.pop %v821
    %v823 = vmul.f32 %v814, 1.442695
    %v824 = vpow.pop %v823
    %v825 = vmul.f32 %v815, 1.442695
    %v826 = vpow.pop %v825
    %v827 = vmul.f32 %v816, 1.442695
    %v828 = vpow.pop %v827
    %v829 = vmul.f32 %v817, 1.442695
    %v830 = vpow.pop %v829
    %v831 = vmul.f32 %v818, 1.442695
    %v832 = vpow.pop %v831
    %v833 = vmul.f32 %v819, 1.442695
    %v834 = vpow.pop %v833
    %v835 = vmul.f32 %v820, 1.442695
    %v836 = vpow.pop %v835
    %v837 = vadd.f32 %v822, 1.0
    %v838 = vadd.f32 %v824, 1.0
    %v839 = vadd.f32 %v826, 1.0
    %v840 = vadd.f32 %v828, 1.0
    %v841 = vadd.f32 %v830, 1.0
    %v842 = vadd.f32 %v832, 1.0
    %v843 = vadd.f32 %v834, 1.0
    %v844 = vadd.f32 %v836, 1.0
    %v845 = vrcp.pop %v837
    %v846 = vmul.f32 1.0, %v845
    %v847 = vrcp.pop %v838
    %v848 = vmul.f32 1.0, %v847
    %v849 = vrcp.pop %v839
    %v850 = vmul.f32 1.0, %v849
    %v851 = vrcp.pop %v840
    %v852 = vmul.f32 1.0, %v851
    %v853 = vrcp.pop %v841
    %v854 = vmul.f32 1.0, %v853
    %v855 = vrcp.pop %v842
    %v856 = vmul.f32 1.0, %v855
    %v857 = vrcp.pop %v843
    %v858 = vmul.f32 1.0, %v857
    %v859 = vrcp.pop %v844
    %v860 = vmul.f32 1.0, %v859
    %v862 = vrot.slane %v406, 1
    %v863 = vrot.slane %v406, 2
    %v864 = vrot.slane %v406, 3
    %v865 = vrot.slane %v406, 4
    %v866 = vrot.slane %v406, 5
    %v867 = vrot.slane %v406, 6
    %v868 = vrot.slane %v406, 7
    %v877 = vmul.f32 %v790, %v406
    %v878 = vmul.f32 %v792, %v862
    %v879 = vmul.f32 %v794, %v863
    %v880 = vmul.f32 %v796, %v864
    %v881 = vmul.f32 %v798, %v865
    %v882 = vmul.f32 %v800, %v866
    %v883 = vmul.f32 %v802, %v867
    %v884 = vmul.f32 %v804, %v868
    %v885 = vmul.f32 %v742, %v805
    %v886 = vmul.f32 %v744, %v806
    %v887 = vmul.f32 %v746, %v807
    %v888 = vmul.f32 %v748, %v808
    %v889 = vmul.f32 %v750, %v809
    %v890 = vmul.f32 %v752, %v810
    %v891 = vmul.f32 %v754, %v811
    %v892 = vmul.f32 %v756, %v812
    %v893 = vadd.f32 %v877, %v885
    %v894 = vadd.f32 %v878, %v886
    %v895 = vadd.f32 %v879, %v887
    %v896 = vadd.f32 %v880, %v888
    %v897 = vadd.f32 %v881, %v889
    %v898 = vadd.f32 %v882, %v890
    %v899 = vadd.f32 %v883, %v891
    %v900 = vadd.f32 %v884, %v892
    %v901 = vtanh.pop %v893
    %v902 = vtanh.pop %v894
    %v903 = vtanh.pop %v895
    %v904 = vtanh.pop %v896
    %v905 = vtanh.pop %v897
    %v906 = vtanh.pop %v898
    %v907 = vtanh.pop %v899
    %v908 = vtanh.pop %v900
    %v909 = vmul.f32 %v846, %v901
    %v910 = vmul.f32 %v848, %v902
    %v911 = vmul.f32 %v850, %v903
    %v912 = vmul.f32 %v852, %v904
    %v913 = vmul.f32 %v854, %v905
    %v914 = vmul.f32 %v856, %v906
    %v915 = vmul.f32 %v858, %v907
    %v916 = vmul.f32 %v860, %v908
    %v925 = vrot.slane %v910, 7
    %vm926 = vcmask 1041409
    %v927 = vsel %vm926, %v925, %v909
    %v928 = vrot.slane %v911, 6
    %vm929 = vcmask 1042434
    %v930 = vsel %vm929, %v928, %v927
    %v931 = vrot.slane %v912, 5
    %vm932 = vcmask 1043459
    %v933 = vsel %vm932, %v931, %v930
    %v934 = vrot.slane %v913, 4
    %vm935 = vcmask 1044484
    %v936 = vsel %vm935, %v934, %v933
    %v937 = vrot.slane %v914, 3
    %vm938 = vcmask 1045509
    %v939 = vsel %vm938, %v937, %v936
    %v940 = vrot.slane %v915, 2
    %vm941 = vcmask 1046534
    %v942 = vsel %vm941, %v940, %v939
    %v943 = vrot.slane %v916, 1
    %vm944 = vcmask 1047559
    %v945 = vsel %vm944, %v943, %v942
    %947 = vmatprep.subr.mxu0 %v408
    %948 = vmatpush1.msra.mxu0 %v407
    %949 = vmatprep.subr.mxu0 %v412
    %950 = vmatpush1.msra.mxu0 %v411
    %951 = vmatprep.subr.mxu0 %v416
    %952 = vmatpush1.msra.mxu0 %v415
    %953 = vmatprep.subr.mxu0 %v420
    %954 = vmatpush1.msra.mxu0 %v419
    %955 = vmatprep.subr.mxu0 %v424
    %956 = vmatpush1.msra.mxu0 %v423
    %957 = vmatprep.subr.mxu0 %v428
    %958 = vmatpush1.msra.mxu0 %v427
    %959 = vmatprep.subr.mxu0 %v432
    %960 = vmatpush1.msra.mxu0 %v431
    %961 = vmatprep.subr.mxu0 %v436
    %962 = vmatpush1.msra.mxu0 %v435
    %963 = vmatprep.subr.mxu0 %v440
    %964 = vmatpush1.msra.mxu0 %v439
    %965 = vmatprep.subr.mxu0 %v444
    %966 = vmatpush1.msra.mxu0 %v443
    %967 = vmatprep.subr.mxu0 %v448
    %968 = vmatpush1.msra.mxu0 %v447
    %969 = vmatprep.subr.mxu0 %v452
    %970 = vmatpush1.msra.mxu0 %v451
    %971 = vmatprep.subr.mxu0 %v456
    %972 = vmatpush1.msra.mxu0 %v455
    %973 = vmatprep.subr.mxu0 %v460
    %974 = vmatpush1.msra.mxu0 %v459
    %975 = vmatprep.subr.mxu0 %v464
    %976 = vmatpush1.msra.mxu0 %v463
    %977 = vmatprep.subr.mxu0 %v468
    %978 = vmatpush1.msra.mxu0 %v467
    %979 = vmatprep.subr.mxu0 0.0
    %980 = vmatpush1.msra.mxu0 0.0
    %981 = vmatprep.subr.mxu0 0.0
    %982 = vmatpush1.msra.mxu0 0.0
    %983 = vmatprep.subr.mxu0 0.0
    %984 = vmatpush1.msra.mxu0 0.0
    %985 = vmatprep.subr.mxu0 0.0
    %986 = vmatpush1.msra.mxu0 0.0
    %987 = vmatprep.subr.mxu0 0.0
    %988 = vmatpush1.msra.mxu0 0.0
    %989 = vmatprep.subr.mxu0 0.0
    %990 = vmatpush1.msra.mxu0 0.0
    %991 = vmatprep.subr.mxu0 0.0
    %992 = vmatpush1.msra.mxu0 0.0
    %993 = vmatprep.subr.mxu0 0.0
    %994 = vmatpush1.msra.mxu0 0.0
    %995 = vmatprep.subr.mxu0 0.0
    %996 = vmatpush1.msra.mxu0 0.0
    %997 = vmatprep.subr.mxu0 0.0
    %998 = vmatpush1.msra.mxu0 0.0
    %999 = vmatprep.subr.mxu0 0.0
    %1000 = vmatpush1.msra.mxu0 0.0
    %1001 = vmatprep.subr.mxu0 0.0
    %1002 = vmatpush1.msra.mxu0 0.0
    %1003 = vmatprep.subr.mxu0 0.0
    %1004 = vmatpush1.msra.mxu0 0.0
    %1005 = vmatprep.subr.mxu0 0.0
    %1006 = vmatpush1.msra.mxu0 0.0
    %1007 = vmatprep.subr.mxu0 0.0
    %1008 = vmatpush1.msra.mxu0 0.0
    %1009 = vmatprep.subr.mxu0 0.0
    %1010 = vmatpush1.msra.mxu0 0.0
    %1011 = vmatprep.mubr.f32.mxu0 0.0
    %1012 = vmatmul.mubr.f32.gmra.mrb[0].mxu0 %v945
    %v1013 = vpop.f32.mrb[0].mxu0
    %v1014 = vadd.f32 0.0, %v1013
    %v1015 = vpop.f32.mrb[0].mxu0
    %v1016 = vadd.f32 0.0, %v1015
    %1017 = vdwg.mxu0
    %1018 = vmatprep.subr.mxu0 %v410
    %1019 = vmatpush1.msra.mxu0 %v409
    %1020 = vmatprep.subr.mxu0 %v414
    %1021 = vmatpush1.msra.mxu0 %v413
    %1022 = vmatprep.subr.mxu0 %v418
    %1023 = vmatpush1.msra.mxu0 %v417
    %1024 = vmatprep.subr.mxu0 %v422
    %1025 = vmatpush1.msra.mxu0 %v421
    %1026 = vmatprep.subr.mxu0 %v426
    %1027 = vmatpush1.msra.mxu0 %v425
    %1028 = vmatprep.subr.mxu0 %v430
    %1029 = vmatpush1.msra.mxu0 %v429
    %1030 = vmatprep.subr.mxu0 %v434
    %1031 = vmatpush1.msra.mxu0 %v433
    %1032 = vmatprep.subr.mxu0 %v438
    %1033 = vmatpush1.msra.mxu0 %v437
    %1034 = vmatprep.subr.mxu0 %v442
    %1035 = vmatpush1.msra.mxu0 %v441
    %1036 = vmatprep.subr.mxu0 %v446
    %1037 = vmatpush1.msra.mxu0 %v445
    %1038 = vmatprep.subr.mxu0 %v450
    %1039 = vmatpush1.msra.mxu0 %v449
    %1040 = vmatprep.subr.mxu0 %v454
    %1041 = vmatpush1.msra.mxu0 %v453
    %1042 = vmatprep.subr.mxu0 %v458
    %1043 = vmatpush1.msra.mxu0 %v457
    %1044 = vmatprep.subr.mxu0 %v462
    %1045 = vmatpush1.msra.mxu0 %v461
    %1046 = vmatprep.subr.mxu0 %v466
    %1047 = vmatpush1.msra.mxu0 %v465
    %1048 = vmatprep.subr.mxu0 %v470
    %1049 = vmatpush1.msra.mxu0 %v469
    %1050 = vmatprep.subr.mxu0 0.0
    %1051 = vmatpush1.msra.mxu0 0.0
    %1052 = vmatprep.subr.mxu0 0.0
    %1053 = vmatpush1.msra.mxu0 0.0
    %1054 = vmatprep.subr.mxu0 0.0
    %1055 = vmatpush1.msra.mxu0 0.0
    %1056 = vmatprep.subr.mxu0 0.0
    %1057 = vmatpush1.msra.mxu0 0.0
    %1058 = vmatprep.subr.mxu0 0.0
    %1059 = vmatpush1.msra.mxu0 0.0
    %1060 = vmatprep.subr.mxu0 0.0
    %1061 = vmatpush1.msra.mxu0 0.0
    %1062 = vmatprep.subr.mxu0 0.0
    %1063 = vmatpush1.msra.mxu0 0.0
    %1064 = vmatprep.subr.mxu0 0.0
    %1065 = vmatpush1.msra.mxu0 0.0
    %1066 = vmatprep.subr.mxu0 0.0
    %1067 = vmatpush1.msra.mxu0 0.0
    %1068 = vmatprep.subr.mxu0 0.0
    %1069 = vmatpush1.msra.mxu0 0.0
    %1070 = vmatprep.subr.mxu0 0.0
    %1071 = vmatpush1.msra.mxu0 0.0
    %1072 = vmatprep.subr.mxu0 0.0
    %1073 = vmatpush1.msra.mxu0 0.0
    %1074 = vmatprep.subr.mxu0 0.0
    %1075 = vmatpush1.msra.mxu0 0.0
    %1076 = vmatprep.subr.mxu0 0.0
    %1077 = vmatpush1.msra.mxu0 0.0
    %1078 = vmatprep.subr.mxu0 0.0
    %1079 = vmatpush1.msra.mxu0 0.0
    %1080 = vmatprep.subr.mxu0 0.0
    %1081 = vmatpush1.msra.mxu0 0.0
    %1082 = vmatprep.mubr.f32.mxu0 0.0
    %1083 = vmatmul.mubr.f32.gmra.mrb[0].mxu0 %v945
    %v1084 = vpop.f32.mrb[0].mxu0
    %v1085 = vadd.f32 0.0, %v1084
    %v1086 = vpop.f32.mrb[0].mxu0
    %v1087 = vadd.f32 0.0, %v1086
    %1088 = vdwg.mxu0
    %v1093 = vrot.slane %v1014, 7
    %v1094 = vrot.slane %v1016, 7
    %v1095 = vrot.slane %v1085, 7
    %v1096 = vrot.slane %v1087, 7
    %v1097 = vrot.slane %v1014, 1
    %v1098 = vrot.slane %v1016, 1
    %v1099 = vrot.slane %v1085, 1
    %v1100 = vrot.slane %v1087, 1
    %v1101 = vrot.slane %v1014, 2
    %v1102 = vrot.slane %v1016, 2
    %v1103 = vrot.slane %v1085, 2
    %v1104 = vrot.slane %v1087, 2
    %v1105 = vrot.slane %v1014, 3
    %v1106 = vrot.slane %v1016, 3
    %v1107 = vrot.slane %v1085, 3
    %v1108 = vrot.slane %v1087, 3
    %v1109 = vrot.slane %v1014, 4
    %v1110 = vrot.slane %v1016, 4
    %v1111 = vrot.slane %v1085, 4
    %v1112 = vrot.slane %v1087, 4
    %v1113 = vrot.slane %v1014, 5
    %v1114 = vrot.slane %v1016, 5
    %v1115 = vrot.slane %v1085, 5
    %v1116 = vrot.slane %v1087, 5
    %v1117 = vrot.slane %v1014, 6
    %v1118 = vrot.slane %v1016, 6
    %v1119 = vrot.slane %v1085, 6
    %v1120 = vrot.slane %v1087, 6
    %v1153 = vadd.f32 %v246, %v1093
    %v1154 = vadd.f32 %v248, %v1094
    %v1155 = vadd.f32 %v359, %v1095
    %v1156 = vadd.f32 %v361, %v1096
    %v1157 = vadd.f32 %v252, %v1014
    %v1158 = vadd.f32 %v254, %v1016
    %v1159 = vadd.f32 %v365, %v1085
    %v1160 = vadd.f32 %v367, %v1087
    %v1161 = vadd.f32 %v258, %v1097
    %v1162 = vadd.f32 %v260, %v1098
    %v1163 = vadd.f32 %v371, %v1099
    %v1164 = vadd.f32 %v373, %v1100
    %v1165 = vadd.f32 %v264, %v1101
    %v1166 = vadd.f32 %v266, %v1102
    %v1167 = vadd.f32 %v377, %v1103
    %v1168 = vadd.f32 %v379, %v1104
    %v1169 = vadd.f32 %v270, %v1105
    %v1170 = vadd.f32 %v272, %v1106
    %v1171 = vadd.f32 %v383, %v1107
    %v1172 = vadd.f32 %v385, %v1108
    %v1173 = vadd.f32 %v276, %v1109
    %v1174 = vadd.f32 %v278, %v1110
    %v1175 = vadd.f32 %v389, %v1111
    %v1176 = vadd.f32 %v391, %v1112
    %v1177 = vadd.f32 %v282, %v1113
    %v1178 = vadd.f32 %v284, %v1114
    %v1179 = vadd.f32 %v395, %v1115
    %v1180 = vadd.f32 %v397, %v1116
    %v1181 = vadd.f32 %v288, %v1117
    %v1182 = vadd.f32 %v290, %v1118
    %v1183 = vadd.f32 %v401, %v1119
    %v1184 = vadd.f32 %v403, %v1120
    %v1185 = vxor.u32 %v1153, 2147483648
    %v1186 = vxor.u32 %v1157, 2147483648
    %v1187 = vxor.u32 %v1161, 2147483648
    %v1188 = vxor.u32 %v1165, 2147483648
    %v1189 = vxor.u32 %v1169, 2147483648
    %v1190 = vxor.u32 %v1173, 2147483648
    %v1191 = vxor.u32 %v1177, 2147483648
    %v1192 = vxor.u32 %v1181, 2147483648
    %v1193 = vmul.f32 %v1185, 1.442695
    %v1194 = vpow.pop %v1193
    %v1195 = vmul.f32 %v1186, 1.442695
    %v1196 = vpow.pop %v1195
    %v1197 = vmul.f32 %v1187, 1.442695
    %v1198 = vpow.pop %v1197
    %v1199 = vmul.f32 %v1188, 1.442695
    %v1200 = vpow.pop %v1199
    %v1201 = vmul.f32 %v1189, 1.442695
    %v1202 = vpow.pop %v1201
    %v1203 = vmul.f32 %v1190, 1.442695
    %v1204 = vpow.pop %v1203
    %v1205 = vmul.f32 %v1191, 1.442695
    %v1206 = vpow.pop %v1205
    %v1207 = vmul.f32 %v1192, 1.442695
    %v1208 = vpow.pop %v1207
    %v1209 = vadd.f32 %v1194, 1.0
    %v1210 = vadd.f32 %v1196, 1.0
    %v1211 = vadd.f32 %v1198, 1.0
    %v1212 = vadd.f32 %v1200, 1.0
    %v1213 = vadd.f32 %v1202, 1.0
    %v1214 = vadd.f32 %v1204, 1.0
    %v1215 = vadd.f32 %v1206, 1.0
    %v1216 = vadd.f32 %v1208, 1.0
    %v1217 = vrcp.pop %v1209
    %v1218 = vmul.f32 1.0, %v1217
    %v1219 = vrcp.pop %v1210
    %v1220 = vmul.f32 1.0, %v1219
    %v1221 = vrcp.pop %v1211
    %v1222 = vmul.f32 1.0, %v1221
    %v1223 = vrcp.pop %v1212
    %v1224 = vmul.f32 1.0, %v1223
    %v1225 = vrcp.pop %v1213
    %v1226 = vmul.f32 1.0, %v1225
    %v1227 = vrcp.pop %v1214
    %v1228 = vmul.f32 1.0, %v1227
    %v1229 = vrcp.pop %v1215
    %v1230 = vmul.f32 1.0, %v1229
    %v1231 = vrcp.pop %v1216
    %v1232 = vmul.f32 1.0, %v1231
    %v1233 = vxor.u32 %v1154, 2147483648
    %v1234 = vxor.u32 %v1158, 2147483648
    %v1235 = vxor.u32 %v1162, 2147483648
    %v1236 = vxor.u32 %v1166, 2147483648
    %v1237 = vxor.u32 %v1170, 2147483648
    %v1238 = vxor.u32 %v1174, 2147483648
    %v1239 = vxor.u32 %v1178, 2147483648
    %v1240 = vxor.u32 %v1182, 2147483648
    %v1241 = vmul.f32 %v1233, 1.442695
    %v1242 = vpow.pop %v1241
    %v1243 = vmul.f32 %v1234, 1.442695
    %v1244 = vpow.pop %v1243
    %v1245 = vmul.f32 %v1235, 1.442695
    %v1246 = vpow.pop %v1245
    %v1247 = vmul.f32 %v1236, 1.442695
    %v1248 = vpow.pop %v1247
    %v1249 = vmul.f32 %v1237, 1.442695
    %v1250 = vpow.pop %v1249
    %v1251 = vmul.f32 %v1238, 1.442695
    %v1252 = vpow.pop %v1251
    %v1253 = vmul.f32 %v1239, 1.442695
    %v1254 = vpow.pop %v1253
    %v1255 = vmul.f32 %v1240, 1.442695
    %v1256 = vpow.pop %v1255
    %v1257 = vadd.f32 %v1242, 1.0
    %v1258 = vadd.f32 %v1244, 1.0
    %v1259 = vadd.f32 %v1246, 1.0
    %v1260 = vadd.f32 %v1248, 1.0
    %v1261 = vadd.f32 %v1250, 1.0
    %v1262 = vadd.f32 %v1252, 1.0
    %v1263 = vadd.f32 %v1254, 1.0
    %v1264 = vadd.f32 %v1256, 1.0
    %v1265 = vrcp.pop %v1257
    %v1266 = vmul.f32 1.0, %v1265
    %v1267 = vrcp.pop %v1258
    %v1268 = vmul.f32 1.0, %v1267
    %v1269 = vrcp.pop %v1259
    %v1270 = vmul.f32 1.0, %v1269
    %v1271 = vrcp.pop %v1260
    %v1272 = vmul.f32 1.0, %v1271
    %v1273 = vrcp.pop %v1261
    %v1274 = vmul.f32 1.0, %v1273
    %v1275 = vrcp.pop %v1262
    %v1276 = vmul.f32 1.0, %v1275
    %v1277 = vrcp.pop %v1263
    %v1278 = vmul.f32 1.0, %v1277
    %v1279 = vrcp.pop %v1264
    %v1280 = vmul.f32 1.0, %v1279
    %v1281 = vtanh.pop %v1155
    %v1282 = vtanh.pop %v1159
    %v1283 = vtanh.pop %v1163
    %v1284 = vtanh.pop %v1167
    %v1285 = vtanh.pop %v1171
    %v1286 = vtanh.pop %v1175
    %v1287 = vtanh.pop %v1179
    %v1288 = vtanh.pop %v1183
    %v1289 = vxor.u32 %v1156, 2147483648
    %v1290 = vxor.u32 %v1160, 2147483648
    %v1291 = vxor.u32 %v1164, 2147483648
    %v1292 = vxor.u32 %v1168, 2147483648
    %v1293 = vxor.u32 %v1172, 2147483648
    %v1294 = vxor.u32 %v1176, 2147483648
    %v1295 = vxor.u32 %v1180, 2147483648
    %v1296 = vxor.u32 %v1184, 2147483648
    %v1297 = vmul.f32 %v1289, 1.442695
    %v1298 = vpow.pop %v1297
    %v1299 = vmul.f32 %v1290, 1.442695
    %v1300 = vpow.pop %v1299
    %v1301 = vmul.f32 %v1291, 1.442695
    %v1302 = vpow.pop %v1301
    %v1303 = vmul.f32 %v1292, 1.442695
    %v1304 = vpow.pop %v1303
    %v1305 = vmul.f32 %v1293, 1.442695
    %v1306 = vpow.pop %v1305
    %v1307 = vmul.f32 %v1294, 1.442695
    %v1308 = vpow.pop %v1307
    %v1309 = vmul.f32 %v1295, 1.442695
    %v1310 = vpow.pop %v1309
    %v1311 = vmul.f32 %v1296, 1.442695
    %v1312 = vpow.pop %v1311
    %v1313 = vadd.f32 %v1298, 1.0
    %v1314 = vadd.f32 %v1300, 1.0
    %v1315 = vadd.f32 %v1302, 1.0
    %v1316 = vadd.f32 %v1304, 1.0
    %v1317 = vadd.f32 %v1306, 1.0
    %v1318 = vadd.f32 %v1308, 1.0
    %v1319 = vadd.f32 %v1310, 1.0
    %v1320 = vadd.f32 %v1312, 1.0
    %v1321 = vrcp.pop %v1313
    %v1322 = vmul.f32 1.0, %v1321
    %v1323 = vrcp.pop %v1314
    %v1324 = vmul.f32 1.0, %v1323
    %v1325 = vrcp.pop %v1315
    %v1326 = vmul.f32 1.0, %v1325
    %v1327 = vrcp.pop %v1316
    %v1328 = vmul.f32 1.0, %v1327
    %v1329 = vrcp.pop %v1317
    %v1330 = vmul.f32 1.0, %v1329
    %v1331 = vrcp.pop %v1318
    %v1332 = vmul.f32 1.0, %v1331
    %v1333 = vrcp.pop %v1319
    %v1334 = vmul.f32 1.0, %v1333
    %v1335 = vrcp.pop %v1320
    %v1336 = vmul.f32 1.0, %v1335
    %v1345 = vrot.slane %v893, 7
    %v1346 = vrot.slane %v894, 7
    %v1347 = vrot.slane %v895, 7
    %v1348 = vrot.slane %v896, 7
    %v1349 = vrot.slane %v897, 7
    %v1350 = vrot.slane %v898, 7
    %v1351 = vrot.slane %v899, 7
    %v1352 = vrot.slane %v900, 7
    %v1361 = vmul.f32 %v1266, %v1345
    %v1362 = vmul.f32 %v1268, %v1346
    %v1363 = vmul.f32 %v1270, %v1347
    %v1364 = vmul.f32 %v1272, %v1348
    %v1365 = vmul.f32 %v1274, %v1349
    %v1366 = vmul.f32 %v1276, %v1350
    %v1367 = vmul.f32 %v1278, %v1351
    %v1368 = vmul.f32 %v1280, %v1352
    %v1369 = vmul.f32 %v1218, %v1281
    %v1370 = vmul.f32 %v1220, %v1282
    %v1371 = vmul.f32 %v1222, %v1283
    %v1372 = vmul.f32 %v1224, %v1284
    %v1373 = vmul.f32 %v1226, %v1285
    %v1374 = vmul.f32 %v1228, %v1286
    %v1375 = vmul.f32 %v1230, %v1287
    %v1376 = vmul.f32 %v1232, %v1288
    %v1377 = vadd.f32 %v1361, %v1369
    %v1378 = vadd.f32 %v1362, %v1370
    %v1379 = vadd.f32 %v1363, %v1371
    %v1380 = vadd.f32 %v1364, %v1372
    %v1381 = vadd.f32 %v1365, %v1373
    %v1382 = vadd.f32 %v1366, %v1374
    %v1383 = vadd.f32 %v1367, %v1375
    %v1384 = vadd.f32 %v1368, %v1376
    %v1385 = vtanh.pop %v1377
    %v1386 = vtanh.pop %v1378
    %v1387 = vtanh.pop %v1379
    %v1388 = vtanh.pop %v1380
    %v1389 = vtanh.pop %v1381
    %v1390 = vtanh.pop %v1382
    %v1391 = vtanh.pop %v1383
    %v1392 = vtanh.pop %v1384
    %v1393 = vmul.f32 %v1322, %v1385
    %v1394 = vmul.f32 %v1324, %v1386
    %v1395 = vmul.f32 %v1326, %v1387
    %v1396 = vmul.f32 %v1328, %v1388
    %v1397 = vmul.f32 %v1330, %v1389
    %v1398 = vmul.f32 %v1332, %v1390
    %v1399 = vmul.f32 %v1334, %v1391
    %v1400 = vmul.f32 %v1336, %v1392
    %v1409 = vrot.slane %v1393, 1
    %v1410 = vsel %vm926, %v1394, %v1409
    %v1411 = vrot.slane %v1395, 7
    %v1412 = vsel %vm929, %v1411, %v1410
    %v1413 = vrot.slane %v1396, 6
    %v1414 = vsel %vm932, %v1413, %v1412
    %v1415 = vrot.slane %v1397, 5
    %v1416 = vsel %vm935, %v1415, %v1414
    %v1417 = vrot.slane %v1398, 4
    %v1418 = vsel %vm938, %v1417, %v1416
    %v1419 = vrot.slane %v1399, 3
    %v1420 = vsel %vm941, %v1419, %v1418
    %v1421 = vrot.slane %v1400, 2
    %v1422 = vsel %vm944, %v1421, %v1420
    %1424 = vmatprep.subr.mxu0 %v408
    %1425 = vmatpush1.msra.mxu0 %v407
    %1426 = vmatprep.subr.mxu0 %v412
    %1427 = vmatpush1.msra.mxu0 %v411
    %1428 = vmatprep.subr.mxu0 %v416
    %1429 = vmatpush1.msra.mxu0 %v415
    %1430 = vmatprep.subr.mxu0 %v420
    %1431 = vmatpush1.msra.mxu0 %v419
    %1432 = vmatprep.subr.mxu0 %v424
    %1433 = vmatpush1.msra.mxu0 %v423
    %1434 = vmatprep.subr.mxu0 %v428
    %1435 = vmatpush1.msra.mxu0 %v427
    %1436 = vmatprep.subr.mxu0 %v432
    %1437 = vmatpush1.msra.mxu0 %v431
    %1438 = vmatprep.subr.mxu0 %v436
    %1439 = vmatpush1.msra.mxu0 %v435
    %1440 = vmatprep.subr.mxu0 %v440
    %1441 = vmatpush1.msra.mxu0 %v439
    %1442 = vmatprep.subr.mxu0 %v444
    %1443 = vmatpush1.msra.mxu0 %v443
    %1444 = vmatprep.subr.mxu0 %v448
    %1445 = vmatpush1.msra.mxu0 %v447
    %1446 = vmatprep.subr.mxu0 %v452
    %1447 = vmatpush1.msra.mxu0 %v451
    %1448 = vmatprep.subr.mxu0 %v456
    %1449 = vmatpush1.msra.mxu0 %v455
    %1450 = vmatprep.subr.mxu0 %v460
    %1451 = vmatpush1.msra.mxu0 %v459
    %1452 = vmatprep.subr.mxu0 %v464
    %1453 = vmatpush1.msra.mxu0 %v463
    %1454 = vmatprep.subr.mxu0 %v468
    %1455 = vmatpush1.msra.mxu0 %v467
    %1456 = vmatprep.subr.mxu0 0.0
    %1457 = vmatpush1.msra.mxu0 0.0
    %1458 = vmatprep.subr.mxu0 0.0
    %1459 = vmatpush1.msra.mxu0 0.0
    %1460 = vmatprep.subr.mxu0 0.0
    %1461 = vmatpush1.msra.mxu0 0.0
    %1462 = vmatprep.subr.mxu0 0.0
    %1463 = vmatpush1.msra.mxu0 0.0
    %1464 = vmatprep.subr.mxu0 0.0
    %1465 = vmatpush1.msra.mxu0 0.0
    %1466 = vmatprep.subr.mxu0 0.0
    %1467 = vmatpush1.msra.mxu0 0.0
    %1468 = vmatprep.subr.mxu0 0.0
    %1469 = vmatpush1.msra.mxu0 0.0
    %1470 = vmatprep.subr.mxu0 0.0
    %1471 = vmatpush1.msra.mxu0 0.0
    %1472 = vmatprep.subr.mxu0 0.0
    %1473 = vmatpush1.msra.mxu0 0.0
    %1474 = vmatprep.subr.mxu0 0.0
    %1475 = vmatpush1.msra.mxu0 0.0
    %1476 = vmatprep.subr.mxu0 0.0
    %1477 = vmatpush1.msra.mxu0 0.0
    %1478 = vmatprep.subr.mxu0 0.0
    %1479 = vmatpush1.msra.mxu0 0.0
    %1480 = vmatprep.subr.mxu0 0.0
    %1481 = vmatpush1.msra.mxu0 0.0
    %1482 = vmatprep.subr.mxu0 0.0
    %1483 = vmatpush1.msra.mxu0 0.0
    %1484 = vmatprep.subr.mxu0 0.0
    %1485 = vmatpush1.msra.mxu0 0.0
    %1486 = vmatprep.subr.mxu0 0.0
    %1487 = vmatpush1.msra.mxu0 0.0
    %1488 = vmatprep.mubr.f32.mxu0 0.0
    %1489 = vmatmul.mubr.f32.gmra.mrb[0].mxu0 %v1422
    %v1490 = vpop.f32.mrb[0].mxu0
    %v1491 = vadd.f32 0.0, %v1490
    %v1492 = vpop.f32.mrb[0].mxu0
    %v1493 = vadd.f32 0.0, %v1492
    %1494 = vdwg.mxu0
    %1495 = vmatprep.subr.mxu0 %v410
    %1496 = vmatpush1.msra.mxu0 %v409
    %1497 = vmatprep.subr.mxu0 %v414
    %1498 = vmatpush1.msra.mxu0 %v413
    %1499 = vmatprep.subr.mxu0 %v418
    %1500 = vmatpush1.msra.mxu0 %v417
    %1501 = vmatprep.subr.mxu0 %v422
    %1502 = vmatpush1.msra.mxu0 %v421
    %1503 = vmatprep.subr.mxu0 %v426
    %1504 = vmatpush1.msra.mxu0 %v425
    %1505 = vmatprep.subr.mxu0 %v430
    %1506 = vmatpush1.msra.mxu0 %v429
    %1507 = vmatprep.subr.mxu0 %v434
    %1508 = vmatpush1.msra.mxu0 %v433
    %1509 = vmatprep.subr.mxu0 %v438
    %1510 = vmatpush1.msra.mxu0 %v437
    %1511 = vmatprep.subr.mxu0 %v442
    %1512 = vmatpush1.msra.mxu0 %v441
    %1513 = vmatprep.subr.mxu0 %v446
    %1514 = vmatpush1.msra.mxu0 %v445
    %1515 = vmatprep.subr.mxu0 %v450
    %1516 = vmatpush1.msra.mxu0 %v449
    %1517 = vmatprep.subr.mxu0 %v454
    %1518 = vmatpush1.msra.mxu0 %v453
    %1519 = vmatprep.subr.mxu0 %v458
    %1520 = vmatpush1.msra.mxu0 %v457
    %1521 = vmatprep.subr.mxu0 %v462
    %1522 = vmatpush1.msra.mxu0 %v461
    %1523 = vmatprep.subr.mxu0 %v466
    %1524 = vmatpush1.msra.mxu0 %v465
    %1525 = vmatprep.subr.mxu0 %v470
    %1526 = vmatpush1.msra.mxu0 %v469
    %1527 = vmatprep.subr.mxu0 0.0
    %1528 = vmatpush1.msra.mxu0 0.0
    %1529 = vmatprep.subr.mxu0 0.0
    %1530 = vmatpush1.msra.mxu0 0.0
    %1531 = vmatprep.subr.mxu0 0.0
    %1532 = vmatpush1.msra.mxu0 0.0
    %1533 = vmatprep.subr.mxu0 0.0
    %1534 = vmatpush1.msra.mxu0 0.0
    %1535 = vmatprep.subr.mxu0 0.0
    %1536 = vmatpush1.msra.mxu0 0.0
    %1537 = vmatprep.subr.mxu0 0.0
    %1538 = vmatpush1.msra.mxu0 0.0
    %1539 = vmatprep.subr.mxu0 0.0
    %1540 = vmatpush1.msra.mxu0 0.0
    %1541 = vmatprep.subr.mxu0 0.0
    %1542 = vmatpush1.msra.mxu0 0.0
    %1543 = vmatprep.subr.mxu0 0.0
    %1544 = vmatpush1.msra.mxu0 0.0
    %1545 = vmatprep.subr.mxu0 0.0
    %1546 = vmatpush1.msra.mxu0 0.0
    %1547 = vmatprep.subr.mxu0 0.0
    %1548 = vmatpush1.msra.mxu0 0.0
    %1549 = vmatprep.subr.mxu0 0.0
    %1550 = vmatpush1.msra.mxu0 0.0
    %1551 = vmatprep.subr.mxu0 0.0
    %1552 = vmatpush1.msra.mxu0 0.0
    %1553 = vmatprep.subr.mxu0 0.0
    %1554 = vmatpush1.msra.mxu0 0.0
    %1555 = vmatprep.subr.mxu0 0.0
    %1556 = vmatpush1.msra.mxu0 0.0
    %1557 = vmatprep.subr.mxu0 0.0
    %1558 = vmatpush1.msra.mxu0 0.0
    %1559 = vmatprep.mubr.f32.mxu0 0.0
    %1560 = vmatmul.mubr.f32.gmra.mrb[0].mxu0 %v1422
    %v1561 = vpop.f32.mrb[0].mxu0
    %v1562 = vadd.f32 0.0, %v1561
    %v1563 = vpop.f32.mrb[0].mxu0
    %v1564 = vadd.f32 0.0, %v1563
    %1565 = vdwg.mxu0
    %v1570 = vrot.slane %v1491, 6
    %v1571 = vrot.slane %v1493, 6
    %v1572 = vrot.slane %v1562, 6
    %v1573 = vrot.slane %v1564, 6
    %v1574 = vrot.slane %v1491, 7
    %v1575 = vrot.slane %v1493, 7
    %v1576 = vrot.slane %v1562, 7
    %v1577 = vrot.slane %v1564, 7
    %v1578 = vrot.slane %v1491, 1
    %v1579 = vrot.slane %v1493, 1
    %v1580 = vrot.slane %v1562, 1
    %v1581 = vrot.slane %v1564, 1
    %v1582 = vrot.slane %v1491, 2
    %v1583 = vrot.slane %v1493, 2
    %v1584 = vrot.slane %v1562, 2
    %v1585 = vrot.slane %v1564, 2
    %v1586 = vrot.slane %v1491, 3
    %v1587 = vrot.slane %v1493, 3
    %v1588 = vrot.slane %v1562, 3
    %v1589 = vrot.slane %v1564, 3
    %v1590 = vrot.slane %v1491, 4
    %v1591 = vrot.slane %v1493, 4
    %v1592 = vrot.slane %v1562, 4
    %v1593 = vrot.slane %v1564, 4
    %v1594 = vrot.slane %v1491, 5
    %v1595 = vrot.slane %v1493, 5
    %v1596 = vrot.slane %v1562, 5
    %v1597 = vrot.slane %v1564, 5
    %v1630 = vadd.f32 %v246, %v1570
    %v1631 = vadd.f32 %v248, %v1571
    %v1632 = vadd.f32 %v359, %v1572
    %v1633 = vadd.f32 %v361, %v1573
    %v1634 = vadd.f32 %v252, %v1574
    %v1635 = vadd.f32 %v254, %v1575
    %v1636 = vadd.f32 %v365, %v1576
    %v1637 = vadd.f32 %v367, %v1577
    %v1638 = vadd.f32 %v258, %v1491
    %v1639 = vadd.f32 %v260, %v1493
    %v1640 = vadd.f32 %v371, %v1562
    %v1641 = vadd.f32 %v373, %v1564
    %v1642 = vadd.f32 %v264, %v1578
    %v1643 = vadd.f32 %v266, %v1579
    %v1644 = vadd.f32 %v377, %v1580
    %v1645 = vadd.f32 %v379, %v1581
    %v1646 = vadd.f32 %v270, %v1582
    %v1647 = vadd.f32 %v272, %v1583
    %v1648 = vadd.f32 %v383, %v1584
    %v1649 = vadd.f32 %v385, %v1585
    %v1650 = vadd.f32 %v276, %v1586
    %v1651 = vadd.f32 %v278, %v1587
    %v1652 = vadd.f32 %v389, %v1588
    %v1653 = vadd.f32 %v391, %v1589
    %v1654 = vadd.f32 %v282, %v1590
    %v1655 = vadd.f32 %v284, %v1591
    %v1656 = vadd.f32 %v395, %v1592
    %v1657 = vadd.f32 %v397, %v1593
    %v1658 = vadd.f32 %v288, %v1594
    %v1659 = vadd.f32 %v290, %v1595
    %v1660 = vadd.f32 %v401, %v1596
    %v1661 = vadd.f32 %v403, %v1597
    %v1662 = vxor.u32 %v1630, 2147483648
    %v1663 = vxor.u32 %v1634, 2147483648
    %v1664 = vxor.u32 %v1638, 2147483648
    %v1665 = vxor.u32 %v1642, 2147483648
    %v1666 = vxor.u32 %v1646, 2147483648
    %v1667 = vxor.u32 %v1650, 2147483648
    %v1668 = vxor.u32 %v1654, 2147483648
    %v1669 = vxor.u32 %v1658, 2147483648
    %v1670 = vmul.f32 %v1662, 1.442695
    %v1671 = vpow.pop %v1670
    %v1672 = vmul.f32 %v1663, 1.442695
    %v1673 = vpow.pop %v1672
    %v1674 = vmul.f32 %v1664, 1.442695
    %v1675 = vpow.pop %v1674
    %v1676 = vmul.f32 %v1665, 1.442695
    %v1677 = vpow.pop %v1676
    %v1678 = vmul.f32 %v1666, 1.442695
    %v1679 = vpow.pop %v1678
    %v1680 = vmul.f32 %v1667, 1.442695
    %v1681 = vpow.pop %v1680
    %v1682 = vmul.f32 %v1668, 1.442695
    %v1683 = vpow.pop %v1682
    %v1684 = vmul.f32 %v1669, 1.442695
    %v1685 = vpow.pop %v1684
    %v1686 = vadd.f32 %v1671, 1.0
    %v1687 = vadd.f32 %v1673, 1.0
    %v1688 = vadd.f32 %v1675, 1.0
    %v1689 = vadd.f32 %v1677, 1.0
    %v1690 = vadd.f32 %v1679, 1.0
    %v1691 = vadd.f32 %v1681, 1.0
    %v1692 = vadd.f32 %v1683, 1.0
    %v1693 = vadd.f32 %v1685, 1.0
    %v1694 = vrcp.pop %v1686
    %v1695 = vmul.f32 1.0, %v1694
    %v1696 = vrcp.pop %v1687
    %v1697 = vmul.f32 1.0, %v1696
    %v1698 = vrcp.pop %v1688
    %v1699 = vmul.f32 1.0, %v1698
    %v1700 = vrcp.pop %v1689
    %v1701 = vmul.f32 1.0, %v1700
    %v1702 = vrcp.pop %v1690
    %v1703 = vmul.f32 1.0, %v1702
    %v1704 = vrcp.pop %v1691
    %v1705 = vmul.f32 1.0, %v1704
    %v1706 = vrcp.pop %v1692
    %v1707 = vmul.f32 1.0, %v1706
    %v1708 = vrcp.pop %v1693
    %v1709 = vmul.f32 1.0, %v1708
    %v1710 = vxor.u32 %v1631, 2147483648
    %v1711 = vxor.u32 %v1635, 2147483648
    %v1712 = vxor.u32 %v1639, 2147483648
    %v1713 = vxor.u32 %v1643, 2147483648
    %v1714 = vxor.u32 %v1647, 2147483648
    %v1715 = vxor.u32 %v1651, 2147483648
    %v1716 = vxor.u32 %v1655, 2147483648
    %v1717 = vxor.u32 %v1659, 2147483648
    %v1718 = vmul.f32 %v1710, 1.442695
    %v1719 = vpow.pop %v1718
    %v1720 = vmul.f32 %v1711, 1.442695
    %v1721 = vpow.pop %v1720
    %v1722 = vmul.f32 %v1712, 1.442695
    %v1723 = vpow.pop %v1722
    %v1724 = vmul.f32 %v1713, 1.442695
    %v1725 = vpow.pop %v1724
    %v1726 = vmul.f32 %v1714, 1.442695
    %v1727 = vpow.pop %v1726
    %v1728 = vmul.f32 %v1715, 1.442695
    %v1729 = vpow.pop %v1728
    %v1730 = vmul.f32 %v1716, 1.442695
    %v1731 = vpow.pop %v1730
    %v1732 = vmul.f32 %v1717, 1.442695
    %v1733 = vpow.pop %v1732
    %v1734 = vadd.f32 %v1719, 1.0
    %v1735 = vadd.f32 %v1721, 1.0
    %v1736 = vadd.f32 %v1723, 1.0
    %v1737 = vadd.f32 %v1725, 1.0
    %v1738 = vadd.f32 %v1727, 1.0
    %v1739 = vadd.f32 %v1729, 1.0
    %v1740 = vadd.f32 %v1731, 1.0
    %v1741 = vadd.f32 %v1733, 1.0
    %v1742 = vrcp.pop %v1734
    %v1743 = vmul.f32 1.0, %v1742
    %v1744 = vrcp.pop %v1735
    %v1745 = vmul.f32 1.0, %v1744
    %v1746 = vrcp.pop %v1736
    %v1747 = vmul.f32 1.0, %v1746
    %v1748 = vrcp.pop %v1737
    %v1749 = vmul.f32 1.0, %v1748
    %v1750 = vrcp.pop %v1738
    %v1751 = vmul.f32 1.0, %v1750
    %v1752 = vrcp.pop %v1739
    %v1753 = vmul.f32 1.0, %v1752
    %v1754 = vrcp.pop %v1740
    %v1755 = vmul.f32 1.0, %v1754
    %v1756 = vrcp.pop %v1741
    %v1757 = vmul.f32 1.0, %v1756
    %v1758 = vtanh.pop %v1632
    %v1759 = vtanh.pop %v1636
    %v1760 = vtanh.pop %v1640
    %v1761 = vtanh.pop %v1644
    %v1762 = vtanh.pop %v1648
    %v1763 = vtanh.pop %v1652
    %v1764 = vtanh.pop %v1656
    %v1765 = vtanh.pop %v1660
    %v1766 = vxor.u32 %v1633, 2147483648
    %v1767 = vxor.u32 %v1637, 2147483648
    %v1768 = vxor.u32 %v1641, 2147483648
    %v1769 = vxor.u32 %v1645, 2147483648
    %v1770 = vxor.u32 %v1649, 2147483648
    %v1771 = vxor.u32 %v1653, 2147483648
    %v1772 = vxor.u32 %v1657, 2147483648
    %v1773 = vxor.u32 %v1661, 2147483648
    %v1774 = vmul.f32 %v1766, 1.442695
    %v1775 = vpow.pop %v1774
    %v1776 = vmul.f32 %v1767, 1.442695
    %v1777 = vpow.pop %v1776
    %v1778 = vmul.f32 %v1768, 1.442695
    %v1779 = vpow.pop %v1778
    %v1780 = vmul.f32 %v1769, 1.442695
    %v1781 = vpow.pop %v1780
    %v1782 = vmul.f32 %v1770, 1.442695
    %v1783 = vpow.pop %v1782
    %v1784 = vmul.f32 %v1771, 1.442695
    %v1785 = vpow.pop %v1784
    %v1786 = vmul.f32 %v1772, 1.442695
    %v1787 = vpow.pop %v1786
    %v1788 = vmul.f32 %v1773, 1.442695
    %v1789 = vpow.pop %v1788
    %v1790 = vadd.f32 %v1775, 1.0
    %v1791 = vadd.f32 %v1777, 1.0
    %v1792 = vadd.f32 %v1779, 1.0
    %v1793 = vadd.f32 %v1781, 1.0
    %v1794 = vadd.f32 %v1783, 1.0
    %v1795 = vadd.f32 %v1785, 1.0
    %v1796 = vadd.f32 %v1787, 1.0
    %v1797 = vadd.f32 %v1789, 1.0
    %v1798 = vrcp.pop %v1790
    %v1799 = vmul.f32 1.0, %v1798
    %v1800 = vrcp.pop %v1791
    %v1801 = vmul.f32 1.0, %v1800
    %v1802 = vrcp.pop %v1792
    %v1803 = vmul.f32 1.0, %v1802
    %v1804 = vrcp.pop %v1793
    %v1805 = vmul.f32 1.0, %v1804
    %v1806 = vrcp.pop %v1794
    %v1807 = vmul.f32 1.0, %v1806
    %v1808 = vrcp.pop %v1795
    %v1809 = vmul.f32 1.0, %v1808
    %v1810 = vrcp.pop %v1796
    %v1811 = vmul.f32 1.0, %v1810
    %v1812 = vrcp.pop %v1797
    %v1813 = vmul.f32 1.0, %v1812
    %v1822 = vrot.slane %v1377, 7
    %v1823 = vrot.slane %v1378, 7
    %v1824 = vrot.slane %v1379, 7
    %v1825 = vrot.slane %v1380, 7
    %v1826 = vrot.slane %v1381, 7
    %v1827 = vrot.slane %v1382, 7
    %v1828 = vrot.slane %v1383, 7
    %v1829 = vrot.slane %v1384, 7
    %v1838 = vmul.f32 %v1743, %v1822
    %v1839 = vmul.f32 %v1745, %v1823
    %v1840 = vmul.f32 %v1747, %v1824
    %v1841 = vmul.f32 %v1749, %v1825
    %v1842 = vmul.f32 %v1751, %v1826
    %v1843 = vmul.f32 %v1753, %v1827
    %v1844 = vmul.f32 %v1755, %v1828
    %v1845 = vmul.f32 %v1757, %v1829
    %v1846 = vmul.f32 %v1695, %v1758
    %v1847 = vmul.f32 %v1697, %v1759
    %v1848 = vmul.f32 %v1699, %v1760
    %v1849 = vmul.f32 %v1701, %v1761
    %v1850 = vmul.f32 %v1703, %v1762
    %v1851 = vmul.f32 %v1705, %v1763
    %v1852 = vmul.f32 %v1707, %v1764
    %v1853 = vmul.f32 %v1709, %v1765
    %v1854 = vadd.f32 %v1838, %v1846
    %v1855 = vadd.f32 %v1839, %v1847
    %v1856 = vadd.f32 %v1840, %v1848
    %v1857 = vadd.f32 %v1841, %v1849
    %v1858 = vadd.f32 %v1842, %v1850
    %v1859 = vadd.f32 %v1843, %v1851
    %v1860 = vadd.f32 %v1844, %v1852
    %v1861 = vadd.f32 %v1845, %v1853
    %v1862 = vtanh.pop %v1854
    %v1863 = vtanh.pop %v1855
    %v1864 = vtanh.pop %v1856
    %v1865 = vtanh.pop %v1857
    %v1866 = vtanh.pop %v1858
    %v1867 = vtanh.pop %v1859
    %v1868 = vtanh.pop %v1860
    %v1869 = vtanh.pop %v1861
    %v1870 = vmul.f32 %v1799, %v1862
    %v1871 = vmul.f32 %v1801, %v1863
    %v1872 = vmul.f32 %v1803, %v1864
    %v1873 = vmul.f32 %v1805, %v1865
    %v1874 = vmul.f32 %v1807, %v1866
    %v1875 = vmul.f32 %v1809, %v1867
    %v1876 = vmul.f32 %v1811, %v1868
    %v1877 = vmul.f32 %v1813, %v1869
    %v1886 = vrot.slane %v1870, 2
    %v1887 = vrot.slane %v1871, 1
    %v1888 = vsel %vm926, %v1887, %v1886
    %v1889 = vsel %vm929, %v1872, %v1888
    %v1890 = vrot.slane %v1873, 7
    %v1891 = vsel %vm932, %v1890, %v1889
    %v1892 = vrot.slane %v1874, 6
    %v1893 = vsel %vm935, %v1892, %v1891
    %v1894 = vrot.slane %v1875, 5
    %v1895 = vsel %vm938, %v1894, %v1893
    %v1896 = vrot.slane %v1876, 4
    %v1897 = vsel %vm941, %v1896, %v1895
    %v1898 = vrot.slane %v1877, 3
    %v1899 = vsel %vm944, %v1898, %v1897
    %1901 = vmatprep.subr.mxu0 %v408
    %1902 = vmatpush1.msra.mxu0 %v407
    %1903 = vmatprep.subr.mxu0 %v412
    %1904 = vmatpush1.msra.mxu0 %v411
    %1905 = vmatprep.subr.mxu0 %v416
    %1906 = vmatpush1.msra.mxu0 %v415
    %1907 = vmatprep.subr.mxu0 %v420
    %1908 = vmatpush1.msra.mxu0 %v419
    %1909 = vmatprep.subr.mxu0 %v424
    %1910 = vmatpush1.msra.mxu0 %v423
    %1911 = vmatprep.subr.mxu0 %v428
    %1912 = vmatpush1.msra.mxu0 %v427
    %1913 = vmatprep.subr.mxu0 %v432
    %1914 = vmatpush1.msra.mxu0 %v431
    %1915 = vmatprep.subr.mxu0 %v436
    %1916 = vmatpush1.msra.mxu0 %v435
    %1917 = vmatprep.subr.mxu0 %v440
    %1918 = vmatpush1.msra.mxu0 %v439
    %1919 = vmatprep.subr.mxu0 %v444
    %1920 = vmatpush1.msra.mxu0 %v443
    %1921 = vmatprep.subr.mxu0 %v448
    %1922 = vmatpush1.msra.mxu0 %v447
    %1923 = vmatprep.subr.mxu0 %v452
    %1924 = vmatpush1.msra.mxu0 %v451
    %1925 = vmatprep.subr.mxu0 %v456
    %1926 = vmatpush1.msra.mxu0 %v455
    %1927 = vmatprep.subr.mxu0 %v460
    %1928 = vmatpush1.msra.mxu0 %v459
    %1929 = vmatprep.subr.mxu0 %v464
    %1930 = vmatpush1.msra.mxu0 %v463
    %1931 = vmatprep.subr.mxu0 %v468
    %1932 = vmatpush1.msra.mxu0 %v467
    %1933 = vmatprep.subr.mxu0 0.0
    %1934 = vmatpush1.msra.mxu0 0.0
    %1935 = vmatprep.subr.mxu0 0.0
    %1936 = vmatpush1.msra.mxu0 0.0
    %1937 = vmatprep.subr.mxu0 0.0
    %1938 = vmatpush1.msra.mxu0 0.0
    %1939 = vmatprep.subr.mxu0 0.0
    %1940 = vmatpush1.msra.mxu0 0.0
    %1941 = vmatprep.subr.mxu0 0.0
    %1942 = vmatpush1.msra.mxu0 0.0
    %1943 = vmatprep.subr.mxu0 0.0
    %1944 = vmatpush1.msra.mxu0 0.0
    %1945 = vmatprep.subr.mxu0 0.0
    %1946 = vmatpush1.msra.mxu0 0.0
    %1947 = vmatprep.subr.mxu0 0.0
    %1948 = vmatpush1.msra.mxu0 0.0
    %1949 = vmatprep.subr.mxu0 0.0
    %1950 = vmatpush1.msra.mxu0 0.0
    %1951 = vmatprep.subr.mxu0 0.0
    %1952 = vmatpush1.msra.mxu0 0.0
    %1953 = vmatprep.subr.mxu0 0.0
    %1954 = vmatpush1.msra.mxu0 0.0
    %1955 = vmatprep.subr.mxu0 0.0
    %1956 = vmatpush1.msra.mxu0 0.0
    %1957 = vmatprep.subr.mxu0 0.0
    %1958 = vmatpush1.msra.mxu0 0.0
    %1959 = vmatprep.subr.mxu0 0.0
    %1960 = vmatpush1.msra.mxu0 0.0
    %1961 = vmatprep.subr.mxu0 0.0
    %1962 = vmatpush1.msra.mxu0 0.0
    %1963 = vmatprep.subr.mxu0 0.0
    %1964 = vmatpush1.msra.mxu0 0.0
    %1965 = vmatprep.mubr.f32.mxu0 0.0
    %1966 = vmatmul.mubr.f32.gmra.mrb[0].mxu0 %v1899
    %v1967 = vpop.f32.mrb[0].mxu0
    %v1968 = vadd.f32 0.0, %v1967
    %v1969 = vpop.f32.mrb[0].mxu0
    %v1970 = vadd.f32 0.0, %v1969
    %1971 = vdwg.mxu0
    %1972 = vmatprep.subr.mxu0 %v410
    %1973 = vmatpush1.msra.mxu0 %v409
    %1974 = vmatprep.subr.mxu0 %v414
    %1975 = vmatpush1.msra.mxu0 %v413
    %1976 = vmatprep.subr.mxu0 %v418
    %1977 = vmatpush1.msra.mxu0 %v417
    %1978 = vmatprep.subr.mxu0 %v422
    %1979 = vmatpush1.msra.mxu0 %v421
    %1980 = vmatprep.subr.mxu0 %v426
    %1981 = vmatpush1.msra.mxu0 %v425
    %1982 = vmatprep.subr.mxu0 %v430
    %1983 = vmatpush1.msra.mxu0 %v429
    %1984 = vmatprep.subr.mxu0 %v434
    %1985 = vmatpush1.msra.mxu0 %v433
    %1986 = vmatprep.subr.mxu0 %v438
    %1987 = vmatpush1.msra.mxu0 %v437
    %1988 = vmatprep.subr.mxu0 %v442
    %1989 = vmatpush1.msra.mxu0 %v441
    %1990 = vmatprep.subr.mxu0 %v446
    %1991 = vmatpush1.msra.mxu0 %v445
    %1992 = vmatprep.subr.mxu0 %v450
    %1993 = vmatpush1.msra.mxu0 %v449
    %1994 = vmatprep.subr.mxu0 %v454
    %1995 = vmatpush1.msra.mxu0 %v453
    %1996 = vmatprep.subr.mxu0 %v458
    %1997 = vmatpush1.msra.mxu0 %v457
    %1998 = vmatprep.subr.mxu0 %v462
    %1999 = vmatpush1.msra.mxu0 %v461
    %2000 = vmatprep.subr.mxu0 %v466
    %2001 = vmatpush1.msra.mxu0 %v465
    %2002 = vmatprep.subr.mxu0 %v470
    %2003 = vmatpush1.msra.mxu0 %v469
    %2004 = vmatprep.subr.mxu0 0.0
    %2005 = vmatpush1.msra.mxu0 0.0
    %2006 = vmatprep.subr.mxu0 0.0
    %2007 = vmatpush1.msra.mxu0 0.0
    %2008 = vmatprep.subr.mxu0 0.0
    %2009 = vmatpush1.msra.mxu0 0.0
    %2010 = vmatprep.subr.mxu0 0.0
    %2011 = vmatpush1.msra.mxu0 0.0
    %2012 = vmatprep.subr.mxu0 0.0
    %2013 = vmatpush1.msra.mxu0 0.0
    %2014 = vmatprep.subr.mxu0 0.0
    %2015 = vmatpush1.msra.mxu0 0.0
    %2016 = vmatprep.subr.mxu0 0.0
    %2017 = vmatpush1.msra.mxu0 0.0
    %2018 = vmatprep.subr.mxu0 0.0
    %2019 = vmatpush1.msra.mxu0 0.0
    %2020 = vmatprep.subr.mxu0 0.0
    %2021 = vmatpush1.msra.mxu0 0.0
    %2022 = vmatprep.subr.mxu0 0.0
    %2023 = vmatpush1.msra.mxu0 0.0
    %2024 = vmatprep.subr.mxu0 0.0
    %2025 = vmatpush1.msra.mxu0 0.0
    %2026 = vmatprep.subr.mxu0 0.0
    %2027 = vmatpush1.msra.mxu0 0.0
    %2028 = vmatprep.subr.mxu0 0.0
    %2029 = vmatpush1.msra.mxu0 0.0
    %2030 = vmatprep.subr.mxu0 0.0
    %2031 = vmatpush1.msra.mxu0 0.0
    %2032 = vmatprep.subr.mxu0 0.0
    %2033 = vmatpush1.msra.mxu0 0.0
    %2034 = vmatprep.subr.mxu0 0.0
    %2035 = vmatpush1.msra.mxu0 0.0
    %2036 = vmatprep.mubr.f32.mxu0 0.0
    %2037 = vmatmul.mubr.f32.gmra.mrb[0].mxu0 %v1899
    %v2038 = vpop.f32.mrb[0].mxu0
    %v2039 = vadd.f32 0.0, %v2038
    %v2040 = vpop.f32.mrb[0].mxu0
    %v2041 = vadd.f32 0.0, %v2040
    %2042 = vdwg.mxu0
    %v2047 = vrot.slane %v1968, 5
    %v2048 = vrot.slane %v1970, 5
    %v2049 = vrot.slane %v2039, 5
    %v2050 = vrot.slane %v2041, 5
    %v2051 = vrot.slane %v1968, 6
    %v2052 = vrot.slane %v1970, 6
    %v2053 = vrot.slane %v2039, 6
    %v2054 = vrot.slane %v2041, 6
    %v2055 = vrot.slane %v1968, 7
    %v2056 = vrot.slane %v1970, 7
    %v2057 = vrot.slane %v2039, 7
    %v2058 = vrot.slane %v2041, 7
    %v2059 = vrot.slane %v1968, 1
    %v2060 = vrot.slane %v1970, 1
    %v2061 = vrot.slane %v2039, 1
    %v2062 = vrot.slane %v2041, 1
    %v2063 = vrot.slane %v1968, 2
    %v2064 = vrot.slane %v1970, 2
    %v2065 = vrot.slane %v2039, 2
    %v2066 = vrot.slane %v2041, 2
    %v2067 = vrot.slane %v1968, 3
    %v2068 = vrot.slane %v1970, 3
    %v2069 = vrot.slane %v2039, 3
    %v2070 = vrot.slane %v2041, 3
    %v2071 = vrot.slane %v1968, 4
    %v2072 = vrot.slane %v1970, 4
    %v2073 = vrot.slane %v2039, 4
    %v2074 = vrot.slane %v2041, 4
    %v2107 = vadd.f32 %v246, %v2047
    %v2108 = vadd.f32 %v248, %v2048
    %v2109 = vadd.f32 %v359, %v2049
    %v2110 = vadd.f32 %v361, %v2050
    %v2111 = vadd.f32 %v252, %v2051
    %v2112 = vadd.f32 %v254, %v2052
    %v2113 = vadd.f32 %v365, %v2053
    %v2114 = vadd.f32 %v367, %v2054
    %v2115 = vadd.f32 %v258, %v2055
    %v2116 = vadd.f32 %v260, %v2056
    %v2117 = vadd.f32 %v371, %v2057
    %v2118 = vadd.f32 %v373, %v2058
    %v2119 = vadd.f32 %v264, %v1968
    %v2120 = vadd.f32 %v266, %v1970
    %v2121 = vadd.f32 %v377, %v2039
    %v2122 = vadd.f32 %v379, %v2041
    %v2123 = vadd.f32 %v270, %v2059
    %v2124 = vadd.f32 %v272, %v2060
    %v2125 = vadd.f32 %v383, %v2061
    %v2126 = vadd.f32 %v385, %v2062
    %v2127 = vadd.f32 %v276, %v2063
    %v2128 = vadd.f32 %v278, %v2064
    %v2129 = vadd.f32 %v389, %v2065
    %v2130 = vadd.f32 %v391, %v2066
    %v2131 = vadd.f32 %v282, %v2067
    %v2132 = vadd.f32 %v284, %v2068
    %v2133 = vadd.f32 %v395, %v2069
    %v2134 = vadd.f32 %v397, %v2070
    %v2135 = vadd.f32 %v288, %v2071
    %v2136 = vadd.f32 %v290, %v2072
    %v2137 = vadd.f32 %v401, %v2073
    %v2138 = vadd.f32 %v403, %v2074
    %v2139 = vxor.u32 %v2107, 2147483648
    %v2140 = vxor.u32 %v2111, 2147483648
    %v2141 = vxor.u32 %v2115, 2147483648
    %v2142 = vxor.u32 %v2119, 2147483648
    %v2143 = vxor.u32 %v2123, 2147483648
    %v2144 = vxor.u32 %v2127, 2147483648
    %v2145 = vxor.u32 %v2131, 2147483648
    %v2146 = vxor.u32 %v2135, 2147483648
    %v2147 = vmul.f32 %v2139, 1.442695
    %v2148 = vpow.pop %v2147
    %v2149 = vmul.f32 %v2140, 1.442695
    %v2150 = vpow.pop %v2149
    %v2151 = vmul.f32 %v2141, 1.442695
    %v2152 = vpow.pop %v2151
    %v2153 = vmul.f32 %v2142, 1.442695
    %v2154 = vpow.pop %v2153
    %v2155 = vmul.f32 %v2143, 1.442695
    %v2156 = vpow.pop %v2155
    %v2157 = vmul.f32 %v2144, 1.442695
    %v2158 = vpow.pop %v2157
    %v2159 = vmul.f32 %v2145, 1.442695
    %v2160 = vpow.pop %v2159
    %v2161 = vmul.f32 %v2146, 1.442695
    %v2162 = vpow.pop %v2161
    %v2163 = vadd.f32 %v2148, 1.0
    %v2164 = vadd.f32 %v2150, 1.0
    %v2165 = vadd.f32 %v2152, 1.0
    %v2166 = vadd.f32 %v2154, 1.0
    %v2167 = vadd.f32 %v2156, 1.0
    %v2168 = vadd.f32 %v2158, 1.0
    %v2169 = vadd.f32 %v2160, 1.0
    %v2170 = vadd.f32 %v2162, 1.0
    %v2171 = vrcp.pop %v2163
    %v2172 = vmul.f32 1.0, %v2171
    %v2173 = vrcp.pop %v2164
    %v2174 = vmul.f32 1.0, %v2173
    %v2175 = vrcp.pop %v2165
    %v2176 = vmul.f32 1.0, %v2175
    %v2177 = vrcp.pop %v2166
    %v2178 = vmul.f32 1.0, %v2177
    %v2179 = vrcp.pop %v2167
    %v2180 = vmul.f32 1.0, %v2179
    %v2181 = vrcp.pop %v2168
    %v2182 = vmul.f32 1.0, %v2181
    %v2183 = vrcp.pop %v2169
    %v2184 = vmul.f32 1.0, %v2183
    %v2185 = vrcp.pop %v2170
    %v2186 = vmul.f32 1.0, %v2185
    %v2187 = vxor.u32 %v2108, 2147483648
    %v2188 = vxor.u32 %v2112, 2147483648
    %v2189 = vxor.u32 %v2116, 2147483648
    %v2190 = vxor.u32 %v2120, 2147483648
    %v2191 = vxor.u32 %v2124, 2147483648
    %v2192 = vxor.u32 %v2128, 2147483648
    %v2193 = vxor.u32 %v2132, 2147483648
    %v2194 = vxor.u32 %v2136, 2147483648
    %v2195 = vmul.f32 %v2187, 1.442695
    %v2196 = vpow.pop %v2195
    %v2197 = vmul.f32 %v2188, 1.442695
    %v2198 = vpow.pop %v2197
    %v2199 = vmul.f32 %v2189, 1.442695
    %v2200 = vpow.pop %v2199
    %v2201 = vmul.f32 %v2190, 1.442695
    %v2202 = vpow.pop %v2201
    %v2203 = vmul.f32 %v2191, 1.442695
    %v2204 = vpow.pop %v2203
    %v2205 = vmul.f32 %v2192, 1.442695
    %v2206 = vpow.pop %v2205
    %v2207 = vmul.f32 %v2193, 1.442695
    %v2208 = vpow.pop %v2207
    %v2209 = vmul.f32 %v2194, 1.442695
    %v2210 = vpow.pop %v2209
    %v2211 = vadd.f32 %v2196, 1.0
    %v2212 = vadd.f32 %v2198, 1.0
    %v2213 = vadd.f32 %v2200, 1.0
    %v2214 = vadd.f32 %v2202, 1.0
    %v2215 = vadd.f32 %v2204, 1.0
    %v2216 = vadd.f32 %v2206, 1.0
    %v2217 = vadd.f32 %v2208, 1.0
    %v2218 = vadd.f32 %v2210, 1.0
    %v2219 = vrcp.pop %v2211
    %v2220 = vmul.f32 1.0, %v2219
    %v2221 = vrcp.pop %v2212
    %v2222 = vmul.f32 1.0, %v2221
    %v2223 = vrcp.pop %v2213
    %v2224 = vmul.f32 1.0, %v2223
    %v2225 = vrcp.pop %v2214
    %v2226 = vmul.f32 1.0, %v2225
    %v2227 = vrcp.pop %v2215
    %v2228 = vmul.f32 1.0, %v2227
    %v2229 = vrcp.pop %v2216
    %v2230 = vmul.f32 1.0, %v2229
    %v2231 = vrcp.pop %v2217
    %v2232 = vmul.f32 1.0, %v2231
    %v2233 = vrcp.pop %v2218
    %v2234 = vmul.f32 1.0, %v2233
    %v2235 = vtanh.pop %v2109
    %v2236 = vtanh.pop %v2113
    %v2237 = vtanh.pop %v2117
    %v2238 = vtanh.pop %v2121
    %v2239 = vtanh.pop %v2125
    %v2240 = vtanh.pop %v2129
    %v2241 = vtanh.pop %v2133
    %v2242 = vtanh.pop %v2137
    %v2243 = vxor.u32 %v2110, 2147483648
    %v2244 = vxor.u32 %v2114, 2147483648
    %v2245 = vxor.u32 %v2118, 2147483648
    %v2246 = vxor.u32 %v2122, 2147483648
    %v2247 = vxor.u32 %v2126, 2147483648
    %v2248 = vxor.u32 %v2130, 2147483648
    %v2249 = vxor.u32 %v2134, 2147483648
    %v2250 = vxor.u32 %v2138, 2147483648
    %v2251 = vmul.f32 %v2243, 1.442695
    %v2252 = vpow.pop %v2251
    %v2253 = vmul.f32 %v2244, 1.442695
    %v2254 = vpow.pop %v2253
    %v2255 = vmul.f32 %v2245, 1.442695
    %v2256 = vpow.pop %v2255
    %v2257 = vmul.f32 %v2246, 1.442695
    %v2258 = vpow.pop %v2257
    %v2259 = vmul.f32 %v2247, 1.442695
    %v2260 = vpow.pop %v2259
    %v2261 = vmul.f32 %v2248, 1.442695
    %v2262 = vpow.pop %v2261
    %v2263 = vmul.f32 %v2249, 1.442695
    %v2264 = vpow.pop %v2263
    %v2265 = vmul.f32 %v2250, 1.442695
    %v2266 = vpow.pop %v2265
    %v2267 = vadd.f32 %v2252, 1.0
    %v2268 = vadd.f32 %v2254, 1.0
    %v2269 = vadd.f32 %v2256, 1.0
    %v2270 = vadd.f32 %v2258, 1.0
    %v2271 = vadd.f32 %v2260, 1.0
    %v2272 = vadd.f32 %v2262, 1.0
    %v2273 = vadd.f32 %v2264, 1.0
    %v2274 = vadd.f32 %v2266, 1.0
    %v2275 = vrcp.pop %v2267
    %v2276 = vmul.f32 1.0, %v2275
    %v2277 = vrcp.pop %v2268
    %v2278 = vmul.f32 1.0, %v2277
    %v2279 = vrcp.pop %v2269
    %v2280 = vmul.f32 1.0, %v2279
    %v2281 = vrcp.pop %v2270
    %v2282 = vmul.f32 1.0, %v2281
    %v2283 = vrcp.pop %v2271
    %v2284 = vmul.f32 1.0, %v2283
    %v2285 = vrcp.pop %v2272
    %v2286 = vmul.f32 1.0, %v2285
    %v2287 = vrcp.pop %v2273
    %v2288 = vmul.f32 1.0, %v2287
    %v2289 = vrcp.pop %v2274
    %v2290 = vmul.f32 1.0, %v2289
    %v2299 = vrot.slane %v1854, 7
    %v2300 = vrot.slane %v1855, 7
    %v2301 = vrot.slane %v1856, 7
    %v2302 = vrot.slane %v1857, 7
    %v2303 = vrot.slane %v1858, 7
    %v2304 = vrot.slane %v1859, 7
    %v2305 = vrot.slane %v1860, 7
    %v2306 = vrot.slane %v1861, 7
    %v2315 = vmul.f32 %v2220, %v2299
    %v2316 = vmul.f32 %v2222, %v2300
    %v2317 = vmul.f32 %v2224, %v2301
    %v2318 = vmul.f32 %v2226, %v2302
    %v2319 = vmul.f32 %v2228, %v2303
    %v2320 = vmul.f32 %v2230, %v2304
    %v2321 = vmul.f32 %v2232, %v2305
    %v2322 = vmul.f32 %v2234, %v2306
    %v2323 = vmul.f32 %v2172, %v2235
    %v2324 = vmul.f32 %v2174, %v2236
    %v2325 = vmul.f32 %v2176, %v2237
    %v2326 = vmul.f32 %v2178, %v2238
    %v2327 = vmul.f32 %v2180, %v2239
    %v2328 = vmul.f32 %v2182, %v2240
    %v2329 = vmul.f32 %v2184, %v2241
    %v2330 = vmul.f32 %v2186, %v2242
    %v2331 = vadd.f32 %v2315, %v2323
    %v2332 = vadd.f32 %v2316, %v2324
    %v2333 = vadd.f32 %v2317, %v2325
    %v2334 = vadd.f32 %v2318, %v2326
    %v2335 = vadd.f32 %v2319, %v2327
    %v2336 = vadd.f32 %v2320, %v2328
    %v2337 = vadd.f32 %v2321, %v2329
    %v2338 = vadd.f32 %v2322, %v2330
    %v2339 = vtanh.pop %v2331
    %v2340 = vtanh.pop %v2332
    %v2341 = vtanh.pop %v2333
    %v2342 = vtanh.pop %v2334
    %v2343 = vtanh.pop %v2335
    %v2344 = vtanh.pop %v2336
    %v2345 = vtanh.pop %v2337
    %v2346 = vtanh.pop %v2338
    %v2347 = vmul.f32 %v2276, %v2339
    %v2348 = vmul.f32 %v2278, %v2340
    %v2349 = vmul.f32 %v2280, %v2341
    %v2350 = vmul.f32 %v2282, %v2342
    %v2351 = vmul.f32 %v2284, %v2343
    %v2352 = vmul.f32 %v2286, %v2344
    %v2353 = vmul.f32 %v2288, %v2345
    %v2354 = vmul.f32 %v2290, %v2346
    %v2363 = vrot.slane %v2347, 3
    %v2364 = vrot.slane %v2348, 2
    %v2365 = vsel %vm926, %v2364, %v2363
    %v2366 = vrot.slane %v2349, 1
    %v2367 = vsel %vm929, %v2366, %v2365
    %v2368 = vsel %vm932, %v2350, %v2367
    %v2369 = vrot.slane %v2351, 7
    %v2370 = vsel %vm935, %v2369, %v2368
    %v2371 = vrot.slane %v2352, 6
    %v2372 = vsel %vm938, %v2371, %v2370
    %v2373 = vrot.slane %v2353, 5
    %v2374 = vsel %vm941, %v2373, %v2372
    %v2375 = vrot.slane %v2354, 4
    %v2376 = vsel %vm944, %v2375, %v2374
    %2378 = vmatprep.subr.mxu0 %v408
    %2379 = vmatpush1.msra.mxu0 %v407
    %2380 = vmatprep.subr.mxu0 %v412
    %2381 = vmatpush1.msra.mxu0 %v411
    %2382 = vmatprep.subr.mxu0 %v416
    %2383 = vmatpush1.msra.mxu0 %v415
    %2384 = vmatprep.subr.mxu0 %v420
    %2385 = vmatpush1.msra.mxu0 %v419
    %2386 = vmatprep.subr.mxu0 %v424
    %2387 = vmatpush1.msra.mxu0 %v423
    %2388 = vmatprep.subr.mxu0 %v428
    %2389 = vmatpush1.msra.mxu0 %v427
    %2390 = vmatprep.subr.mxu0 %v432
    %2391 = vmatpush1.msra.mxu0 %v431
    %2392 = vmatprep.subr.mxu0 %v436
    %2393 = vmatpush1.msra.mxu0 %v435
    %2394 = vmatprep.subr.mxu0 %v440
    %2395 = vmatpush1.msra.mxu0 %v439
    %2396 = vmatprep.subr.mxu0 %v444
    %2397 = vmatpush1.msra.mxu0 %v443
    %2398 = vmatprep.subr.mxu0 %v448
    %2399 = vmatpush1.msra.mxu0 %v447
    %2400 = vmatprep.subr.mxu0 %v452
    %2401 = vmatpush1.msra.mxu0 %v451
    %2402 = vmatprep.subr.mxu0 %v456
    %2403 = vmatpush1.msra.mxu0 %v455
    %2404 = vmatprep.subr.mxu0 %v460
    %2405 = vmatpush1.msra.mxu0 %v459
    %2406 = vmatprep.subr.mxu0 %v464
    %2407 = vmatpush1.msra.mxu0 %v463
    %2408 = vmatprep.subr.mxu0 %v468
    %2409 = vmatpush1.msra.mxu0 %v467
    %2410 = vmatprep.subr.mxu0 0.0
    %2411 = vmatpush1.msra.mxu0 0.0
    %2412 = vmatprep.subr.mxu0 0.0
    %2413 = vmatpush1.msra.mxu0 0.0
    %2414 = vmatprep.subr.mxu0 0.0
    %2415 = vmatpush1.msra.mxu0 0.0
    %2416 = vmatprep.subr.mxu0 0.0
    %2417 = vmatpush1.msra.mxu0 0.0
    %2418 = vmatprep.subr.mxu0 0.0
    %2419 = vmatpush1.msra.mxu0 0.0
    %2420 = vmatprep.subr.mxu0 0.0
    %2421 = vmatpush1.msra.mxu0 0.0
    %2422 = vmatprep.subr.mxu0 0.0
    %2423 = vmatpush1.msra.mxu0 0.0
    %2424 = vmatprep.subr.mxu0 0.0
    %2425 = vmatpush1.msra.mxu0 0.0
    %2426 = vmatprep.subr.mxu0 0.0
    %2427 = vmatpush1.msra.mxu0 0.0
    %2428 = vmatprep.subr.mxu0 0.0
    %2429 = vmatpush1.msra.mxu0 0.0
    %2430 = vmatprep.subr.mxu0 0.0
    %2431 = vmatpush1.msra.mxu0 0.0
    %2432 = vmatprep.subr.mxu0 0.0
    %2433 = vmatpush1.msra.mxu0 0.0
    %2434 = vmatprep.subr.mxu0 0.0
    %2435 = vmatpush1.msra.mxu0 0.0
    %2436 = vmatprep.subr.mxu0 0.0
    %2437 = vmatpush1.msra.mxu0 0.0
    %2438 = vmatprep.subr.mxu0 0.0
    %2439 = vmatpush1.msra.mxu0 0.0
    %2440 = vmatprep.subr.mxu0 0.0
    %2441 = vmatpush1.msra.mxu0 0.0
    %2442 = vmatprep.mubr.f32.mxu0 0.0
    %2443 = vmatmul.mubr.f32.gmra.mrb[0].mxu0 %v2376
    %v2444 = vpop.f32.mrb[0].mxu0
    %v2445 = vadd.f32 0.0, %v2444
    %v2446 = vpop.f32.mrb[0].mxu0
    %v2447 = vadd.f32 0.0, %v2446
    %2448 = vdwg.mxu0
    %2449 = vmatprep.subr.mxu0 %v410
    %2450 = vmatpush1.msra.mxu0 %v409
    %2451 = vmatprep.subr.mxu0 %v414
    %2452 = vmatpush1.msra.mxu0 %v413
    %2453 = vmatprep.subr.mxu0 %v418
    %2454 = vmatpush1.msra.mxu0 %v417
    %2455 = vmatprep.subr.mxu0 %v422
    %2456 = vmatpush1.msra.mxu0 %v421
    %2457 = vmatprep.subr.mxu0 %v426
    %2458 = vmatpush1.msra.mxu0 %v425
    %2459 = vmatprep.subr.mxu0 %v430
    %2460 = vmatpush1.msra.mxu0 %v429
    %2461 = vmatprep.subr.mxu0 %v434
    %2462 = vmatpush1.msra.mxu0 %v433
    %2463 = vmatprep.subr.mxu0 %v438
    %2464 = vmatpush1.msra.mxu0 %v437
    %2465 = vmatprep.subr.mxu0 %v442
    %2466 = vmatpush1.msra.mxu0 %v441
    %2467 = vmatprep.subr.mxu0 %v446
    %2468 = vmatpush1.msra.mxu0 %v445
    %2469 = vmatprep.subr.mxu0 %v450
    %2470 = vmatpush1.msra.mxu0 %v449
    %2471 = vmatprep.subr.mxu0 %v454
    %2472 = vmatpush1.msra.mxu0 %v453
    %2473 = vmatprep.subr.mxu0 %v458
    %2474 = vmatpush1.msra.mxu0 %v457
    %2475 = vmatprep.subr.mxu0 %v462
    %2476 = vmatpush1.msra.mxu0 %v461
    %2477 = vmatprep.subr.mxu0 %v466
    %2478 = vmatpush1.msra.mxu0 %v465
    %2479 = vmatprep.subr.mxu0 %v470
    %2480 = vmatpush1.msra.mxu0 %v469
    %2481 = vmatprep.subr.mxu0 0.0
    %2482 = vmatpush1.msra.mxu0 0.0
    %2483 = vmatprep.subr.mxu0 0.0
    %2484 = vmatpush1.msra.mxu0 0.0
    %2485 = vmatprep.subr.mxu0 0.0
    %2486 = vmatpush1.msra.mxu0 0.0
    %2487 = vmatprep.subr.mxu0 0.0
    %2488 = vmatpush1.msra.mxu0 0.0
    %2489 = vmatprep.subr.mxu0 0.0
    %2490 = vmatpush1.msra.mxu0 0.0
    %2491 = vmatprep.subr.mxu0 0.0
    %2492 = vmatpush1.msra.mxu0 0.0
    %2493 = vmatprep.subr.mxu0 0.0
    %2494 = vmatpush1.msra.mxu0 0.0
    %2495 = vmatprep.subr.mxu0 0.0
    %2496 = vmatpush1.msra.mxu0 0.0
    %2497 = vmatprep.subr.mxu0 0.0
    %2498 = vmatpush1.msra.mxu0 0.0
    %2499 = vmatprep.subr.mxu0 0.0
    %2500 = vmatpush1.msra.mxu0 0.0
    %2501 = vmatprep.subr.mxu0 0.0
    %2502 = vmatpush1.msra.mxu0 0.0
    %2503 = vmatprep.subr.mxu0 0.0
    %2504 = vmatpush1.msra.mxu0 0.0
    %2505 = vmatprep.subr.mxu0 0.0
    %2506 = vmatpush1.msra.mxu0 0.0
    %2507 = vmatprep.subr.mxu0 0.0
    %2508 = vmatpush1.msra.mxu0 0.0
    %2509 = vmatprep.subr.mxu0 0.0
    %2510 = vmatpush1.msra.mxu0 0.0
    %2511 = vmatprep.subr.mxu0 0.0
    %2512 = vmatpush1.msra.mxu0 0.0
    %2513 = vmatprep.mubr.f32.mxu0 0.0
    %2514 = vmatmul.mubr.f32.gmra.mrb[0].mxu0 %v2376
    %v2515 = vpop.f32.mrb[0].mxu0
    %v2516 = vadd.f32 0.0, %v2515
    %v2517 = vpop.f32.mrb[0].mxu0
    %v2518 = vadd.f32 0.0, %v2517
    %2519 = vdwg.mxu0
    %v2524 = vrot.slane %v2445, 4
    %v2525 = vrot.slane %v2447, 4
    %v2526 = vrot.slane %v2516, 4
    %v2527 = vrot.slane %v2518, 4
    %v2528 = vrot.slane %v2445, 5
    %v2529 = vrot.slane %v2447, 5
    %v2530 = vrot.slane %v2516, 5
    %v2531 = vrot.slane %v2518, 5
    %v2532 = vrot.slane %v2445, 6
    %v2533 = vrot.slane %v2447, 6
    %v2534 = vrot.slane %v2516, 6
    %v2535 = vrot.slane %v2518, 6
    %v2536 = vrot.slane %v2445, 7
    %v2537 = vrot.slane %v2447, 7
    %v2538 = vrot.slane %v2516, 7
    %v2539 = vrot.slane %v2518, 7
    %v2540 = vrot.slane %v2445, 1
    %v2541 = vrot.slane %v2447, 1
    %v2542 = vrot.slane %v2516, 1
    %v2543 = vrot.slane %v2518, 1
    %v2544 = vrot.slane %v2445, 2
    %v2545 = vrot.slane %v2447, 2
    %v2546 = vrot.slane %v2516, 2
    %v2547 = vrot.slane %v2518, 2
    %v2548 = vrot.slane %v2445, 3
    %v2549 = vrot.slane %v2447, 3
    %v2550 = vrot.slane %v2516, 3
    %v2551 = vrot.slane %v2518, 3
    %v2584 = vadd.f32 %v246, %v2524
    %v2585 = vadd.f32 %v248, %v2525
    %v2586 = vadd.f32 %v359, %v2526
    %v2587 = vadd.f32 %v361, %v2527
    %v2588 = vadd.f32 %v252, %v2528
    %v2589 = vadd.f32 %v254, %v2529
    %v2590 = vadd.f32 %v365, %v2530
    %v2591 = vadd.f32 %v367, %v2531
    %v2592 = vadd.f32 %v258, %v2532
    %v2593 = vadd.f32 %v260, %v2533
    %v2594 = vadd.f32 %v371, %v2534
    %v2595 = vadd.f32 %v373, %v2535
    %v2596 = vadd.f32 %v264, %v2536
    %v2597 = vadd.f32 %v266, %v2537
    %v2598 = vadd.f32 %v377, %v2538
    %v2599 = vadd.f32 %v379, %v2539
    %v2600 = vadd.f32 %v270, %v2445
    %v2601 = vadd.f32 %v272, %v2447
    %v2602 = vadd.f32 %v383, %v2516
    %v2603 = vadd.f32 %v385, %v2518
    %v2604 = vadd.f32 %v276, %v2540
    %v2605 = vadd.f32 %v278, %v2541
    %v2606 = vadd.f32 %v389, %v2542
    %v2607 = vadd.f32 %v391, %v2543
    %v2608 = vadd.f32 %v282, %v2544
    %v2609 = vadd.f32 %v284, %v2545
    %v2610 = vadd.f32 %v395, %v2546
    %v2611 = vadd.f32 %v397, %v2547
    %v2612 = vadd.f32 %v288, %v2548
    %v2613 = vadd.f32 %v290, %v2549
    %v2614 = vadd.f32 %v401, %v2550
    %v2615 = vadd.f32 %v403, %v2551
    %v2616 = vxor.u32 %v2584, 2147483648
    %v2617 = vxor.u32 %v2588, 2147483648
    %v2618 = vxor.u32 %v2592, 2147483648
    %v2619 = vxor.u32 %v2596, 2147483648
    %v2620 = vxor.u32 %v2600, 2147483648
    %v2621 = vxor.u32 %v2604, 2147483648
    %v2622 = vxor.u32 %v2608, 2147483648
    %v2623 = vxor.u32 %v2612, 2147483648
    %v2624 = vmul.f32 %v2616, 1.442695
    %v2625 = vpow.pop %v2624
    %v2626 = vmul.f32 %v2617, 1.442695
    %v2627 = vpow.pop %v2626
    %v2628 = vmul.f32 %v2618, 1.442695
    %v2629 = vpow.pop %v2628
    %v2630 = vmul.f32 %v2619, 1.442695
    %v2631 = vpow.pop %v2630
    %v2632 = vmul.f32 %v2620, 1.442695
    %v2633 = vpow.pop %v2632
    %v2634 = vmul.f32 %v2621, 1.442695
    %v2635 = vpow.pop %v2634
    %v2636 = vmul.f32 %v2622, 1.442695
    %v2637 = vpow.pop %v2636
    %v2638 = vmul.f32 %v2623, 1.442695
    %v2639 = vpow.pop %v2638
    %v2640 = vadd.f32 %v2625, 1.0
    %v2641 = vadd.f32 %v2627, 1.0
    %v2642 = vadd.f32 %v2629, 1.0
    %v2643 = vadd.f32 %v2631, 1.0
    %v2644 = vadd.f32 %v2633, 1.0
    %v2645 = vadd.f32 %v2635, 1.0
    %v2646 = vadd.f32 %v2637, 1.0
    %v2647 = vadd.f32 %v2639, 1.0
    %v2648 = vrcp.pop %v2640
    %v2649 = vmul.f32 1.0, %v2648
    %v2650 = vrcp.pop %v2641
    %v2651 = vmul.f32 1.0, %v2650
    %v2652 = vrcp.pop %v2642
    %v2653 = vmul.f32 1.0, %v2652
    %v2654 = vrcp.pop %v2643
    %v2655 = vmul.f32 1.0, %v2654
    %v2656 = vrcp.pop %v2644
    %v2657 = vmul.f32 1.0, %v2656
    %v2658 = vrcp.pop %v2645
    %v2659 = vmul.f32 1.0, %v2658
    %v2660 = vrcp.pop %v2646
    %v2661 = vmul.f32 1.0, %v2660
    %v2662 = vrcp.pop %v2647
    %v2663 = vmul.f32 1.0, %v2662
    %v2664 = vxor.u32 %v2585, 2147483648
    %v2665 = vxor.u32 %v2589, 2147483648
    %v2666 = vxor.u32 %v2593, 2147483648
    %v2667 = vxor.u32 %v2597, 2147483648
    %v2668 = vxor.u32 %v2601, 2147483648
    %v2669 = vxor.u32 %v2605, 2147483648
    %v2670 = vxor.u32 %v2609, 2147483648
    %v2671 = vxor.u32 %v2613, 2147483648
    %v2672 = vmul.f32 %v2664, 1.442695
    %v2673 = vpow.pop %v2672
    %v2674 = vmul.f32 %v2665, 1.442695
    %v2675 = vpow.pop %v2674
    %v2676 = vmul.f32 %v2666, 1.442695
    %v2677 = vpow.pop %v2676
    %v2678 = vmul.f32 %v2667, 1.442695
    %v2679 = vpow.pop %v2678
    %v2680 = vmul.f32 %v2668, 1.442695
    %v2681 = vpow.pop %v2680
    %v2682 = vmul.f32 %v2669, 1.442695
    %v2683 = vpow.pop %v2682
    %v2684 = vmul.f32 %v2670, 1.442695
    %v2685 = vpow.pop %v2684
    %v2686 = vmul.f32 %v2671, 1.442695
    %v2687 = vpow.pop %v2686
    %v2688 = vadd.f32 %v2673, 1.0
    %v2689 = vadd.f32 %v2675, 1.0
    %v2690 = vadd.f32 %v2677, 1.0
    %v2691 = vadd.f32 %v2679, 1.0
    %v2692 = vadd.f32 %v2681, 1.0
    %v2693 = vadd.f32 %v2683, 1.0
    %v2694 = vadd.f32 %v2685, 1.0
    %v2695 = vadd.f32 %v2687, 1.0
    %v2696 = vrcp.pop %v2688
    %v2697 = vmul.f32 1.0, %v2696
    %v2698 = vrcp.pop %v2689
    %v2699 = vmul.f32 1.0, %v2698
    %v2700 = vrcp.pop %v2690
    %v2701 = vmul.f32 1.0, %v2700
    %v2702 = vrcp.pop %v2691
    %v2703 = vmul.f32 1.0, %v2702
    %v2704 = vrcp.pop %v2692
    %v2705 = vmul.f32 1.0, %v2704
    %v2706 = vrcp.pop %v2693
    %v2707 = vmul.f32 1.0, %v2706
    %v2708 = vrcp.pop %v2694
    %v2709 = vmul.f32 1.0, %v2708
    %v2710 = vrcp.pop %v2695
    %v2711 = vmul.f32 1.0, %v2710
    %v2712 = vtanh.pop %v2586
    %v2713 = vtanh.pop %v2590
    %v2714 = vtanh.pop %v2594
    %v2715 = vtanh.pop %v2598
    %v2716 = vtanh.pop %v2602
    %v2717 = vtanh.pop %v2606
    %v2718 = vtanh.pop %v2610
    %v2719 = vtanh.pop %v2614
    %v2720 = vxor.u32 %v2587, 2147483648
    %v2721 = vxor.u32 %v2591, 2147483648
    %v2722 = vxor.u32 %v2595, 2147483648
    %v2723 = vxor.u32 %v2599, 2147483648
    %v2724 = vxor.u32 %v2603, 2147483648
    %v2725 = vxor.u32 %v2607, 2147483648
    %v2726 = vxor.u32 %v2611, 2147483648
    %v2727 = vxor.u32 %v2615, 2147483648
    %v2728 = vmul.f32 %v2720, 1.442695
    %v2729 = vpow.pop %v2728
    %v2730 = vmul.f32 %v2721, 1.442695
    %v2731 = vpow.pop %v2730
    %v2732 = vmul.f32 %v2722, 1.442695
    %v2733 = vpow.pop %v2732
    %v2734 = vmul.f32 %v2723, 1.442695
    %v2735 = vpow.pop %v2734
    %v2736 = vmul.f32 %v2724, 1.442695
    %v2737 = vpow.pop %v2736
    %v2738 = vmul.f32 %v2725, 1.442695
    %v2739 = vpow.pop %v2738
    %v2740 = vmul.f32 %v2726, 1.442695
    %v2741 = vpow.pop %v2740
    %v2742 = vmul.f32 %v2727, 1.442695
    %v2743 = vpow.pop %v2742
    %v2744 = vadd.f32 %v2729, 1.0
    %v2745 = vadd.f32 %v2731, 1.0
    %v2746 = vadd.f32 %v2733, 1.0
    %v2747 = vadd.f32 %v2735, 1.0
    %v2748 = vadd.f32 %v2737, 1.0
    %v2749 = vadd.f32 %v2739, 1.0
    %v2750 = vadd.f32 %v2741, 1.0
    %v2751 = vadd.f32 %v2743, 1.0
    %v2752 = vrcp.pop %v2744
    %v2753 = vmul.f32 1.0, %v2752
    %v2754 = vrcp.pop %v2745
    %v2755 = vmul.f32 1.0, %v2754
    %v2756 = vrcp.pop %v2746
    %v2757 = vmul.f32 1.0, %v2756
    %v2758 = vrcp.pop %v2747
    %v2759 = vmul.f32 1.0, %v2758
    %v2760 = vrcp.pop %v2748
    %v2761 = vmul.f32 1.0, %v2760
    %v2762 = vrcp.pop %v2749
    %v2763 = vmul.f32 1.0, %v2762
    %v2764 = vrcp.pop %v2750
    %v2765 = vmul.f32 1.0, %v2764
    %v2766 = vrcp.pop %v2751
    %v2767 = vmul.f32 1.0, %v2766
    %v2776 = vrot.slane %v2331, 7
    %v2777 = vrot.slane %v2332, 7
    %v2778 = vrot.slane %v2333, 7
    %v2779 = vrot.slane %v2334, 7
    %v2780 = vrot.slane %v2335, 7
    %v2781 = vrot.slane %v2336, 7
    %v2782 = vrot.slane %v2337, 7
    %v2783 = vrot.slane %v2338, 7
    %v2792 = vmul.f32 %v2697, %v2776
    %v2793 = vmul.f32 %v2699, %v2777
    %v2794 = vmul.f32 %v2701, %v2778
    %v2795 = vmul.f32 %v2703, %v2779
    %v2796 = vmul.f32 %v2705, %v2780
    %v2797 = vmul.f32 %v2707, %v2781
    %v2798 = vmul.f32 %v2709, %v2782
    %v2799 = vmul.f32 %v2711, %v2783
    %v2800 = vmul.f32 %v2649, %v2712
    %v2801 = vmul.f32 %v2651, %v2713
    %v2802 = vmul.f32 %v2653, %v2714
    %v2803 = vmul.f32 %v2655, %v2715
    %v2804 = vmul.f32 %v2657, %v2716
    %v2805 = vmul.f32 %v2659, %v2717
    %v2806 = vmul.f32 %v2661, %v2718
    %v2807 = vmul.f32 %v2663, %v2719
    %v2808 = vadd.f32 %v2792, %v2800
    %v2809 = vadd.f32 %v2793, %v2801
    %v2810 = vadd.f32 %v2794, %v2802
    %v2811 = vadd.f32 %v2795, %v2803
    %v2812 = vadd.f32 %v2796, %v2804
    %v2813 = vadd.f32 %v2797, %v2805
    %v2814 = vadd.f32 %v2798, %v2806
    %v2815 = vadd.f32 %v2799, %v2807
    %v2816 = vtanh.pop %v2808
    %v2817 = vtanh.pop %v2809
    %v2818 = vtanh.pop %v2810
    %v2819 = vtanh.pop %v2811
    %v2820 = vtanh.pop %v2812
    %v2821 = vtanh.pop %v2813
    %v2822 = vtanh.pop %v2814
    %v2823 = vtanh.pop %v2815
    %v2824 = vmul.f32 %v2753, %v2816
    %v2825 = vmul.f32 %v2755, %v2817
    %v2826 = vmul.f32 %v2757, %v2818
    %v2827 = vmul.f32 %v2759, %v2819
    %v2828 = vmul.f32 %v2761, %v2820
    %v2829 = vmul.f32 %v2763, %v2821
    %v2830 = vmul.f32 %v2765, %v2822
    %v2831 = vmul.f32 %v2767, %v2823
    %v2840 = vrot.slane %v2824, 4
    %v2841 = vrot.slane %v2825, 3
    %v2842 = vsel %vm926, %v2841, %v2840
    %v2843 = vrot.slane %v2826, 2
    %v2844 = vsel %vm929, %v2843, %v2842
    %v2845 = vrot.slane %v2827, 1
    %v2846 = vsel %vm932, %v2845, %v2844
    %v2847 = vsel %vm935, %v2828, %v2846
    %v2848 = vrot.slane %v2829, 7
    %v2849 = vsel %vm938, %v2848, %v2847
    %v2850 = vrot.slane %v2830, 6
    %v2851 = vsel %vm941, %v2850, %v2849
    %v2852 = vrot.slane %v2831, 5
    %v2853 = vsel %vm944, %v2852, %v2851
    %2855 = vmatprep.subr.mxu0 %v408
    %2856 = vmatpush1.msra.mxu0 %v407
    %2857 = vmatprep.subr.mxu0 %v412
    %2858 = vmatpush1.msra.mxu0 %v411
    %2859 = vmatprep.subr.mxu0 %v416
    %2860 = vmatpush1.msra.mxu0 %v415
    %2861 = vmatprep.subr.mxu0 %v420
    %2862 = vmatpush1.msra.mxu0 %v419
    %2863 = vmatprep.subr.mxu0 %v424
    %2864 = vmatpush1.msra.mxu0 %v423
    %2865 = vmatprep.subr.mxu0 %v428
    %2866 = vmatpush1.msra.mxu0 %v427
    %2867 = vmatprep.subr.mxu0 %v432
    %2868 = vmatpush1.msra.mxu0 %v431
    %2869 = vmatprep.subr.mxu0 %v436
    %2870 = vmatpush1.msra.mxu0 %v435
    %2871 = vmatprep.subr.mxu0 %v440
    %2872 = vmatpush1.msra.mxu0 %v439
    %2873 = vmatprep.subr.mxu0 %v444
    %2874 = vmatpush1.msra.mxu0 %v443
    %2875 = vmatprep.subr.mxu0 %v448
    %2876 = vmatpush1.msra.mxu0 %v447
    %2877 = vmatprep.subr.mxu0 %v452
    %2878 = vmatpush1.msra.mxu0 %v451
    %2879 = vmatprep.subr.mxu0 %v456
    %2880 = vmatpush1.msra.mxu0 %v455
    %2881 = vmatprep.subr.mxu0 %v460
    %2882 = vmatpush1.msra.mxu0 %v459
    %2883 = vmatprep.subr.mxu0 %v464
    %2884 = vmatpush1.msra.mxu0 %v463
    %2885 = vmatprep.subr.mxu0 %v468
    %2886 = vmatpush1.msra.mxu0 %v467
    %2887 = vmatprep.subr.mxu0 0.0
    %2888 = vmatpush1.msra.mxu0 0.0
    %2889 = vmatprep.subr.mxu0 0.0
    %2890 = vmatpush1.msra.mxu0 0.0
    %2891 = vmatprep.subr.mxu0 0.0
    %2892 = vmatpush1.msra.mxu0 0.0
    %2893 = vmatprep.subr.mxu0 0.0
    %2894 = vmatpush1.msra.mxu0 0.0
    %2895 = vmatprep.subr.mxu0 0.0
    %2896 = vmatpush1.msra.mxu0 0.0
    %2897 = vmatprep.subr.mxu0 0.0
    %2898 = vmatpush1.msra.mxu0 0.0
    %2899 = vmatprep.subr.mxu0 0.0
    %2900 = vmatpush1.msra.mxu0 0.0
    %2901 = vmatprep.subr.mxu0 0.0
    %2902 = vmatpush1.msra.mxu0 0.0
    %2903 = vmatprep.subr.mxu0 0.0
    %2904 = vmatpush1.msra.mxu0 0.0
    %2905 = vmatprep.subr.mxu0 0.0
    %2906 = vmatpush1.msra.mxu0 0.0
    %2907 = vmatprep.subr.mxu0 0.0
    %2908 = vmatpush1.msra.mxu0 0.0
    %2909 = vmatprep.subr.mxu0 0.0
    %2910 = vmatpush1.msra.mxu0 0.0
    %2911 = vmatprep.subr.mxu0 0.0
    %2912 = vmatpush1.msra.mxu0 0.0
    %2913 = vmatprep.subr.mxu0 0.0
    %2914 = vmatpush1.msra.mxu0 0.0
    %2915 = vmatprep.subr.mxu0 0.0
    %2916 = vmatpush1.msra.mxu0 0.0
    %2917 = vmatprep.subr.mxu0 0.0
    %2918 = vmatpush1.msra.mxu0 0.0
    %2919 = vmatprep.mubr.f32.mxu0 0.0
    %2920 = vmatmul.mubr.f32.gmra.mrb[0].mxu0 %v2853
    %v2921 = vpop.f32.mrb[0].mxu0
    %v2922 = vadd.f32 0.0, %v2921
    %v2923 = vpop.f32.mrb[0].mxu0
    %v2924 = vadd.f32 0.0, %v2923
    %2925 = vdwg.mxu0
    %2926 = vmatprep.subr.mxu0 %v410
    %2927 = vmatpush1.msra.mxu0 %v409
    %2928 = vmatprep.subr.mxu0 %v414
    %2929 = vmatpush1.msra.mxu0 %v413
    %2930 = vmatprep.subr.mxu0 %v418
    %2931 = vmatpush1.msra.mxu0 %v417
    %2932 = vmatprep.subr.mxu0 %v422
    %2933 = vmatpush1.msra.mxu0 %v421
    %2934 = vmatprep.subr.mxu0 %v426
    %2935 = vmatpush1.msra.mxu0 %v425
    %2936 = vmatprep.subr.mxu0 %v430
    %2937 = vmatpush1.msra.mxu0 %v429
    %2938 = vmatprep.subr.mxu0 %v434
    %2939 = vmatpush1.msra.mxu0 %v433
    %2940 = vmatprep.subr.mxu0 %v438
    %2941 = vmatpush1.msra.mxu0 %v437
    %2942 = vmatprep.subr.mxu0 %v442
    %2943 = vmatpush1.msra.mxu0 %v441
    %2944 = vmatprep.subr.mxu0 %v446
    %2945 = vmatpush1.msra.mxu0 %v445
    %2946 = vmatprep.subr.mxu0 %v450
    %2947 = vmatpush1.msra.mxu0 %v449
    %2948 = vmatprep.subr.mxu0 %v454
    %2949 = vmatpush1.msra.mxu0 %v453
    %2950 = vmatprep.subr.mxu0 %v458
    %2951 = vmatpush1.msra.mxu0 %v457
    %2952 = vmatprep.subr.mxu0 %v462
    %2953 = vmatpush1.msra.mxu0 %v461
    %2954 = vmatprep.subr.mxu0 %v466
    %2955 = vmatpush1.msra.mxu0 %v465
    %2956 = vmatprep.subr.mxu0 %v470
    %2957 = vmatpush1.msra.mxu0 %v469
    %2958 = vmatprep.subr.mxu0 0.0
    %2959 = vmatpush1.msra.mxu0 0.0
    %2960 = vmatprep.subr.mxu0 0.0
    %2961 = vmatpush1.msra.mxu0 0.0
    %2962 = vmatprep.subr.mxu0 0.0
    %2963 = vmatpush1.msra.mxu0 0.0
    %2964 = vmatprep.subr.mxu0 0.0
    %2965 = vmatpush1.msra.mxu0 0.0
    %2966 = vmatprep.subr.mxu0 0.0
    %2967 = vmatpush1.msra.mxu0 0.0
    %2968 = vmatprep.subr.mxu0 0.0
    %2969 = vmatpush1.msra.mxu0 0.0
    %2970 = vmatprep.subr.mxu0 0.0
    %2971 = vmatpush1.msra.mxu0 0.0
    %2972 = vmatprep.subr.mxu0 0.0
    %2973 = vmatpush1.msra.mxu0 0.0
    %2974 = vmatprep.subr.mxu0 0.0
    %2975 = vmatpush1.msra.mxu0 0.0
    %2976 = vmatprep.subr.mxu0 0.0
    %2977 = vmatpush1.msra.mxu0 0.0
    %2978 = vmatprep.subr.mxu0 0.0
    %2979 = vmatpush1.msra.mxu0 0.0
    %2980 = vmatprep.subr.mxu0 0.0
    %2981 = vmatpush1.msra.mxu0 0.0
    %2982 = vmatprep.subr.mxu0 0.0
    %2983 = vmatpush1.msra.mxu0 0.0
    %2984 = vmatprep.subr.mxu0 0.0
    %2985 = vmatpush1.msra.mxu0 0.0
    %2986 = vmatprep.subr.mxu0 0.0
    %2987 = vmatpush1.msra.mxu0 0.0
    %2988 = vmatprep.subr.mxu0 0.0
    %2989 = vmatpush1.msra.mxu0 0.0
    %2990 = vmatprep.mubr.f32.mxu0 0.0
    %2991 = vmatmul.mubr.f32.gmra.mrb[0].mxu0 %v2853
    %v2992 = vpop.f32.mrb[0].mxu0
    %v2993 = vadd.f32 0.0, %v2992
    %v2994 = vpop.f32.mrb[0].mxu0
    %v2995 = vadd.f32 0.0, %v2994
    %2996 = vdwg.mxu0
    %v3001 = vrot.slane %v2922, 3
    %v3002 = vrot.slane %v2924, 3
    %v3003 = vrot.slane %v2993, 3
    %v3004 = vrot.slane %v2995, 3
    %v3005 = vrot.slane %v2922, 4
    %v3006 = vrot.slane %v2924, 4
    %v3007 = vrot.slane %v2993, 4
    %v3008 = vrot.slane %v2995, 4
    %v3009 = vrot.slane %v2922, 5
    %v3010 = vrot.slane %v2924, 5
    %v3011 = vrot.slane %v2993, 5
    %v3012 = vrot.slane %v2995, 5
    %v3013 = vrot.slane %v2922, 6
    %v3014 = vrot.slane %v2924, 6
    %v3015 = vrot.slane %v2993, 6
    %v3016 = vrot.slane %v2995, 6
    %v3017 = vrot.slane %v2922, 7
    %v3018 = vrot.slane %v2924, 7
    %v3019 = vrot.slane %v2993, 7
    %v3020 = vrot.slane %v2995, 7
    %v3021 = vrot.slane %v2922, 1
    %v3022 = vrot.slane %v2924, 1
    %v3023 = vrot.slane %v2993, 1
    %v3024 = vrot.slane %v2995, 1
    %v3025 = vrot.slane %v2922, 2
    %v3026 = vrot.slane %v2924, 2
    %v3027 = vrot.slane %v2993, 2
    %v3028 = vrot.slane %v2995, 2
    %v3061 = vadd.f32 %v246, %v3001
    %v3062 = vadd.f32 %v248, %v3002
    %v3063 = vadd.f32 %v359, %v3003
    %v3064 = vadd.f32 %v361, %v3004
    %v3065 = vadd.f32 %v252, %v3005
    %v3066 = vadd.f32 %v254, %v3006
    %v3067 = vadd.f32 %v365, %v3007
    %v3068 = vadd.f32 %v367, %v3008
    %v3069 = vadd.f32 %v258, %v3009
    %v3070 = vadd.f32 %v260, %v3010
    %v3071 = vadd.f32 %v371, %v3011
    %v3072 = vadd.f32 %v373, %v3012
    %v3073 = vadd.f32 %v264, %v3013
    %v3074 = vadd.f32 %v266, %v3014
    %v3075 = vadd.f32 %v377, %v3015
    %v3076 = vadd.f32 %v379, %v3016
    %v3077 = vadd.f32 %v270, %v3017
    %v3078 = vadd.f32 %v272, %v3018
    %v3079 = vadd.f32 %v383, %v3019
    %v3080 = vadd.f32 %v385, %v3020
    %v3081 = vadd.f32 %v276, %v2922
    %v3082 = vadd.f32 %v278, %v2924
    %v3083 = vadd.f32 %v389, %v2993
    %v3084 = vadd.f32 %v391, %v2995
    %v3085 = vadd.f32 %v282, %v3021
    %v3086 = vadd.f32 %v284, %v3022
    %v3087 = vadd.f32 %v395, %v3023
    %v3088 = vadd.f32 %v397, %v3024
    %v3089 = vadd.f32 %v288, %v3025
    %v3090 = vadd.f32 %v290, %v3026
    %v3091 = vadd.f32 %v401, %v3027
    %v3092 = vadd.f32 %v403, %v3028
    %v3093 = vxor.u32 %v3061, 2147483648
    %v3094 = vxor.u32 %v3065, 2147483648
    %v3095 = vxor.u32 %v3069, 2147483648
    %v3096 = vxor.u32 %v3073, 2147483648
    %v3097 = vxor.u32 %v3077, 2147483648
    %v3098 = vxor.u32 %v3081, 2147483648
    %v3099 = vxor.u32 %v3085, 2147483648
    %v3100 = vxor.u32 %v3089, 2147483648
    %v3101 = vmul.f32 %v3093, 1.442695
    %v3102 = vpow.pop %v3101
    %v3103 = vmul.f32 %v3094, 1.442695
    %v3104 = vpow.pop %v3103
    %v3105 = vmul.f32 %v3095, 1.442695
    %v3106 = vpow.pop %v3105
    %v3107 = vmul.f32 %v3096, 1.442695
    %v3108 = vpow.pop %v3107
    %v3109 = vmul.f32 %v3097, 1.442695
    %v3110 = vpow.pop %v3109
    %v3111 = vmul.f32 %v3098, 1.442695
    %v3112 = vpow.pop %v3111
    %v3113 = vmul.f32 %v3099, 1.442695
    %v3114 = vpow.pop %v3113
    %v3115 = vmul.f32 %v3100, 1.442695
    %v3116 = vpow.pop %v3115
    %v3117 = vadd.f32 %v3102, 1.0
    %v3118 = vadd.f32 %v3104, 1.0
    %v3119 = vadd.f32 %v3106, 1.0
    %v3120 = vadd.f32 %v3108, 1.0
    %v3121 = vadd.f32 %v3110, 1.0
    %v3122 = vadd.f32 %v3112, 1.0
    %v3123 = vadd.f32 %v3114, 1.0
    %v3124 = vadd.f32 %v3116, 1.0
    %v3125 = vrcp.pop %v3117
    %v3126 = vmul.f32 1.0, %v3125
    %v3127 = vrcp.pop %v3118
    %v3128 = vmul.f32 1.0, %v3127
    %v3129 = vrcp.pop %v3119
    %v3130 = vmul.f32 1.0, %v3129
    %v3131 = vrcp.pop %v3120
    %v3132 = vmul.f32 1.0, %v3131
    %v3133 = vrcp.pop %v3121
    %v3134 = vmul.f32 1.0, %v3133
    %v3135 = vrcp.pop %v3122
    %v3136 = vmul.f32 1.0, %v3135
    %v3137 = vrcp.pop %v3123
    %v3138 = vmul.f32 1.0, %v3137
    %v3139 = vrcp.pop %v3124
    %v3140 = vmul.f32 1.0, %v3139
    %v3141 = vxor.u32 %v3062, 2147483648
    %v3142 = vxor.u32 %v3066, 2147483648
    %v3143 = vxor.u32 %v3070, 2147483648
    %v3144 = vxor.u32 %v3074, 2147483648
    %v3145 = vxor.u32 %v3078, 2147483648
    %v3146 = vxor.u32 %v3082, 2147483648
    %v3147 = vxor.u32 %v3086, 2147483648
    %v3148 = vxor.u32 %v3090, 2147483648
    %v3149 = vmul.f32 %v3141, 1.442695
    %v3150 = vpow.pop %v3149
    %v3151 = vmul.f32 %v3142, 1.442695
    %v3152 = vpow.pop %v3151
    %v3153 = vmul.f32 %v3143, 1.442695
    %v3154 = vpow.pop %v3153
    %v3155 = vmul.f32 %v3144, 1.442695
    %v3156 = vpow.pop %v3155
    %v3157 = vmul.f32 %v3145, 1.442695
    %v3158 = vpow.pop %v3157
    %v3159 = vmul.f32 %v3146, 1.442695
    %v3160 = vpow.pop %v3159
    %v3161 = vmul.f32 %v3147, 1.442695
    %v3162 = vpow.pop %v3161
    %v3163 = vmul.f32 %v3148, 1.442695
    %v3164 = vpow.pop %v3163
    %v3165 = vadd.f32 %v3150, 1.0
    %v3166 = vadd.f32 %v3152, 1.0
    %v3167 = vadd.f32 %v3154, 1.0
    %v3168 = vadd.f32 %v3156, 1.0
    %v3169 = vadd.f32 %v3158, 1.0
    %v3170 = vadd.f32 %v3160, 1.0
    %v3171 = vadd.f32 %v3162, 1.0
    %v3172 = vadd.f32 %v3164, 1.0
    %v3173 = vrcp.pop %v3165
    %v3174 = vmul.f32 1.0, %v3173
    %v3175 = vrcp.pop %v3166
    %v3176 = vmul.f32 1.0, %v3175
    %v3177 = vrcp.pop %v3167
    %v3178 = vmul.f32 1.0, %v3177
    %v3179 = vrcp.pop %v3168
    %v3180 = vmul.f32 1.0, %v3179
    %v3181 = vrcp.pop %v3169
    %v3182 = vmul.f32 1.0, %v3181
    %v3183 = vrcp.pop %v3170
    %v3184 = vmul.f32 1.0, %v3183
    %v3185 = vrcp.pop %v3171
    %v3186 = vmul.f32 1.0, %v3185
    %v3187 = vrcp.pop %v3172
    %v3188 = vmul.f32 1.0, %v3187
    %v3189 = vtanh.pop %v3063
    %v3190 = vtanh.pop %v3067
    %v3191 = vtanh.pop %v3071
    %v3192 = vtanh.pop %v3075
    %v3193 = vtanh.pop %v3079
    %v3194 = vtanh.pop %v3083
    %v3195 = vtanh.pop %v3087
    %v3196 = vtanh.pop %v3091
    %v3197 = vxor.u32 %v3064, 2147483648
    %v3198 = vxor.u32 %v3068, 2147483648
    %v3199 = vxor.u32 %v3072, 2147483648
    %v3200 = vxor.u32 %v3076, 2147483648
    %v3201 = vxor.u32 %v3080, 2147483648
    %v3202 = vxor.u32 %v3084, 2147483648
    %v3203 = vxor.u32 %v3088, 2147483648
    %v3204 = vxor.u32 %v3092, 2147483648
    %v3205 = vmul.f32 %v3197, 1.442695
    %v3206 = vpow.pop %v3205
    %v3207 = vmul.f32 %v3198, 1.442695
    %v3208 = vpow.pop %v3207
    %v3209 = vmul.f32 %v3199, 1.442695
    %v3210 = vpow.pop %v3209
    %v3211 = vmul.f32 %v3200, 1.442695
    %v3212 = vpow.pop %v3211
    %v3213 = vmul.f32 %v3201, 1.442695
    %v3214 = vpow.pop %v3213
    %v3215 = vmul.f32 %v3202, 1.442695
    %v3216 = vpow.pop %v3215
    %v3217 = vmul.f32 %v3203, 1.442695
    %v3218 = vpow.pop %v3217
    %v3219 = vmul.f32 %v3204, 1.442695
    %v3220 = vpow.pop %v3219
    %v3221 = vadd.f32 %v3206, 1.0
    %v3222 = vadd.f32 %v3208, 1.0
    %v3223 = vadd.f32 %v3210, 1.0
    %v3224 = vadd.f32 %v3212, 1.0
    %v3225 = vadd.f32 %v3214, 1.0
    %v3226 = vadd.f32 %v3216, 1.0
    %v3227 = vadd.f32 %v3218, 1.0
    %v3228 = vadd.f32 %v3220, 1.0
    %v3229 = vrcp.pop %v3221
    %v3230 = vmul.f32 1.0, %v3229
    %v3231 = vrcp.pop %v3222
    %v3232 = vmul.f32 1.0, %v3231
    %v3233 = vrcp.pop %v3223
    %v3234 = vmul.f32 1.0, %v3233
    %v3235 = vrcp.pop %v3224
    %v3236 = vmul.f32 1.0, %v3235
    %v3237 = vrcp.pop %v3225
    %v3238 = vmul.f32 1.0, %v3237
    %v3239 = vrcp.pop %v3226
    %v3240 = vmul.f32 1.0, %v3239
    %v3241 = vrcp.pop %v3227
    %v3242 = vmul.f32 1.0, %v3241
    %v3243 = vrcp.pop %v3228
    %v3244 = vmul.f32 1.0, %v3243
    %v3253 = vrot.slane %v2808, 7
    %v3254 = vrot.slane %v2809, 7
    %v3255 = vrot.slane %v2810, 7
    %v3256 = vrot.slane %v2811, 7
    %v3257 = vrot.slane %v2812, 7
    %v3258 = vrot.slane %v2813, 7
    %v3259 = vrot.slane %v2814, 7
    %v3260 = vrot.slane %v2815, 7
    %v3269 = vmul.f32 %v3174, %v3253
    %v3270 = vmul.f32 %v3176, %v3254
    %v3271 = vmul.f32 %v3178, %v3255
    %v3272 = vmul.f32 %v3180, %v3256
    %v3273 = vmul.f32 %v3182, %v3257
    %v3274 = vmul.f32 %v3184, %v3258
    %v3275 = vmul.f32 %v3186, %v3259
    %v3276 = vmul.f32 %v3188, %v3260
    %v3277 = vmul.f32 %v3126, %v3189
    %v3278 = vmul.f32 %v3128, %v3190
    %v3279 = vmul.f32 %v3130, %v3191
    %v3280 = vmul.f32 %v3132, %v3192
    %v3281 = vmul.f32 %v3134, %v3193
    %v3282 = vmul.f32 %v3136, %v3194
    %v3283 = vmul.f32 %v3138, %v3195
    %v3284 = vmul.f32 %v3140, %v3196
    %v3285 = vadd.f32 %v3269, %v3277
    %v3286 = vadd.f32 %v3270, %v3278
    %v3287 = vadd.f32 %v3271, %v3279
    %v3288 = vadd.f32 %v3272, %v3280
    %v3289 = vadd.f32 %v3273, %v3281
    %v3290 = vadd.f32 %v3274, %v3282
    %v3291 = vadd.f32 %v3275, %v3283
    %v3292 = vadd.f32 %v3276, %v3284
    %v3293 = vtanh.pop %v3285
    %v3294 = vtanh.pop %v3286
    %v3295 = vtanh.pop %v3287
    %v3296 = vtanh.pop %v3288
    %v3297 = vtanh.pop %v3289
    %v3298 = vtanh.pop %v3290
    %v3299 = vtanh.pop %v3291
    %v3300 = vtanh.pop %v3292
    %v3301 = vmul.f32 %v3230, %v3293
    %v3302 = vmul.f32 %v3232, %v3294
    %v3303 = vmul.f32 %v3234, %v3295
    %v3304 = vmul.f32 %v3236, %v3296
    %v3305 = vmul.f32 %v3238, %v3297
    %v3306 = vmul.f32 %v3240, %v3298
    %v3307 = vmul.f32 %v3242, %v3299
    %v3308 = vmul.f32 %v3244, %v3300
    %v3317 = vrot.slane %v3301, 5
    %v3318 = vrot.slane %v3302, 4
    %v3319 = vsel %vm926, %v3318, %v3317
    %v3320 = vrot.slane %v3303, 3
    %v3321 = vsel %vm929, %v3320, %v3319
    %v3322 = vrot.slane %v3304, 2
    %v3323 = vsel %vm932, %v3322, %v3321
    %v3324 = vrot.slane %v3305, 1
    %v3325 = vsel %vm935, %v3324, %v3323
    %v3326 = vsel %vm938, %v3306, %v3325
    %v3327 = vrot.slane %v3307, 7
    %v3328 = vsel %vm941, %v3327, %v3326
    %v3329 = vrot.slane %v3308, 6
    %v3330 = vsel %vm944, %v3329, %v3328
    %3332 = vmatprep.subr.mxu0 %v408
    %3333 = vmatpush1.msra.mxu0 %v407
    %3334 = vmatprep.subr.mxu0 %v412
    %3335 = vmatpush1.msra.mxu0 %v411
    %3336 = vmatprep.subr.mxu0 %v416
    %3337 = vmatpush1.msra.mxu0 %v415
    %3338 = vmatprep.subr.mxu0 %v420
    %3339 = vmatpush1.msra.mxu0 %v419
    %3340 = vmatprep.subr.mxu0 %v424
    %3341 = vmatpush1.msra.mxu0 %v423
    %3342 = vmatprep.subr.mxu0 %v428
    %3343 = vmatpush1.msra.mxu0 %v427
    %3344 = vmatprep.subr.mxu0 %v432
    %3345 = vmatpush1.msra.mxu0 %v431
    %3346 = vmatprep.subr.mxu0 %v436
    %3347 = vmatpush1.msra.mxu0 %v435
    %3348 = vmatprep.subr.mxu0 %v440
    %3349 = vmatpush1.msra.mxu0 %v439
    %3350 = vmatprep.subr.mxu0 %v444
    %3351 = vmatpush1.msra.mxu0 %v443
    %3352 = vmatprep.subr.mxu0 %v448
    %3353 = vmatpush1.msra.mxu0 %v447
    %3354 = vmatprep.subr.mxu0 %v452
    %3355 = vmatpush1.msra.mxu0 %v451
    %3356 = vmatprep.subr.mxu0 %v456
    %3357 = vmatpush1.msra.mxu0 %v455
    %3358 = vmatprep.subr.mxu0 %v460
    %3359 = vmatpush1.msra.mxu0 %v459
    %3360 = vmatprep.subr.mxu0 %v464
    %3361 = vmatpush1.msra.mxu0 %v463
    %3362 = vmatprep.subr.mxu0 %v468
    %3363 = vmatpush1.msra.mxu0 %v467
    %3364 = vmatprep.subr.mxu0 0.0
    %3365 = vmatpush1.msra.mxu0 0.0
    %3366 = vmatprep.subr.mxu0 0.0
    %3367 = vmatpush1.msra.mxu0 0.0
    %3368 = vmatprep.subr.mxu0 0.0
    %3369 = vmatpush1.msra.mxu0 0.0
    %3370 = vmatprep.subr.mxu0 0.0
    %3371 = vmatpush1.msra.mxu0 0.0
    %3372 = vmatprep.subr.mxu0 0.0
    %3373 = vmatpush1.msra.mxu0 0.0
    %3374 = vmatprep.subr.mxu0 0.0
    %3375 = vmatpush1.msra.mxu0 0.0
    %3376 = vmatprep.subr.mxu0 0.0
    %3377 = vmatpush1.msra.mxu0 0.0
    %3378 = vmatprep.subr.mxu0 0.0
    %3379 = vmatpush1.msra.mxu0 0.0
    %3380 = vmatprep.subr.mxu0 0.0
    %3381 = vmatpush1.msra.mxu0 0.0
    %3382 = vmatprep.subr.mxu0 0.0
    %3383 = vmatpush1.msra.mxu0 0.0
    %3384 = vmatprep.subr.mxu0 0.0
    %3385 = vmatpush1.msra.mxu0 0.0
    %3386 = vmatprep.subr.mxu0 0.0
    %3387 = vmatpush1.msra.mxu0 0.0
    %3388 = vmatprep.subr.mxu0 0.0
    %3389 = vmatpush1.msra.mxu0 0.0
    %3390 = vmatprep.subr.mxu0 0.0
    %3391 = vmatpush1.msra.mxu0 0.0
    %3392 = vmatprep.subr.mxu0 0.0
    %3393 = vmatpush1.msra.mxu0 0.0
    %3394 = vmatprep.subr.mxu0 0.0
    %3395 = vmatpush1.msra.mxu0 0.0
    %3396 = vmatprep.mubr.f32.mxu0 0.0
    %3397 = vmatmul.mubr.f32.gmra.mrb[0].mxu0 %v3330
    %v3398 = vpop.f32.mrb[0].mxu0
    %v3399 = vadd.f32 0.0, %v3398
    %v3400 = vpop.f32.mrb[0].mxu0
    %v3401 = vadd.f32 0.0, %v3400
    %3402 = vdwg.mxu0
    %3403 = vmatprep.subr.mxu0 %v410
    %3404 = vmatpush1.msra.mxu0 %v409
    %3405 = vmatprep.subr.mxu0 %v414
    %3406 = vmatpush1.msra.mxu0 %v413
    %3407 = vmatprep.subr.mxu0 %v418
    %3408 = vmatpush1.msra.mxu0 %v417
    %3409 = vmatprep.subr.mxu0 %v422
    %3410 = vmatpush1.msra.mxu0 %v421
    %3411 = vmatprep.subr.mxu0 %v426
    %3412 = vmatpush1.msra.mxu0 %v425
    %3413 = vmatprep.subr.mxu0 %v430
    %3414 = vmatpush1.msra.mxu0 %v429
    %3415 = vmatprep.subr.mxu0 %v434
    %3416 = vmatpush1.msra.mxu0 %v433
    %3417 = vmatprep.subr.mxu0 %v438
    %3418 = vmatpush1.msra.mxu0 %v437
    %3419 = vmatprep.subr.mxu0 %v442
    %3420 = vmatpush1.msra.mxu0 %v441
    %3421 = vmatprep.subr.mxu0 %v446
    %3422 = vmatpush1.msra.mxu0 %v445
    %3423 = vmatprep.subr.mxu0 %v450
    %3424 = vmatpush1.msra.mxu0 %v449
    %3425 = vmatprep.subr.mxu0 %v454
    %3426 = vmatpush1.msra.mxu0 %v453
    %3427 = vmatprep.subr.mxu0 %v458
    %3428 = vmatpush1.msra.mxu0 %v457
    %3429 = vmatprep.subr.mxu0 %v462
    %3430 = vmatpush1.msra.mxu0 %v461
    %3431 = vmatprep.subr.mxu0 %v466
    %3432 = vmatpush1.msra.mxu0 %v465
    %3433 = vmatprep.subr.mxu0 %v470
    %3434 = vmatpush1.msra.mxu0 %v469
    %3435 = vmatprep.subr.mxu0 0.0
    %3436 = vmatpush1.msra.mxu0 0.0
    %3437 = vmatprep.subr.mxu0 0.0
    %3438 = vmatpush1.msra.mxu0 0.0
    %3439 = vmatprep.subr.mxu0 0.0
    %3440 = vmatpush1.msra.mxu0 0.0
    %3441 = vmatprep.subr.mxu0 0.0
    %3442 = vmatpush1.msra.mxu0 0.0
    %3443 = vmatprep.subr.mxu0 0.0
    %3444 = vmatpush1.msra.mxu0 0.0
    %3445 = vmatprep.subr.mxu0 0.0
    %3446 = vmatpush1.msra.mxu0 0.0
    %3447 = vmatprep.subr.mxu0 0.0
    %3448 = vmatpush1.msra.mxu0 0.0
    %3449 = vmatprep.subr.mxu0 0.0
    %3450 = vmatpush1.msra.mxu0 0.0
    %3451 = vmatprep.subr.mxu0 0.0
    %3452 = vmatpush1.msra.mxu0 0.0
    %3453 = vmatprep.subr.mxu0 0.0
    %3454 = vmatpush1.msra.mxu0 0.0
    %3455 = vmatprep.subr.mxu0 0.0
    %3456 = vmatpush1.msra.mxu0 0.0
    %3457 = vmatprep.subr.mxu0 0.0
    %3458 = vmatpush1.msra.mxu0 0.0
    %3459 = vmatprep.subr.mxu0 0.0
    %3460 = vmatpush1.msra.mxu0 0.0
    %3461 = vmatprep.subr.mxu0 0.0
    %3462 = vmatpush1.msra.mxu0 0.0
    %3463 = vmatprep.subr.mxu0 0.0
    %3464 = vmatpush1.msra.mxu0 0.0
    %3465 = vmatprep.subr.mxu0 0.0
    %3466 = vmatpush1.msra.mxu0 0.0
    %3467 = vmatprep.mubr.f32.mxu0 0.0
    %3468 = vmatmul.mubr.f32.gmra.mrb[0].mxu0 %v3330
    %v3469 = vpop.f32.mrb[0].mxu0
    %v3470 = vadd.f32 0.0, %v3469
    %v3471 = vpop.f32.mrb[0].mxu0
    %v3472 = vadd.f32 0.0, %v3471
    %3473 = vdwg.mxu0
    %v3478 = vrot.slane %v3399, 2
    %v3479 = vrot.slane %v3401, 2
    %v3480 = vrot.slane %v3470, 2
    %v3481 = vrot.slane %v3472, 2
    %v3482 = vrot.slane %v3399, 3
    %v3483 = vrot.slane %v3401, 3
    %v3484 = vrot.slane %v3470, 3
    %v3485 = vrot.slane %v3472, 3
    %v3486 = vrot.slane %v3399, 4
    %v3487 = vrot.slane %v3401, 4
    %v3488 = vrot.slane %v3470, 4
    %v3489 = vrot.slane %v3472, 4
    %v3490 = vrot.slane %v3399, 5
    %v3491 = vrot.slane %v3401, 5
    %v3492 = vrot.slane %v3470, 5
    %v3493 = vrot.slane %v3472, 5
    %v3494 = vrot.slane %v3399, 6
    %v3495 = vrot.slane %v3401, 6
    %v3496 = vrot.slane %v3470, 6
    %v3497 = vrot.slane %v3472, 6
    %v3498 = vrot.slane %v3399, 7
    %v3499 = vrot.slane %v3401, 7
    %v3500 = vrot.slane %v3470, 7
    %v3501 = vrot.slane %v3472, 7
    %v3502 = vrot.slane %v3399, 1
    %v3503 = vrot.slane %v3401, 1
    %v3504 = vrot.slane %v3470, 1
    %v3505 = vrot.slane %v3472, 1
    %v3538 = vadd.f32 %v246, %v3478
    %v3539 = vadd.f32 %v248, %v3479
    %v3540 = vadd.f32 %v359, %v3480
    %v3541 = vadd.f32 %v361, %v3481
    %v3542 = vadd.f32 %v252, %v3482
    %v3543 = vadd.f32 %v254, %v3483
    %v3544 = vadd.f32 %v365, %v3484
    %v3545 = vadd.f32 %v367, %v3485
    %v3546 = vadd.f32 %v258, %v3486
    %v3547 = vadd.f32 %v260, %v3487
    %v3548 = vadd.f32 %v371, %v3488
    %v3549 = vadd.f32 %v373, %v3489
    %v3550 = vadd.f32 %v264, %v3490
    %v3551 = vadd.f32 %v266, %v3491
    %v3552 = vadd.f32 %v377, %v3492
    %v3553 = vadd.f32 %v379, %v3493
    %v3554 = vadd.f32 %v270, %v3494
    %v3555 = vadd.f32 %v272, %v3495
    %v3556 = vadd.f32 %v383, %v3496
    %v3557 = vadd.f32 %v385, %v3497
    %v3558 = vadd.f32 %v276, %v3498
    %v3559 = vadd.f32 %v278, %v3499
    %v3560 = vadd.f32 %v389, %v3500
    %v3561 = vadd.f32 %v391, %v3501
    %v3562 = vadd.f32 %v282, %v3399
    %v3563 = vadd.f32 %v284, %v3401
    %v3564 = vadd.f32 %v395, %v3470
    %v3565 = vadd.f32 %v397, %v3472
    %v3566 = vadd.f32 %v288, %v3502
    %v3567 = vadd.f32 %v290, %v3503
    %v3568 = vadd.f32 %v401, %v3504
    %v3569 = vadd.f32 %v403, %v3505
    %v3570 = vxor.u32 %v3538, 2147483648
    %v3571 = vxor.u32 %v3542, 2147483648
    %v3572 = vxor.u32 %v3546, 2147483648
    %v3573 = vxor.u32 %v3550, 2147483648
    %v3574 = vxor.u32 %v3554, 2147483648
    %v3575 = vxor.u32 %v3558, 2147483648
    %v3576 = vxor.u32 %v3562, 2147483648
    %v3577 = vxor.u32 %v3566, 2147483648
    %v3578 = vmul.f32 %v3570, 1.442695
    %v3579 = vpow.pop %v3578
    %v3580 = vmul.f32 %v3571, 1.442695
    %v3581 = vpow.pop %v3580
    %v3582 = vmul.f32 %v3572, 1.442695
    %v3583 = vpow.pop %v3582
    %v3584 = vmul.f32 %v3573, 1.442695
    %v3585 = vpow.pop %v3584
    %v3586 = vmul.f32 %v3574, 1.442695
    %v3587 = vpow.pop %v3586
    %v3588 = vmul.f32 %v3575, 1.442695
    %v3589 = vpow.pop %v3588
    %v3590 = vmul.f32 %v3576, 1.442695
    %v3591 = vpow.pop %v3590
    %v3592 = vmul.f32 %v3577, 1.442695
    %v3593 = vpow.pop %v3592
    %v3594 = vadd.f32 %v3579, 1.0
    %v3595 = vadd.f32 %v3581, 1.0
    %v3596 = vadd.f32 %v3583, 1.0
    %v3597 = vadd.f32 %v3585, 1.0
    %v3598 = vadd.f32 %v3587, 1.0
    %v3599 = vadd.f32 %v3589, 1.0
    %v3600 = vadd.f32 %v3591, 1.0
    %v3601 = vadd.f32 %v3593, 1.0
    %v3602 = vrcp.pop %v3594
    %v3603 = vmul.f32 1.0, %v3602
    %v3604 = vrcp.pop %v3595
    %v3605 = vmul.f32 1.0, %v3604
    %v3606 = vrcp.pop %v3596
    %v3607 = vmul.f32 1.0, %v3606
    %v3608 = vrcp.pop %v3597
    %v3609 = vmul.f32 1.0, %v3608
    %v3610 = vrcp.pop %v3598
    %v3611 = vmul.f32 1.0, %v3610
    %v3612 = vrcp.pop %v3599
    %v3613 = vmul.f32 1.0, %v3612
    %v3614 = vrcp.pop %v3600
    %v3615 = vmul.f32 1.0, %v3614
    %v3616 = vrcp.pop %v3601
    %v3617 = vmul.f32 1.0, %v3616
    %v3618 = vxor.u32 %v3539, 2147483648
    %v3619 = vxor.u32 %v3543, 2147483648
    %v3620 = vxor.u32 %v3547, 2147483648
    %v3621 = vxor.u32 %v3551, 2147483648
    %v3622 = vxor.u32 %v3555, 2147483648
    %v3623 = vxor.u32 %v3559, 2147483648
    %v3624 = vxor.u32 %v3563, 2147483648
    %v3625 = vxor.u32 %v3567, 2147483648
    %v3626 = vmul.f32 %v3618, 1.442695
    %v3627 = vpow.pop %v3626
    %v3628 = vmul.f32 %v3619, 1.442695
    %v3629 = vpow.pop %v3628
    %v3630 = vmul.f32 %v3620, 1.442695
    %v3631 = vpow.pop %v3630
    %v3632 = vmul.f32 %v3621, 1.442695
    %v3633 = vpow.pop %v3632
    %v3634 = vmul.f32 %v3622, 1.442695
    %v3635 = vpow.pop %v3634
    %v3636 = vmul.f32 %v3623, 1.442695
    %v3637 = vpow.pop %v3636
    %v3638 = vmul.f32 %v3624, 1.442695
    %v3639 = vpow.pop %v3638
    %v3640 = vmul.f32 %v3625, 1.442695
    %v3641 = vpow.pop %v3640
    %v3642 = vadd.f32 %v3627, 1.0
    %v3643 = vadd.f32 %v3629, 1.0
    %v3644 = vadd.f32 %v3631, 1.0
    %v3645 = vadd.f32 %v3633, 1.0
    %v3646 = vadd.f32 %v3635, 1.0
    %v3647 = vadd.f32 %v3637, 1.0
    %v3648 = vadd.f32 %v3639, 1.0
    %v3649 = vadd.f32 %v3641, 1.0
    %v3650 = vrcp.pop %v3642
    %v3651 = vmul.f32 1.0, %v3650
    %v3652 = vrcp.pop %v3643
    %v3653 = vmul.f32 1.0, %v3652
    %v3654 = vrcp.pop %v3644
    %v3655 = vmul.f32 1.0, %v3654
    %v3656 = vrcp.pop %v3645
    %v3657 = vmul.f32 1.0, %v3656
    %v3658 = vrcp.pop %v3646
    %v3659 = vmul.f32 1.0, %v3658
    %v3660 = vrcp.pop %v3647
    %v3661 = vmul.f32 1.0, %v3660
    %v3662 = vrcp.pop %v3648
    %v3663 = vmul.f32 1.0, %v3662
    %v3664 = vrcp.pop %v3649
    %v3665 = vmul.f32 1.0, %v3664
    %v3666 = vtanh.pop %v3540
    %v3667 = vtanh.pop %v3544
    %v3668 = vtanh.pop %v3548
    %v3669 = vtanh.pop %v3552
    %v3670 = vtanh.pop %v3556
    %v3671 = vtanh.pop %v3560
    %v3672 = vtanh.pop %v3564
    %v3673 = vtanh.pop %v3568
    %v3674 = vxor.u32 %v3541, 2147483648
    %v3675 = vxor.u32 %v3545, 2147483648
    %v3676 = vxor.u32 %v3549, 2147483648
    %v3677 = vxor.u32 %v3553, 2147483648
    %v3678 = vxor.u32 %v3557, 2147483648
    %v3679 = vxor.u32 %v3561, 2147483648
    %v3680 = vxor.u32 %v3565, 2147483648
    %v3681 = vxor.u32 %v3569, 2147483648
    %v3682 = vmul.f32 %v3674, 1.442695
    %v3683 = vpow.pop %v3682
    %v3684 = vmul.f32 %v3675, 1.442695
    %v3685 = vpow.pop %v3684
    %v3686 = vmul.f32 %v3676, 1.442695
    %v3687 = vpow.pop %v3686
    %v3688 = vmul.f32 %v3677, 1.442695
    %v3689 = vpow.pop %v3688
    %v3690 = vmul.f32 %v3678, 1.442695
    %v3691 = vpow.pop %v3690
    %v3692 = vmul.f32 %v3679, 1.442695
    %v3693 = vpow.pop %v3692
    %v3694 = vmul.f32 %v3680, 1.442695
    %v3695 = vpow.pop %v3694
    %v3696 = vmul.f32 %v3681, 1.442695
    %v3697 = vpow.pop %v3696
    %v3698 = vadd.f32 %v3683, 1.0
    %v3699 = vadd.f32 %v3685, 1.0
    %v3700 = vadd.f32 %v3687, 1.0
    %v3701 = vadd.f32 %v3689, 1.0
    %v3702 = vadd.f32 %v3691, 1.0
    %v3703 = vadd.f32 %v3693, 1.0
    %v3704 = vadd.f32 %v3695, 1.0
    %v3705 = vadd.f32 %v3697, 1.0
    %v3706 = vrcp.pop %v3698
    %v3707 = vmul.f32 1.0, %v3706
    %v3708 = vrcp.pop %v3699
    %v3709 = vmul.f32 1.0, %v3708
    %v3710 = vrcp.pop %v3700
    %v3711 = vmul.f32 1.0, %v3710
    %v3712 = vrcp.pop %v3701
    %v3713 = vmul.f32 1.0, %v3712
    %v3714 = vrcp.pop %v3702
    %v3715 = vmul.f32 1.0, %v3714
    %v3716 = vrcp.pop %v3703
    %v3717 = vmul.f32 1.0, %v3716
    %v3718 = vrcp.pop %v3704
    %v3719 = vmul.f32 1.0, %v3718
    %v3720 = vrcp.pop %v3705
    %v3721 = vmul.f32 1.0, %v3720
    %v3730 = vrot.slane %v3285, 7
    %v3731 = vrot.slane %v3286, 7
    %v3732 = vrot.slane %v3287, 7
    %v3733 = vrot.slane %v3288, 7
    %v3734 = vrot.slane %v3289, 7
    %v3735 = vrot.slane %v3290, 7
    %v3736 = vrot.slane %v3291, 7
    %v3737 = vrot.slane %v3292, 7
    %v3746 = vmul.f32 %v3651, %v3730
    %v3747 = vmul.f32 %v3653, %v3731
    %v3748 = vmul.f32 %v3655, %v3732
    %v3749 = vmul.f32 %v3657, %v3733
    %v3750 = vmul.f32 %v3659, %v3734
    %v3751 = vmul.f32 %v3661, %v3735
    %v3752 = vmul.f32 %v3663, %v3736
    %v3753 = vmul.f32 %v3665, %v3737
    %v3754 = vmul.f32 %v3603, %v3666
    %v3755 = vmul.f32 %v3605, %v3667
    %v3756 = vmul.f32 %v3607, %v3668
    %v3757 = vmul.f32 %v3609, %v3669
    %v3758 = vmul.f32 %v3611, %v3670
    %v3759 = vmul.f32 %v3613, %v3671
    %v3760 = vmul.f32 %v3615, %v3672
    %v3761 = vmul.f32 %v3617, %v3673
    %v3762 = vadd.f32 %v3746, %v3754
    %v3763 = vadd.f32 %v3747, %v3755
    %v3764 = vadd.f32 %v3748, %v3756
    %v3765 = vadd.f32 %v3749, %v3757
    %v3766 = vadd.f32 %v3750, %v3758
    %v3767 = vadd.f32 %v3751, %v3759
    %v3768 = vadd.f32 %v3752, %v3760
    %v3769 = vadd.f32 %v3753, %v3761
    %v3770 = vtanh.pop %v3762
    %v3771 = vtanh.pop %v3763
    %v3772 = vtanh.pop %v3764
    %v3773 = vtanh.pop %v3765
    %v3774 = vtanh.pop %v3766
    %v3775 = vtanh.pop %v3767
    %v3776 = vtanh.pop %v3768
    %v3777 = vtanh.pop %v3769
    %v3778 = vmul.f32 %v3707, %v3770
    %v3779 = vmul.f32 %v3709, %v3771
    %v3780 = vmul.f32 %v3711, %v3772
    %v3781 = vmul.f32 %v3713, %v3773
    %v3782 = vmul.f32 %v3715, %v3774
    %v3783 = vmul.f32 %v3717, %v3775
    %v3784 = vmul.f32 %v3719, %v3776
    %v3785 = vmul.f32 %v3721, %v3777
    %v3794 = vrot.slane %v3778, 6
    %v3795 = vrot.slane %v3779, 5
    %v3796 = vsel %vm926, %v3795, %v3794
    %v3797 = vrot.slane %v3780, 4
    %v3798 = vsel %vm929, %v3797, %v3796
    %v3799 = vrot.slane %v3781, 3
    %v3800 = vsel %vm932, %v3799, %v3798
    %v3801 = vrot.slane %v3782, 2
    %v3802 = vsel %vm935, %v3801, %v3800
    %v3803 = vrot.slane %v3783, 1
    %v3804 = vsel %vm938, %v3803, %v3802
    %v3805 = vsel %vm941, %v3784, %v3804
    %v3806 = vrot.slane %v3785, 7
    %v3807 = vsel %vm944, %v3806, %v3805
    %3809 = vmatprep.subr.mxu0 %v408
    %3810 = vmatpush1.msra.mxu0 %v407
    %3811 = vmatprep.subr.mxu0 %v412
    %3812 = vmatpush1.msra.mxu0 %v411
    %3813 = vmatprep.subr.mxu0 %v416
    %3814 = vmatpush1.msra.mxu0 %v415
    %3815 = vmatprep.subr.mxu0 %v420
    %3816 = vmatpush1.msra.mxu0 %v419
    %3817 = vmatprep.subr.mxu0 %v424
    %3818 = vmatpush1.msra.mxu0 %v423
    %3819 = vmatprep.subr.mxu0 %v428
    %3820 = vmatpush1.msra.mxu0 %v427
    %3821 = vmatprep.subr.mxu0 %v432
    %3822 = vmatpush1.msra.mxu0 %v431
    %3823 = vmatprep.subr.mxu0 %v436
    %3824 = vmatpush1.msra.mxu0 %v435
    %3825 = vmatprep.subr.mxu0 %v440
    %3826 = vmatpush1.msra.mxu0 %v439
    %3827 = vmatprep.subr.mxu0 %v444
    %3828 = vmatpush1.msra.mxu0 %v443
    %3829 = vmatprep.subr.mxu0 %v448
    %3830 = vmatpush1.msra.mxu0 %v447
    %3831 = vmatprep.subr.mxu0 %v452
    %3832 = vmatpush1.msra.mxu0 %v451
    %3833 = vmatprep.subr.mxu0 %v456
    %3834 = vmatpush1.msra.mxu0 %v455
    %3835 = vmatprep.subr.mxu0 %v460
    %3836 = vmatpush1.msra.mxu0 %v459
    %3837 = vmatprep.subr.mxu0 %v464
    %3838 = vmatpush1.msra.mxu0 %v463
    %3839 = vmatprep.subr.mxu0 %v468
    %3840 = vmatpush1.msra.mxu0 %v467
    %3841 = vmatprep.subr.mxu0 0.0
    %3842 = vmatpush1.msra.mxu0 0.0
    %3843 = vmatprep.subr.mxu0 0.0
    %3844 = vmatpush1.msra.mxu0 0.0
    %3845 = vmatprep.subr.mxu0 0.0
    %3846 = vmatpush1.msra.mxu0 0.0
    %3847 = vmatprep.subr.mxu0 0.0
    %3848 = vmatpush1.msra.mxu0 0.0
    %3849 = vmatprep.subr.mxu0 0.0
    %3850 = vmatpush1.msra.mxu0 0.0
    %3851 = vmatprep.subr.mxu0 0.0
    %3852 = vmatpush1.msra.mxu0 0.0
    %3853 = vmatprep.subr.mxu0 0.0
    %3854 = vmatpush1.msra.mxu0 0.0
    %3855 = vmatprep.subr.mxu0 0.0
    %3856 = vmatpush1.msra.mxu0 0.0
    %3857 = vmatprep.subr.mxu0 0.0
    %3858 = vmatpush1.msra.mxu0 0.0
    %3859 = vmatprep.subr.mxu0 0.0
    %3860 = vmatpush1.msra.mxu0 0.0
    %3861 = vmatprep.subr.mxu0 0.0
    %3862 = vmatpush1.msra.mxu0 0.0
    %3863 = vmatprep.subr.mxu0 0.0
    %3864 = vmatpush1.msra.mxu0 0.0
    %3865 = vmatprep.subr.mxu0 0.0
    %3866 = vmatpush1.msra.mxu0 0.0
    %3867 = vmatprep.subr.mxu0 0.0
    %3868 = vmatpush1.msra.mxu0 0.0
    %3869 = vmatprep.subr.mxu0 0.0
    %3870 = vmatpush1.msra.mxu0 0.0
    %3871 = vmatprep.subr.mxu0 0.0
    %3872 = vmatpush1.msra.mxu0 0.0
    %3873 = vmatprep.mubr.f32.mxu0 0.0
    %3874 = vmatmul.mubr.f32.gmra.mrb[0].mxu0 %v3807
    %v3875 = vpop.f32.mrb[0].mxu0
    %v3876 = vadd.f32 0.0, %v3875
    %v3877 = vpop.f32.mrb[0].mxu0
    %v3878 = vadd.f32 0.0, %v3877
    %3879 = vdwg.mxu0
    %3880 = vmatprep.subr.mxu0 %v410
    %3881 = vmatpush1.msra.mxu0 %v409
    %3882 = vmatprep.subr.mxu0 %v414
    %3883 = vmatpush1.msra.mxu0 %v413
    %3884 = vmatprep.subr.mxu0 %v418
    %3885 = vmatpush1.msra.mxu0 %v417
    %3886 = vmatprep.subr.mxu0 %v422
    %3887 = vmatpush1.msra.mxu0 %v421
    %3888 = vmatprep.subr.mxu0 %v426
    %3889 = vmatpush1.msra.mxu0 %v425
    %3890 = vmatprep.subr.mxu0 %v430
    %3891 = vmatpush1.msra.mxu0 %v429
    %3892 = vmatprep.subr.mxu0 %v434
    %3893 = vmatpush1.msra.mxu0 %v433
    %3894 = vmatprep.subr.mxu0 %v438
    %3895 = vmatpush1.msra.mxu0 %v437
    %3896 = vmatprep.subr.mxu0 %v442
    %3897 = vmatpush1.msra.mxu0 %v441
    %3898 = vmatprep.subr.mxu0 %v446
    %3899 = vmatpush1.msra.mxu0 %v445
    %3900 = vmatprep.subr.mxu0 %v450
    %3901 = vmatpush1.msra.mxu0 %v449
    %3902 = vmatprep.subr.mxu0 %v454
    %3903 = vmatpush1.msra.mxu0 %v453
    %3904 = vmatprep.subr.mxu0 %v458
    %3905 = vmatpush1.msra.mxu0 %v457
    %3906 = vmatprep.subr.mxu0 %v462
    %3907 = vmatpush1.msra.mxu0 %v461
    %3908 = vmatprep.subr.mxu0 %v466
    %3909 = vmatpush1.msra.mxu0 %v465
    %3910 = vmatprep.subr.mxu0 %v470
    %3911 = vmatpush1.msra.mxu0 %v469
    %3912 = vmatprep.subr.mxu0 0.0
    %3913 = vmatpush1.msra.mxu0 0.0
    %3914 = vmatprep.subr.mxu0 0.0
    %3915 = vmatpush1.msra.mxu0 0.0
    %3916 = vmatprep.subr.mxu0 0.0
    %3917 = vmatpush1.msra.mxu0 0.0
    %3918 = vmatprep.subr.mxu0 0.0
    %3919 = vmatpush1.msra.mxu0 0.0
    %3920 = vmatprep.subr.mxu0 0.0
    %3921 = vmatpush1.msra.mxu0 0.0
    %3922 = vmatprep.subr.mxu0 0.0
    %3923 = vmatpush1.msra.mxu0 0.0
    %3924 = vmatprep.subr.mxu0 0.0
    %3925 = vmatpush1.msra.mxu0 0.0
    %3926 = vmatprep.subr.mxu0 0.0
    %3927 = vmatpush1.msra.mxu0 0.0
    %3928 = vmatprep.subr.mxu0 0.0
    %3929 = vmatpush1.msra.mxu0 0.0
    %3930 = vmatprep.subr.mxu0 0.0
    %3931 = vmatpush1.msra.mxu0 0.0
    %3932 = vmatprep.subr.mxu0 0.0
    %3933 = vmatpush1.msra.mxu0 0.0
    %3934 = vmatprep.subr.mxu0 0.0
    %3935 = vmatpush1.msra.mxu0 0.0
    %3936 = vmatprep.subr.mxu0 0.0
    %3937 = vmatpush1.msra.mxu0 0.0
    %3938 = vmatprep.subr.mxu0 0.0
    %3939 = vmatpush1.msra.mxu0 0.0
    %3940 = vmatprep.subr.mxu0 0.0
    %3941 = vmatpush1.msra.mxu0 0.0
    %3942 = vmatprep.subr.mxu0 0.0
    %3943 = vmatpush1.msra.mxu0 0.0
    %3944 = vmatprep.mubr.f32.mxu0 0.0
    %3945 = vmatmul.mubr.f32.gmra.mrb[0].mxu0 %v3807
    %v3946 = vpop.f32.mrb[0].mxu0
    %v3947 = vadd.f32 0.0, %v3946
    %v3948 = vpop.f32.mrb[0].mxu0
    %v3949 = vadd.f32 0.0, %v3948
    %3950 = vdwg.mxu0
    %v3955 = vrot.slane %v3876, 1
    %v3956 = vrot.slane %v3878, 1
    %v3957 = vrot.slane %v3947, 1
    %v3958 = vrot.slane %v3949, 1
    %v3959 = vrot.slane %v3876, 2
    %v3960 = vrot.slane %v3878, 2
    %v3961 = vrot.slane %v3947, 2
    %v3962 = vrot.slane %v3949, 2
    %v3963 = vrot.slane %v3876, 3
    %v3964 = vrot.slane %v3878, 3
    %v3965 = vrot.slane %v3947, 3
    %v3966 = vrot.slane %v3949, 3
    %v3967 = vrot.slane %v3876, 4
    %v3968 = vrot.slane %v3878, 4
    %v3969 = vrot.slane %v3947, 4
    %v3970 = vrot.slane %v3949, 4
    %v3971 = vrot.slane %v3876, 5
    %v3972 = vrot.slane %v3878, 5
    %v3973 = vrot.slane %v3947, 5
    %v3974 = vrot.slane %v3949, 5
    %v3975 = vrot.slane %v3876, 6
    %v3976 = vrot.slane %v3878, 6
    %v3977 = vrot.slane %v3947, 6
    %v3978 = vrot.slane %v3949, 6
    %v3979 = vrot.slane %v3876, 7
    %v3980 = vrot.slane %v3878, 7
    %v3981 = vrot.slane %v3947, 7
    %v3982 = vrot.slane %v3949, 7
    %v4015 = vadd.f32 %v246, %v3955
    %v4016 = vadd.f32 %v248, %v3956
    %v4017 = vadd.f32 %v359, %v3957
    %v4018 = vadd.f32 %v361, %v3958
    %v4019 = vadd.f32 %v252, %v3959
    %v4020 = vadd.f32 %v254, %v3960
    %v4021 = vadd.f32 %v365, %v3961
    %v4022 = vadd.f32 %v367, %v3962
    %v4023 = vadd.f32 %v258, %v3963
    %v4024 = vadd.f32 %v260, %v3964
    %v4025 = vadd.f32 %v371, %v3965
    %v4026 = vadd.f32 %v373, %v3966
    %v4027 = vadd.f32 %v264, %v3967
    %v4028 = vadd.f32 %v266, %v3968
    %v4029 = vadd.f32 %v377, %v3969
    %v4030 = vadd.f32 %v379, %v3970
    %v4031 = vadd.f32 %v270, %v3971
    %v4032 = vadd.f32 %v272, %v3972
    %v4033 = vadd.f32 %v383, %v3973
    %v4034 = vadd.f32 %v385, %v3974
    %v4035 = vadd.f32 %v276, %v3975
    %v4036 = vadd.f32 %v278, %v3976
    %v4037 = vadd.f32 %v389, %v3977
    %v4038 = vadd.f32 %v391, %v3978
    %v4039 = vadd.f32 %v282, %v3979
    %v4040 = vadd.f32 %v284, %v3980
    %v4041 = vadd.f32 %v395, %v3981
    %v4042 = vadd.f32 %v397, %v3982
    %v4043 = vadd.f32 %v288, %v3876
    %v4044 = vadd.f32 %v290, %v3878
    %v4045 = vadd.f32 %v401, %v3947
    %v4046 = vadd.f32 %v403, %v3949
    %v4047 = vxor.u32 %v4015, 2147483648
    %v4048 = vxor.u32 %v4019, 2147483648
    %v4049 = vxor.u32 %v4023, 2147483648
    %v4050 = vxor.u32 %v4027, 2147483648
    %v4051 = vxor.u32 %v4031, 2147483648
    %v4052 = vxor.u32 %v4035, 2147483648
    %v4053 = vxor.u32 %v4039, 2147483648
    %v4054 = vxor.u32 %v4043, 2147483648
    %v4055 = vmul.f32 %v4047, 1.442695
    %v4056 = vpow.pop %v4055
    %v4057 = vmul.f32 %v4048, 1.442695
    %v4058 = vpow.pop %v4057
    %v4059 = vmul.f32 %v4049, 1.442695
    %v4060 = vpow.pop %v4059
    %v4061 = vmul.f32 %v4050, 1.442695
    %v4062 = vpow.pop %v4061
    %v4063 = vmul.f32 %v4051, 1.442695
    %v4064 = vpow.pop %v4063
    %v4065 = vmul.f32 %v4052, 1.442695
    %v4066 = vpow.pop %v4065
    %v4067 = vmul.f32 %v4053, 1.442695
    %v4068 = vpow.pop %v4067
    %v4069 = vmul.f32 %v4054, 1.442695
    %v4070 = vpow.pop %v4069
    %v4071 = vadd.f32 %v4056, 1.0
    %v4072 = vadd.f32 %v4058, 1.0
    %v4073 = vadd.f32 %v4060, 1.0
    %v4074 = vadd.f32 %v4062, 1.0
    %v4075 = vadd.f32 %v4064, 1.0
    %v4076 = vadd.f32 %v4066, 1.0
    %v4077 = vadd.f32 %v4068, 1.0
    %v4078 = vadd.f32 %v4070, 1.0
    %v4079 = vrcp.pop %v4071
    %v4080 = vmul.f32 1.0, %v4079
    %v4081 = vrcp.pop %v4072
    %v4082 = vmul.f32 1.0, %v4081
    %v4083 = vrcp.pop %v4073
    %v4084 = vmul.f32 1.0, %v4083
    %v4085 = vrcp.pop %v4074
    %v4086 = vmul.f32 1.0, %v4085
    %v4087 = vrcp.pop %v4075
    %v4088 = vmul.f32 1.0, %v4087
    %v4089 = vrcp.pop %v4076
    %v4090 = vmul.f32 1.0, %v4089
    %v4091 = vrcp.pop %v4077
    %v4092 = vmul.f32 1.0, %v4091
    %v4093 = vrcp.pop %v4078
    %v4094 = vmul.f32 1.0, %v4093
    %v4095 = vxor.u32 %v4016, 2147483648
    %v4096 = vxor.u32 %v4020, 2147483648
    %v4097 = vxor.u32 %v4024, 2147483648
    %v4098 = vxor.u32 %v4028, 2147483648
    %v4099 = vxor.u32 %v4032, 2147483648
    %v4100 = vxor.u32 %v4036, 2147483648
    %v4101 = vxor.u32 %v4040, 2147483648
    %v4102 = vxor.u32 %v4044, 2147483648
    %v4103 = vmul.f32 %v4095, 1.442695
    %v4104 = vpow.pop %v4103
    %v4105 = vmul.f32 %v4096, 1.442695
    %v4106 = vpow.pop %v4105
    %v4107 = vmul.f32 %v4097, 1.442695
    %v4108 = vpow.pop %v4107
    %v4109 = vmul.f32 %v4098, 1.442695
    %v4110 = vpow.pop %v4109
    %v4111 = vmul.f32 %v4099, 1.442695
    %v4112 = vpow.pop %v4111
    %v4113 = vmul.f32 %v4100, 1.442695
    %v4114 = vpow.pop %v4113
    %v4115 = vmul.f32 %v4101, 1.442695
    %v4116 = vpow.pop %v4115
    %v4117 = vmul.f32 %v4102, 1.442695
    %v4118 = vpow.pop %v4117
    %v4119 = vadd.f32 %v4104, 1.0
    %v4120 = vadd.f32 %v4106, 1.0
    %v4121 = vadd.f32 %v4108, 1.0
    %v4122 = vadd.f32 %v4110, 1.0
    %v4123 = vadd.f32 %v4112, 1.0
    %v4124 = vadd.f32 %v4114, 1.0
    %v4125 = vadd.f32 %v4116, 1.0
    %v4126 = vadd.f32 %v4118, 1.0
    %v4127 = vrcp.pop %v4119
    %v4128 = vmul.f32 1.0, %v4127
    %v4129 = vrcp.pop %v4120
    %v4130 = vmul.f32 1.0, %v4129
    %v4131 = vrcp.pop %v4121
    %v4132 = vmul.f32 1.0, %v4131
    %v4133 = vrcp.pop %v4122
    %v4134 = vmul.f32 1.0, %v4133
    %v4135 = vrcp.pop %v4123
    %v4136 = vmul.f32 1.0, %v4135
    %v4137 = vrcp.pop %v4124
    %v4138 = vmul.f32 1.0, %v4137
    %v4139 = vrcp.pop %v4125
    %v4140 = vmul.f32 1.0, %v4139
    %v4141 = vrcp.pop %v4126
    %v4142 = vmul.f32 1.0, %v4141
    %v4143 = vtanh.pop %v4017
    %v4144 = vtanh.pop %v4021
    %v4145 = vtanh.pop %v4025
    %v4146 = vtanh.pop %v4029
    %v4147 = vtanh.pop %v4033
    %v4148 = vtanh.pop %v4037
    %v4149 = vtanh.pop %v4041
    %v4150 = vtanh.pop %v4045
    %v4151 = vxor.u32 %v4018, 2147483648
    %v4152 = vxor.u32 %v4022, 2147483648
    %v4153 = vxor.u32 %v4026, 2147483648
    %v4154 = vxor.u32 %v4030, 2147483648
    %v4155 = vxor.u32 %v4034, 2147483648
    %v4156 = vxor.u32 %v4038, 2147483648
    %v4157 = vxor.u32 %v4042, 2147483648
    %v4158 = vxor.u32 %v4046, 2147483648
    %v4159 = vmul.f32 %v4151, 1.442695
    %v4160 = vpow.pop %v4159
    %v4161 = vmul.f32 %v4152, 1.442695
    %v4162 = vpow.pop %v4161
    %v4163 = vmul.f32 %v4153, 1.442695
    %v4164 = vpow.pop %v4163
    %v4165 = vmul.f32 %v4154, 1.442695
    %v4166 = vpow.pop %v4165
    %v4167 = vmul.f32 %v4155, 1.442695
    %v4168 = vpow.pop %v4167
    %v4169 = vmul.f32 %v4156, 1.442695
    %v4170 = vpow.pop %v4169
    %v4171 = vmul.f32 %v4157, 1.442695
    %v4172 = vpow.pop %v4171
    %v4173 = vmul.f32 %v4158, 1.442695
    %v4174 = vpow.pop %v4173
    %v4175 = vadd.f32 %v4160, 1.0
    %v4176 = vadd.f32 %v4162, 1.0
    %v4177 = vadd.f32 %v4164, 1.0
    %v4178 = vadd.f32 %v4166, 1.0
    %v4179 = vadd.f32 %v4168, 1.0
    %v4180 = vadd.f32 %v4170, 1.0
    %v4181 = vadd.f32 %v4172, 1.0
    %v4182 = vadd.f32 %v4174, 1.0
    %v4183 = vrcp.pop %v4175
    %v4184 = vmul.f32 1.0, %v4183
    %v4185 = vrcp.pop %v4176
    %v4186 = vmul.f32 1.0, %v4185
    %v4187 = vrcp.pop %v4177
    %v4188 = vmul.f32 1.0, %v4187
    %v4189 = vrcp.pop %v4178
    %v4190 = vmul.f32 1.0, %v4189
    %v4191 = vrcp.pop %v4179
    %v4192 = vmul.f32 1.0, %v4191
    %v4193 = vrcp.pop %v4180
    %v4194 = vmul.f32 1.0, %v4193
    %v4195 = vrcp.pop %v4181
    %v4196 = vmul.f32 1.0, %v4195
    %v4197 = vrcp.pop %v4182
    %v4198 = vmul.f32 1.0, %v4197
    %v4207 = vrot.slane %v3762, 7
    %v4208 = vrot.slane %v3763, 7
    %v4209 = vrot.slane %v3764, 7
    %v4210 = vrot.slane %v3765, 7
    %v4211 = vrot.slane %v3766, 7
    %v4212 = vrot.slane %v3767, 7
    %v4213 = vrot.slane %v3768, 7
    %v4214 = vrot.slane %v3769, 7
    %v4223 = vmul.f32 %v4128, %v4207
    %v4224 = vmul.f32 %v4130, %v4208
    %v4225 = vmul.f32 %v4132, %v4209
    %v4226 = vmul.f32 %v4134, %v4210
    %v4227 = vmul.f32 %v4136, %v4211
    %v4228 = vmul.f32 %v4138, %v4212
    %v4229 = vmul.f32 %v4140, %v4213
    %v4230 = vmul.f32 %v4142, %v4214
    %v4231 = vmul.f32 %v4080, %v4143
    %v4232 = vmul.f32 %v4082, %v4144
    %v4233 = vmul.f32 %v4084, %v4145
    %v4234 = vmul.f32 %v4086, %v4146
    %v4235 = vmul.f32 %v4088, %v4147
    %v4236 = vmul.f32 %v4090, %v4148
    %v4237 = vmul.f32 %v4092, %v4149
    %v4238 = vmul.f32 %v4094, %v4150
    %v4239 = vadd.f32 %v4223, %v4231
    %v4240 = vadd.f32 %v4224, %v4232
    %v4241 = vadd.f32 %v4225, %v4233
    %v4242 = vadd.f32 %v4226, %v4234
    %v4243 = vadd.f32 %v4227, %v4235
    %v4244 = vadd.f32 %v4228, %v4236
    %v4245 = vadd.f32 %v4229, %v4237
    %v4246 = vadd.f32 %v4230, %v4238
    %v4247 = vtanh.pop %v4239
    %v4248 = vtanh.pop %v4240
    %v4249 = vtanh.pop %v4241
    %v4250 = vtanh.pop %v4242
    %v4251 = vtanh.pop %v4243
    %v4252 = vtanh.pop %v4244
    %v4253 = vtanh.pop %v4245
    %v4254 = vtanh.pop %v4246
    %v4255 = vmul.f32 %v4184, %v4247
    %v4256 = vmul.f32 %v4186, %v4248
    %v4257 = vmul.f32 %v4188, %v4249
    %v4258 = vmul.f32 %v4190, %v4250
    %v4259 = vmul.f32 %v4192, %v4251
    %v4260 = vmul.f32 %v4194, %v4252
    %v4261 = vmul.f32 %v4196, %v4253
    %v4262 = vmul.f32 %v4198, %v4254
    %v4271 = vrot.slane %v4256, 7
    %v4272 = vrot.slane %v4257, 6
    %v4273 = vsel %vm926, %v4272, %v4271
    %v4274 = vrot.slane %v4258, 5
    %v4275 = vsel %vm929, %v4274, %v4273
    %v4276 = vrot.slane %v4259, 4
    %v4277 = vsel %vm932, %v4276, %v4275
    %v4278 = vrot.slane %v4260, 3
    %v4279 = vsel %vm935, %v4278, %v4277
    %v4280 = vrot.slane %v4261, 2
    %v4281 = vsel %vm938, %v4280, %v4279
    %v4282 = vrot.slane %v4262, 1
    %v4283 = vsel %vm941, %v4282, %v4281
    %4286 = vst [vmem:[#allocation2 - $0x7] sm:$0x80] %v4255
    %4287 = vst [vmem:[#allocation2 + $0x1] sm:$0x7f] %v4283
    %v4296 = vrot.slane %v4240, 7
    %v4297 = vrot.slane %v4241, 6
    %v4298 = vsel %vm926, %v4297, %v4296
    %v4299 = vrot.slane %v4242, 5
    %v4300 = vsel %vm929, %v4299, %v4298
    %v4301 = vrot.slane %v4243, 4
    %v4302 = vsel %vm932, %v4301, %v4300
    %v4303 = vrot.slane %v4244, 3
    %v4304 = vsel %vm935, %v4303, %v4302
    %v4305 = vrot.slane %v4245, 2
    %v4306 = vsel %vm938, %v4305, %v4304
    %v4307 = vrot.slane %v4246, 1
    %v4308 = vsel %vm941, %v4307, %v4306
    %4311 = vst [vmem:[#allocation3 - $0x7] sm:$0x80] %v4239
    %4312 = vst [vmem:[#allocation3 + $0x1] sm:$0x7f] %v4308
    // Predicated region
    $region46: #{tpu_custom_call.1} parent=1 // pred_check
      %p4313 = pneg %p79
    $region47: #{tpu_custom_call.1} parent=1 // pred_check_branch
      %4315 = sbr.rel (%p4313) target = $region49
    $region48: #{tpu_custom_call.1} parent=1 // pred_region
      %v4316 = vld [vmem:[#allocation10] sm:$0xff]
      %v4317 = vld [vmem:[#allocation10 + $0x8] sm:$0xff]
      %v4318 = vld [vmem:[#allocation10 + $0x10] sm:$0xff]
      %v4319 = vld [vmem:[#allocation10 + $0x18] sm:$0xff]
      %v4320 = vld [vmem:[#allocation10 + $0x20] sm:$0xff]
      %v4321 = vld [vmem:[#allocation10 + $0x28] sm:$0xff]
      %v4322 = vld [vmem:[#allocation10 + $0x30] sm:$0xff]
      %v4323 = vld [vmem:[#allocation10 + $0x38] sm:$0xff]
      %v4324 = vld [vmem:[#allocation10 + $0x40] sm:$0xff]
      %v4325 = vld [vmem:[#allocation10 + $0x48] sm:$0xff]
      %v4326 = vld [vmem:[#allocation10 + $0x50] sm:$0xff]
      %v4327 = vld [vmem:[#allocation10 + $0x58] sm:$0xff]
      %v4328 = vld [vmem:[#allocation10 + $0x60] sm:$0xff]
      %v4329 = vld [vmem:[#allocation10 + $0x68] sm:$0xff]
      %v4330 = vld [vmem:[#allocation10 + $0x70] sm:$0xff]
      %v4331 = vld [vmem:[#allocation10 + $0x78] sm:$0xff]
      %v4332 = vld [vmem:[%s5] sm:$0x1]
      %v4334 = vlaneseq
      %v4335 = vshrl.u32 %v4334, 7
      %v4336 = vsub.s32 0, %v4335
      %v4337 = vrot.slane %v4332, %v4336
      %v4339 = vrot.slane %v4255, 7
      %v4340 = vrot.slane %v4256, 6
      %v4341 = vsel %vm926, %v4340, %v4339
      %v4342 = vrot.slane %v4257, 5
      %v4343 = vsel %vm929, %v4342, %v4341
      %v4344 = vrot.slane %v4258, 4
      %v4345 = vsel %vm932, %v4344, %v4343
      %v4346 = vrot.slane %v4259, 3
      %v4347 = vsel %vm935, %v4346, %v4345
      %v4348 = vrot.slane %v4260, 2
      %v4349 = vsel %vm938, %v4348, %v4347
      %v4350 = vrot.slane %v4261, 1
      %v4351 = vsel %vm941, %v4350, %v4349
      %v4352 = vsel %vm944, %v4262, %v4351
      %4354 = vmatprep.subr.mxu0 0.0
      %4355 = vmatpush1.msra.mxu0 %v4316
      %4356 = vmatprep.subr.mxu0 0.0
      %4357 = vmatpush1.msra.mxu0 %v4317
      %4358 = vmatprep.subr.mxu0 0.0
      %4359 = vmatpush1.msra.mxu0 %v4318
      %4360 = vmatprep.subr.mxu0 0.0
      %4361 = vmatpush1.msra.mxu0 %v4319
      %4362 = vmatprep.subr.mxu0 0.0
      %4363 = vmatpush1.msra.mxu0 %v4320
      %4364 = vmatprep.subr.mxu0 0.0
      %4365 = vmatpush1.msra.mxu0 %v4321
      %4366 = vmatprep.subr.mxu0 0.0
      %4367 = vmatpush1.msra.mxu0 %v4322
      %4368 = vmatprep.subr.mxu0 0.0
      %4369 = vmatpush1.msra.mxu0 %v4323
      %4370 = vmatprep.subr.mxu0 0.0
      %4371 = vmatpush1.msra.mxu0 %v4324
      %4372 = vmatprep.subr.mxu0 0.0
      %4373 = vmatpush1.msra.mxu0 %v4325
      %4374 = vmatprep.subr.mxu0 0.0
      %4375 = vmatpush1.msra.mxu0 %v4326
      %4376 = vmatprep.subr.mxu0 0.0
      %4377 = vmatpush1.msra.mxu0 %v4327
      %4378 = vmatprep.subr.mxu0 0.0
      %4379 = vmatpush1.msra.mxu0 %v4328
      %4380 = vmatprep.subr.mxu0 0.0
      %4381 = vmatpush1.msra.mxu0 %v4329
      %4382 = vmatprep.subr.mxu0 0.0
      %4383 = vmatpush1.msra.mxu0 %v4330
      %4384 = vmatprep.subr.mxu0 0.0
      %4385 = vmatpush1.msra.mxu0 %v4331
      %4386 = vmatprep.subr.mxu0 0.0
      %4387 = vmatpush1.msra.mxu0 0.0
      %4388 = vmatprep.subr.mxu0 0.0
      %4389 = vmatpush1.msra.mxu0 0.0
      %4390 = vmatprep.subr.mxu0 0.0
      %4391 = vmatpush1.msra.mxu0 0.0
      %4392 = vmatprep.subr.mxu0 0.0
      %4393 = vmatpush1.msra.mxu0 0.0
      %4394 = vmatprep.subr.mxu0 0.0
      %4395 = vmatpush1.msra.mxu0 0.0
      %4396 = vmatprep.subr.mxu0 0.0
      %4397 = vmatpush1.msra.mxu0 0.0
      %4398 = vmatprep.subr.mxu0 0.0
      %4399 = vmatpush1.msra.mxu0 0.0
      %4400 = vmatprep.subr.mxu0 0.0
      %4401 = vmatpush1.msra.mxu0 0.0
      %4402 = vmatprep.subr.mxu0 0.0
      %4403 = vmatpush1.msra.mxu0 0.0
      %4404 = vmatprep.subr.mxu0 0.0
      %4405 = vmatpush1.msra.mxu0 0.0
      %4406 = vmatprep.subr.mxu0 0.0
      %4407 = vmatpush1.msra.mxu0 0.0
      %4408 = vmatprep.subr.mxu0 0.0
      %4409 = vmatpush1.msra.mxu0 0.0
      %4410 = vmatprep.subr.mxu0 0.0
      %4411 = vmatpush1.msra.mxu0 0.0
      %4412 = vmatprep.subr.mxu0 0.0
      %4413 = vmatpush1.msra.mxu0 0.0
      %4414 = vmatprep.subr.mxu0 0.0
      %4415 = vmatpush1.msra.mxu0 0.0
      %4416 = vmatprep.subr.mxu0 0.0
      %4417 = vmatpush1.msra.mxu0 0.0
      %4418 = vmatprep.mubr.f32.mxu0 0.0
      %4419 = vmatmul.mubr.f32.gmra.mrb[0].mxu0 %v4352
      %v4420 = vpop.f32.mrb[0].mxu0
      %v4421 = vadd.f32 %v4337, %v4420
      %v4422 = vpop.f32.mrb[0].mxu0
      %4423 = vdwg.mxu0
      %4424 = vst [vmem:[#allocation12] sm:$0xff] %v4421
    $region49: #{tpu_custom_call.1} parent=1 // pred_fallthru
      _
    // Predicated region
    $region50: #{tpu_custom_call.1} parent=1 // pred_check
      _
    $region51: #{tpu_custom_call.1} parent=1 // pred_check_branch
      %4426 = sbr.rel (0) target = $region53
    $region52: #{tpu_custom_call.1} parent=1 // pred_region
      %s4428 = ssub.s32 128, 128
      %4429 = vsyncadd [#allocation6], %s4428
      %s4431 = sshll.u32 [#allocation12], 4
      %s4432 = int_to_ptr.vmem [resolvable:$true] %s4431
      %4434 = dma.vmem_to_hbm [thread:$0]  %s4432, 128, %s6, [#allocation6]
    $region53: #{tpu_custom_call.1} parent=1 // pred_fallthru
      _
    // Predicated region
    $region54: #{tpu_custom_call.1} parent=1 // pred_check
      _
    $region55: #{tpu_custom_call.1} parent=1 // pred_check_branch
      %4436 = sbr.rel (0) target = $region57
    $region56: #{tpu_custom_call.1} parent=1 // pred_region
      %4437 = dma.done [#allocation6], 128
    $region57: #{tpu_custom_call.1} parent=1 // pred_fallthru
      _
    %4438 = vsyncpa [#allocation5], 1
    %4439 = vsyncpa [#allocation8], 1
    %4440 = vsyncpa [#allocation11], 1
    %4441 = vsyncpa [#allocation6], 1

</llo_original>
